<compile_context>
chip_gen: v7x
topology: tpu7x:2x2x1
jax: 0.10.0
libtpu: 0.0.40
codegen_flags: <defaults>
</compile_context>

<pallas_src>
import functools

import jax
import jax.numpy as jnp
from jax.experimental import pallas as pl
from jax.experimental.pallas import tpu as pltpu


def _round_up(a: int, b: int) -> int:
    return (a + b - 1) // b * b


def _se_kernel(x_ref, w1_ref, b1_ref, w2_ref, b2_ref, o_ref):
    # x_ref : (TP, C1) f32    w1_ref: (C1, C2) bf16   b1_ref: (1, C2) f32
    # w2_ref: (C2, C1) bf16   b2_ref: (1, C1) f32     o_ref : (TP, C1) f32
    x = x_ref[...].astype(jnp.bfloat16)
    h = jnp.dot(x, w1_ref[...], preferred_element_type=jnp.float32) + b1_ref[...]
    h = jnp.maximum(h, 0.0)                                       # ReLU (f32)
    y = jnp.dot(h.astype(jnp.bfloat16), w2_ref[...],
                preferred_element_type=jnp.float32) + b2_ref[...]
    o_ref[...] = jax.nn.sigmoid(y).astype(o_ref.dtype)            # Sigmoid (f32)


def prepare_se_params(w1, b1, w2, b2):
    """One-time weight staging (outside the jitted hot path).

    w1: (C2, C1) conv weight, b1: (C2,), w2: (C1, C2), b2: (C1,).
    Returns transposed bf16 weight matrices and f32 row-vector biases; no
    channel padding (full-dim lane blocks are legal in the kernel).
    """
    w1_t = jnp.asarray(w1).T.astype(jnp.bfloat16)          # (C1, C2)
    b1_p = jnp.asarray(b1).reshape(1, -1).astype(jnp.float32)  # (1, C2)
    w2_t = jnp.asarray(w2).T.astype(jnp.bfloat16)          # (C2, C1)
    b2_p = jnp.asarray(b2).reshape(1, -1).astype(jnp.float32)  # (1, C1)
    return w1_t, b1_p, w2_t, b2_p


def se_block(x_nchw, w1_t, b1_p, w2_t, b2_p, *, tp_max=512):
    """x_nchw: (N, C1, H, W).  Pre-staged params from prepare_se_params."""
    N, C1, H, W = x_nchw.shape
    C2 = w1_t.shape[1]
    P = N * H * W

    # Lane-dense (P, C1) view.  With H == W == 1 (the module's case) this is a
    # pure reshape — no transpose, no extra HBM pass.
    if H == 1 and W == 1:
        x2d = x_nchw.reshape(P, C1)
    else:
        x2d = jnp.transpose(x_nchw, (0, 2, 3, 1)).reshape(P, C1)

    # Row tile: multiple of 8 (sublane), capped so double-buffered in/out tiles
    # plus resident bf16 weights stay well under the 32 MiB scoped VMEM budget
    # that is safe on every generation (v7x included).
    tp = min(tp_max, _round_up(P, 8))
    grid_steps = pl.cdiv(P, tp)          # ragged last block handled by Pallas
    grid = (grid_steps,)

    # Tiny grids: don't megacore-split a weight-DMA-bound 1-2 step loop.
    semantics = ("arbitrary",) if grid_steps <= 4 else ("parallel",)

    out = pl.pallas_call(
        _se_kernel,
        out_shape=jax.ShapeDtypeStruct((P, C1), x2d.dtype),
        grid=grid,
        in_specs=[
            pl.BlockSpec((tp, C1), lambda i: (i, 0)),       # x: row-tiled
            pl.BlockSpec((C1, C2), lambda i: (0, 0)),       # w1: VMEM-resident
            pl.BlockSpec((1, C2), lambda i: (0, 0)),        # b1: VMEM-resident
            pl.BlockSpec((C2, C1), lambda i: (0, 0)),       # w2: VMEM-resident
            pl.BlockSpec((1, C1), lambda i: (0, 0)),        # b2: VMEM-resident
        ],
        out_specs=pl.BlockSpec((tp, C1), lambda i: (i, 0)),
        compiler_params=pltpu.CompilerParams(
            dimension_semantics=semantics,
            vmem_limit_bytes=32 * 1024 * 1024,
        ),
    )(x2d, w1_t, b1_p, w2_t, b2_p)

    if H == 1 and W == 1:
        return out.reshape(N, C1, H, W)
    return jnp.transpose(out.reshape(N, H, W, C1), (0, 3, 1, 2))


if __name__ == "__main__":
    C_IN, C_MID = 1232, 308
    key = jax.random.PRNGKey(0)
    k_x, k_w1, k_b1, k_w2, k_b2 = jax.random.split(key, 5)

    # Deterministic synthetic inputs/params (shapes from the module's __init__).
    x = jax.random.normal(k_x, (1, C_IN, 1, 1), dtype=jnp.float32)
    w1 = jax.random.normal(k_w1, (C_MID, C_IN), dtype=jnp.float32) * 0.02
    b1 = jax.random.normal(k_b1, (C_MID,), dtype=jnp.float32) * 0.02
    w2 = jax.random.normal(k_w2, (C_IN, C_MID), dtype=jnp.float32) * 0.02
    b2 = jax.random.normal(k_b2, (C_IN,), dtype=jnp.float32) * 0.02

    # One-time weight staging (transpose + bf16 cast), outside the hot path.
    params = jax.tree_util.tree_map(
        jax.block_until_ready, prepare_se_params(w1, b1, w2, b2))

    fn = jax.jit(functools.partial(se_block))
    out = fn(x, *params)
    out = jax.block_until_ready(out)

    # Reference check (plain f32 JAX, same math as the PyTorch module).
    # bf16 matmul operands over K=1232 -> loosened tolerance.
    xr = x.reshape(1, C_IN)
    h = jnp.maximum(xr @ w1.T + b1, 0.0)
    ref = jax.nn.sigmoid(h @ w2.T + b2).reshape(1, C_IN, 1, 1)
    assert out.shape == (1, C_IN, 1, 1)
    assert jnp.allclose(out, ref, atol=1e-2, rtol=1e-2), (
        float(jnp.max(jnp.abs(out - ref))))

    print("KERNEL_OK")
</pallas_src>

<mosaic_0001>
module attributes {stable_mosaic.version = 11 : i64} {
  func.func @_se_kernel(%arg0: i32, %arg1: memref<8x1232xf32, #tpu.memory_space<vmem>>, %arg2: memref<1232x308xbf16, #tpu.memory_space<vmem>>, %arg3: memref<1x308xf32, #tpu.memory_space<vmem>>, %arg4: memref<308x1232xbf16, #tpu.memory_space<vmem>>, %arg5: memref<1x1232xf32, #tpu.memory_space<vmem>>, %arg6: memref<8x1232xf32, #tpu.memory_space<vmem>>) attributes {dimension_semantics = [#tpu.dimension_semantics<arbitrary>], iteration_bounds = array<i64: 1>, scalar_prefetch = 0 : i64, scratch_operands = 0 : i64, tpu.core_type = #tpu.core_type<tc>, window_params = [{transform_indices = @transform_0, window_bounds = array<i64: 8, 1232>}, {pipeline_mode = #tpu.pipeline_mode<synchronous>, transform_indices = @transform_1, window_bounds = array<i64: 1232, 308>}, {pipeline_mode = #tpu.pipeline_mode<synchronous>, transform_indices = @transform_2, window_bounds = array<i64: 1, 308>}, {pipeline_mode = #tpu.pipeline_mode<synchronous>, transform_indices = @transform_3, window_bounds = array<i64: 308, 1232>}, {pipeline_mode = #tpu.pipeline_mode<synchronous>, transform_indices = @transform_4, window_bounds = array<i64: 1, 1232>}, {transform_indices = @transform_5, window_bounds = array<i64: 8, 1232>}]} {
    %c0 = arith.constant 0 : index
    %c0_0 = arith.constant 0 : index
    %0 = vector.load %arg1[%c0, %c0_0] : memref<8x1232xf32, #tpu.memory_space<vmem>>, vector<8x1232xf32>
    %1 = arith.truncf %0 : vector<8x1232xf32> to vector<8x1232xbf16>
    %c0_1 = arith.constant 0 : index
    %c0_2 = arith.constant 0 : index
    %2 = vector.load %arg2[%c0_1, %c0_2] : memref<1232x308xbf16, #tpu.memory_space<vmem>>, vector<1232x308xbf16>
    %cst = arith.constant dense<0.000000e+00> : vector<8x308xf32>
    %3 = tpu.matmul %1, %2, %cst {dimension_numbers = #tpu.dot_dimension_numbers<[1], [0], [0], [1], [0, 0, 1, 1], [], []>} : vector<8x1232xbf16>, vector<1232x308xbf16>, vector<8x308xf32> -> vector<8x308xf32>
    %c0_3 = arith.constant 0 : index
    %c0_4 = arith.constant 0 : index
    %4 = vector.load %arg3[%c0_3, %c0_4] : memref<1x308xf32, #tpu.memory_space<vmem>>, vector<1x308xf32>
    %5 = vector.broadcast %4 : vector<1x308xf32> to vector<8x308xf32>
    %6 = arith.addf %3, %5 : vector<8x308xf32>
    %cst_5 = arith.constant 0.000000e+00 : f32
    %7 = vector.broadcast %cst_5 : f32 to vector<8x308xf32>
    %8 = arith.maximumf %6, %7 : vector<8x308xf32>
    %9 = arith.truncf %8 : vector<8x308xf32> to vector<8x308xbf16>
    %c0_6 = arith.constant 0 : index
    %c0_7 = arith.constant 0 : index
    %10 = vector.load %arg4[%c0_6, %c0_7] : memref<308x1232xbf16, #tpu.memory_space<vmem>>, vector<308x1232xbf16>
    %cst_8 = arith.constant dense<0.000000e+00> : vector<8x1232xf32>
    %11 = tpu.matmul %9, %10, %cst_8 {dimension_numbers = #tpu.dot_dimension_numbers<[1], [0], [0], [1], [0, 0, 1, 1], [], []>} : vector<8x308xbf16>, vector<308x1232xbf16>, vector<8x1232xf32> -> vector<8x1232xf32>
    %c0_9 = arith.constant 0 : index
    %c0_10 = arith.constant 0 : index
    %12 = vector.load %arg5[%c0_9, %c0_10] : memref<1x1232xf32, #tpu.memory_space<vmem>>, vector<1x1232xf32>
    %13 = vector.broadcast %12 : vector<1x1232xf32> to vector<8x1232xf32>
    %14 = arith.addf %11, %13 : vector<8x1232xf32>
    %15 = arith.negf %14 : vector<8x1232xf32>
    %16 = math.exp %15 : vector<8x1232xf32>
    %cst_11 = arith.constant 1.000000e+00 : f32
    %17 = vector.broadcast %cst_11 : f32 to vector<8x1232xf32>
    %18 = arith.addf %17, %16 : vector<8x1232xf32>
    %19 = arith.divf %17, %18 : vector<8x1232xf32>
    %c0_12 = arith.constant 0 : index
    %c0_13 = arith.constant 0 : index
    %20 = vector.load %arg6[%c0_12, %c0_13] : memref<8x1232xf32, #tpu.memory_space<vmem>>, vector<8x1232xf32>
    tpu.vector_store %arg6[%c0_12, %c0_13], %19 {strides = array<i32>} : memref<8x1232xf32, #tpu.memory_space<vmem>>, vector<8x1232xf32>,
    return
  }
  func.func @transform_0(%arg0: i32) -> (i32, i32) {
    %c0_i32 = arith.constant 0 : i32
    %c0_i32_0 = arith.constant 0 : i32
    return %arg0, %c0_i32 : i32, i32
  }
  func.func @transform_1(%arg0: i32) -> (i32, i32) {
    %c0_i32 = arith.constant 0 : i32
    %c0_i32_0 = arith.constant 0 : i32
    %c0_i32_1 = arith.constant 0 : i32
    return %c0_i32, %c0_i32_0 : i32, i32
  }
  func.func @transform_2(%arg0: i32) -> (i32, i32) {
    %c0_i32 = arith.constant 0 : i32
    %c0_i32_0 = arith.constant 0 : i32
    %c0_i32_1 = arith.constant 0 : i32
    return %c0_i32, %c0_i32_0 : i32, i32
  }
  func.func @transform_3(%arg0: i32) -> (i32, i32) {
    %c0_i32 = arith.constant 0 : i32
    %c0_i32_0 = arith.constant 0 : i32
    %c0_i32_1 = arith.constant 0 : i32
    return %c0_i32, %c0_i32_0 : i32, i32
  }
  func.func @transform_4(%arg0: i32) -> (i32, i32) {
    %c0_i32 = arith.constant 0 : i32
    %c0_i32_0 = arith.constant 0 : i32
    %c0_i32_1 = arith.constant 0 : i32
    return %c0_i32, %c0_i32_0 : i32, i32
  }
  func.func @transform_5(%arg0: i32) -> (i32, i32) {
    %c0_i32 = arith.constant 0 : i32
    %c0_i32_0 = arith.constant 0 : i32
    return %arg0, %c0_i32 : i32, i32
  }
}

</mosaic_0001>

<llo_original>
// kernel: se_block.1
$region0: #{se_block.1}
  #allocation0 [shape = 'u32[]', space=smem, size = 0x4, offset = 0x4, fixed_abs, tag = 'smem constant byte address 0x4 - core index']
  #allocation1 [shape = 'u32[144,128]{1,0:T(1,128)}', space=vmem, size = 0x12000, scoped, tag = 'internal scratch']
  %s0 = inlined_call_operand.vmem [shape: f32[1,1232], index: 0, kind: input, shape index: {}]
  %s1 = inlined_call_operand.vmem [shape: bf16[1232,308], index: 1, kind: input, shape index: {}]
  %s2 = inlined_call_operand.vmem [shape: f32[1,308], index: 2, kind: input, shape index: {}]
  %s3 = inlined_call_operand.vmem [shape: bf16[308,1232], index: 3, kind: input, shape index: {}]
  %s4 = inlined_call_operand.vmem [shape: f32[1,1232], index: 4, kind: input, shape index: {}]
  %s5 = inlined_call_operand.hbm [shape: f32[1,1232], index: 5, kind: output, shape index: {}]
  %s6 = sld [smem:[#allocation0]]
  $region30: #{se_block.1} parent=0
    _
  %s8 = ssub.s32 1, %s6
  %s9 = scalar_select 0, %s8, %s6
  $region1: #{se_block.1} parent=0
    #allocation2 [shape = 'u8[40960]{0}', space=vmem, size = 0xa000, scoped, tag = 'output window, operand 0, single buffered']
    #allocation3 [shape = 's32[1]{0}', space=sflag, size = 0x4, scoped, tag = 'scoped memory for se_block.1']
    %10 = vsyncpa [#allocation3], 0
    // Predicated region
    $region2: #{se_block.1} parent=1 // pred_check
      _
    $region3: #{se_block.1} parent=1 // pred_check_branch
      %12 = sbr.rel (0) target = $region5
    $region4: #{se_block.1} parent=1 // pred_region
      _
    $region5: #{se_block.1} parent=1 // pred_fallthru
      _
    // Predicated region
    $region6: #{se_block.1} parent=1 // pred_check
      _
    $region7: #{se_block.1} parent=1 // pred_check_branch
      %14 = sbr.rel (0) target = $region9
    $region8: #{se_block.1} parent=1 // pred_region
      _
    $region9: #{se_block.1} parent=1 // pred_fallthru
      _
    // Predicated region
    $region10: #{se_block.1} parent=1 // pred_check
      _
    $region11: #{se_block.1} parent=1 // pred_check_branch
      %16 = sbr.rel (0) target = $region13
    $region12: #{se_block.1} parent=1 // pred_region
      _
    $region13: #{se_block.1} parent=1 // pred_fallthru
      _
    // Predicated region
    $region14: #{se_block.1} parent=1 // pred_check
      _
    $region15: #{se_block.1} parent=1 // pred_check_branch
      %18 = sbr.rel (0) target = $region17
    $region16: #{se_block.1} parent=1 // pred_region
      _
    $region17: #{se_block.1} parent=1 // pred_fallthru
      _
    // Predicated region
    $region18: #{se_block.1} parent=1 // pred_check
      _
    $region19: #{se_block.1} parent=1 // pred_check_branch
      %20 = sbr.rel (0) target = $region21
    $region20: #{se_block.1} parent=1 // pred_region
      _
    $region21: #{se_block.1} parent=1 // pred_fallthru
      _
    %v22 = vld [vmem:[%s0] sm:$0xff]
    %v23 = vld [vmem:[%s0 + $0x8] sm:$0x3]
    %v24 = vld [vmem:[%s0 + $0xa] sm:$0xff]
    %v25 = vld [vmem:[%s0 + $0x12] sm:$0x3]
    %v26 = vld [vmem:[%s0 + $0x14] sm:$0xff]
    %v27 = vld [vmem:[%s0 + $0x1c] sm:$0x3]
    %v28 = vld [vmem:[%s0 + $0x1e] sm:$0xff]
    %v29 = vld [vmem:[%s0 + $0x26] sm:$0x3]
    %v30 = vld [vmem:[%s0 + $0x28] sm:$0xff]
    %v31 = vld [vmem:[%s0 + $0x30] sm:$0x3]
    %v32 = vld [vmem:[%s0 + $0x32] sm:$0xff]
    %v33 = vld [vmem:[%s0 + $0x3a] sm:$0x3]
    %v34 = vld [vmem:[%s0 + $0x3c] sm:$0xff]
    %v35 = vld [vmem:[%s0 + $0x44] sm:$0x3]
    %v36 = vld [vmem:[%s0 + $0x46] sm:$0xff]
    %v37 = vld [vmem:[%s0 + $0x4e] sm:$0x3]
    %v54 = vcombine.low %v22, %v24
    %v55 = vcombine.high %v22, %v24
    %v56 = vcombine.low %v26, %v28
    %v57 = vcombine.high %v26, %v28
    %v58 = vcombine.low %v30, %v32
    %v59 = vcombine.high %v30, %v32
    %v60 = vcombine.low %v34, %v36
    %v61 = vcombine.high %v34, %v36
    %v63 = vunpack.c.l.s4 1966171168
    %v64 = vunpack.c.0.s8 %v63
    %v65 = vlaneseq
    %v66 = vshrl.u32 %v65, 7
    %v67 = vsub.s32 %v64, %v66
    %v68 = vrot.slane %v54, %v67
    %v70 = vunpack.c.l.s4 1966171168
    %v71 = vunpack.c.0.s8 %v70
    %v72 = vlaneseq
    %v73 = vshrl.u32 %v72, 7
    %v74 = vsub.s32 %v71, %v73
    %v75 = vrot.slane %v55, %v74
    %v77 = vunpack.c.l.s4 1966171168
    %v78 = vunpack.c.0.s8 %v77
    %v79 = vlaneseq
    %v80 = vshrl.u32 %v79, 7
    %v81 = vsub.s32 %v78, %v80
    %v82 = vrot.slane %v56, %v81
    %v84 = vunpack.c.l.s4 1966171168
    %v85 = vunpack.c.0.s8 %v84
    %v86 = vlaneseq
    %v87 = vshrl.u32 %v86, 7
    %v88 = vsub.s32 %v85, %v87
    %v89 = vrot.slane %v57, %v88
    %v91 = vunpack.c.l.s4 1966171168
    %v92 = vunpack.c.0.s8 %v91
    %v93 = vlaneseq
    %v94 = vshrl.u32 %v93, 7
    %v95 = vsub.s32 %v92, %v94
    %v96 = vrot.slane %v58, %v95
    %v98 = vunpack.c.l.s4 1966171168
    %v99 = vunpack.c.0.s8 %v98
    %v100 = vlaneseq
    %v101 = vshrl.u32 %v100, 7
    %v102 = vsub.s32 %v99, %v101
    %v103 = vrot.slane %v59, %v102
    %v105 = vunpack.c.l.s4 1966171168
    %v106 = vunpack.c.0.s8 %v105
    %v107 = vlaneseq
    %v108 = vshrl.u32 %v107, 7
    %v109 = vsub.s32 %v106, %v108
    %v110 = vrot.slane %v60, %v109
    %v112 = vunpack.c.l.s4 1966171168
    %v113 = vunpack.c.0.s8 %v112
    %v114 = vlaneseq
    %v115 = vshrl.u32 %v114, 7
    %v116 = vsub.s32 %v113, %v115
    %v117 = vrot.slane %v61, %v116
    %v118 = vcombine.low %v68, %v82
    %v119 = vcombine.high %v68, %v82
    %v120 = vcombine.low %v75, %v89
    %v121 = vcombine.high %v75, %v89
    %v122 = vcombine.low %v96, %v110
    %v123 = vcombine.high %v96, %v110
    %v124 = vcombine.low %v103, %v117
    %v125 = vcombine.high %v103, %v117
    %v127 = vunpack.c.l.s4 1966171168
    %v128 = vunpack.c.0.s8 %v127
    %v129 = vlaneseq
    %v130 = vshrl.u32 %v129, 7
    %v131 = vsub.s32 %v128, %v130
    %v132 = vrot.slane %v118, %v131
    %v134 = vunpack.c.l.s4 1966171168
    %v135 = vunpack.c.0.s8 %v134
    %v136 = vlaneseq
    %v137 = vshrl.u32 %v136, 7
    %v138 = vsub.s32 %v135, %v137
    %v139 = vrot.slane %v120, %v138
    %v141 = vunpack.c.l.s4 1966171168
    %v142 = vunpack.c.0.s8 %v141
    %v143 = vlaneseq
    %v144 = vshrl.u32 %v143, 7
    %v145 = vsub.s32 %v142, %v144
    %v146 = vrot.slane %v119, %v145
    %v148 = vunpack.c.l.s4 1966171168
    %v149 = vunpack.c.0.s8 %v148
    %v150 = vlaneseq
    %v151 = vshrl.u32 %v150, 7
    %v152 = vsub.s32 %v149, %v151
    %v153 = vrot.slane %v121, %v152
    %v155 = vunpack.c.l.s4 1966171168
    %v156 = vunpack.c.0.s8 %v155
    %v157 = vlaneseq
    %v158 = vshrl.u32 %v157, 7
    %v159 = vsub.s32 %v156, %v158
    %v160 = vrot.slane %v122, %v159
    %v162 = vunpack.c.l.s4 1966171168
    %v163 = vunpack.c.0.s8 %v162
    %v164 = vlaneseq
    %v165 = vshrl.u32 %v164, 7
    %v166 = vsub.s32 %v163, %v165
    %v167 = vrot.slane %v124, %v166
    %v169 = vunpack.c.l.s4 1966171168
    %v170 = vunpack.c.0.s8 %v169
    %v171 = vlaneseq
    %v172 = vshrl.u32 %v171, 7
    %v173 = vsub.s32 %v170, %v172
    %v174 = vrot.slane %v123, %v173
    %v176 = vunpack.c.l.s4 1966171168
    %v177 = vunpack.c.0.s8 %v176
    %v178 = vlaneseq
    %v179 = vshrl.u32 %v178, 7
    %v180 = vsub.s32 %v177, %v179
    %v181 = vrot.slane %v125, %v180
    %v182 = vcombine.low %v132, %v160
    %v183 = vcombine.high %v132, %v160
    %v184 = vcombine.low %v139, %v167
    %v185 = vcombine.high %v139, %v167
    %v186 = vcombine.low %v146, %v174
    %v187 = vcombine.high %v146, %v174
    %v188 = vcombine.low %v153, %v181
    %v189 = vcombine.high %v153, %v181
    %v190 = vcombine.low %v23, %v25
    %v191 = vcombine.low %v27, %v29
    %v192 = vcombine.low %v31, %v33
    %v193 = vcombine.low %v35, %v37
    %v195 = vunpack.c.l.s4 1966171168
    %v196 = vunpack.c.0.s8 %v195
    %v197 = vlaneseq
    %v198 = vshrl.u32 %v197, 7
    %v199 = vsub.s32 %v196, %v198
    %v200 = vrot.slane %v190, %v199
    %v202 = vunpack.c.l.s4 1966171168
    %v203 = vunpack.c.0.s8 %v202
    %v204 = vlaneseq
    %v205 = vshrl.u32 %v204, 7
    %v206 = vsub.s32 %v203, %v205
    %v207 = vrot.slane %v191, %v206
    %v209 = vunpack.c.l.s4 1966171168
    %v210 = vunpack.c.0.s8 %v209
    %v211 = vlaneseq
    %v212 = vshrl.u32 %v211, 7
    %v213 = vsub.s32 %v210, %v212
    %v214 = vrot.slane %v192, %v213
    %v216 = vunpack.c.l.s4 1966171168
    %v217 = vunpack.c.0.s8 %v216
    %v218 = vlaneseq
    %v219 = vshrl.u32 %v218, 7
    %v220 = vsub.s32 %v217, %v219
    %v221 = vrot.slane %v193, %v220
    %v222 = vcombine.low %v200, %v207
    %v223 = vcombine.high %v200, %v207
    %v224 = vcombine.low %v214, %v221
    %v225 = vcombine.high %v214, %v221
    %v227 = vunpack.c.l.s4 1966171168
    %v228 = vunpack.c.0.s8 %v227
    %v229 = vlaneseq
    %v230 = vshrl.u32 %v229, 7
    %v231 = vsub.s32 %v228, %v230
    %v232 = vrot.slane %v222, %v231
    %v234 = vunpack.c.l.s4 1966171168
    %v235 = vunpack.c.0.s8 %v234
    %v236 = vlaneseq
    %v237 = vshrl.u32 %v236, 7
    %v238 = vsub.s32 %v235, %v237
    %v239 = vrot.slane %v223, %v238
    %v241 = vunpack.c.l.s4 1966171168
    %v242 = vunpack.c.0.s8 %v241
    %v243 = vlaneseq
    %v244 = vshrl.u32 %v243, 7
    %v245 = vsub.s32 %v242, %v244
    %v246 = vrot.slane %v224, %v245
    %v248 = vunpack.c.l.s4 1966171168
    %v249 = vunpack.c.0.s8 %v248
    %v250 = vlaneseq
    %v251 = vshrl.u32 %v250, 7
    %v252 = vsub.s32 %v249, %v251
    %v253 = vrot.slane %v225, %v252
    %v254 = vcombine.low %v232, %v246
    %v255 = vcombine.low %v239, %v253
    %v266 = vpack.c.bf16 %v182, %v182
    %v267 = vpack.c.bf16 %v186, %v186
    %v268 = vpack.c.bf16 %v183, %v183
    %v269 = vpack.c.bf16 %v187, %v187
    %v270 = vpack.c.bf16 %v184, %v184
    %v271 = vpack.c.bf16 %v188, %v188
    %v272 = vpack.c.bf16 %v185, %v185
    %v273 = vpack.c.bf16 %v189, %v189
    %v274 = vpack.c.bf16 %v254, %v254
    %v275 = vpack.c.bf16 %v255, %v255
    %v276 = vld [vmem:[%s1] sm:$0xff]
    %v277 = vld [vmem:[%s1 + $0x8] sm:$0xf]
    %v278 = vld [vmem:[%s1 + $0xc] sm:$0xff]
    %v279 = vld [vmem:[%s1 + $0x14] sm:$0xf]
    %v280 = vld [vmem:[%s1 + $0x18] sm:$0xff]
    %v281 = vld [vmem:[%s1 + $0x20] sm:$0xf]
    %v282 = vld [vmem:[%s1 + $0x24] sm:$0xff]
    %v283 = vld [vmem:[%s1 + $0x2c] sm:$0xf]
    %v284 = vld [vmem:[%s1 + $0x30] sm:$0xff]
    %v285 = vld [vmem:[%s1 + $0x38] sm:$0xf]
    %v286 = vld [vmem:[%s1 + $0x3c] sm:$0xff]
    %v287 = vld [vmem:[%s1 + $0x44] sm:$0xf]
    %v288 = vld [vmem:[%s1 + $0x48] sm:$0xff]
    %v289 = vld [vmem:[%s1 + $0x50] sm:$0xf]
    %v290 = vld [vmem:[%s1 + $0x54] sm:$0xff]
    %v291 = vld [vmem:[%s1 + $0x5c] sm:$0xf]
    %v292 = vld [vmem:[%s1 + $0x60] sm:$0xff]
    %v293 = vld [vmem:[%s1 + $0x68] sm:$0xf]
    %v294 = vld [vmem:[%s1 + $0x6c] sm:$0xff]
    %v295 = vld [vmem:[%s1 + $0x74] sm:$0xf]
    %v296 = vld [vmem:[%s1 + $0x78] sm:$0xff]
    %v297 = vld [vmem:[%s1 + $0x80] sm:$0xf]
    %v298 = vld [vmem:[%s1 + $0x84] sm:$0xff]
    %v299 = vld [vmem:[%s1 + $0x8c] sm:$0xf]
    %v300 = vld [vmem:[%s1 + $0x90] sm:$0xff]
    %v301 = vld [vmem:[%s1 + $0x98] sm:$0xf]
    %v302 = vld [vmem:[%s1 + $0x9c] sm:$0xff]
    %v303 = vld [vmem:[%s1 + $0xa4] sm:$0xf]
    %v304 = vld [vmem:[%s1 + $0xa8] sm:$0xff]
    %v305 = vld [vmem:[%s1 + $0xb0] sm:$0xf]
    %v306 = vld [vmem:[%s1 + $0xb4] sm:$0xff]
    %v307 = vld [vmem:[%s1 + $0xbc] sm:$0xf]
    %v308 = vld [vmem:[%s1 + $0xc0] sm:$0xff]
    %v309 = vld [vmem:[%s1 + $0xc8] sm:$0xf]
    %v310 = vld [vmem:[%s1 + $0xcc] sm:$0xff]
    %v311 = vld [vmem:[%s1 + $0xd4] sm:$0xf]
    %v312 = vld [vmem:[%s1 + $0xd8] sm:$0xff]
    %v313 = vld [vmem:[%s1 + $0xe0] sm:$0xf]
    %v314 = vld [vmem:[%s1 + $0xe4] sm:$0xff]
    %v315 = vld [vmem:[%s1 + $0xec] sm:$0xf]
    %v316 = vld [vmem:[%s1 + $0xf0] sm:$0xff]
    %v317 = vld [vmem:[%s1 + $0xf8] sm:$0xf]
    %v318 = vld [vmem:[%s1 + $0xfc] sm:$0xff]
    %v319 = vld [vmem:[%s1 + $0x104] sm:$0xf]
    %v320 = vld [vmem:[%s1 + $0x108] sm:$0xff]
    %v321 = vld [vmem:[%s1 + $0x110] sm:$0xf]
    %v322 = vld [vmem:[%s1 + $0x114] sm:$0xff]
    %v323 = vld [vmem:[%s1 + $0x11c] sm:$0xf]
    %v324 = vld [vmem:[%s1 + $0x120] sm:$0xff]
    %v325 = vld [vmem:[%s1 + $0x128] sm:$0xf]
    %v326 = vld [vmem:[%s1 + $0x12c] sm:$0xff]
    %v327 = vld [vmem:[%s1 + $0x134] sm:$0xf]
    %v328 = vld [vmem:[%s1 + $0x138] sm:$0xff]
    %v329 = vld [vmem:[%s1 + $0x140] sm:$0xf]
    %v330 = vld [vmem:[%s1 + $0x144] sm:$0xff]
    %v331 = vld [vmem:[%s1 + $0x14c] sm:$0xf]
    %v332 = vld [vmem:[%s1 + $0x150] sm:$0xff]
    %v333 = vld [vmem:[%s1 + $0x158] sm:$0xf]
    %v334 = vld [vmem:[%s1 + $0x15c] sm:$0xff]
    %v335 = vld [vmem:[%s1 + $0x164] sm:$0xf]
    %v336 = vld [vmem:[%s1 + $0x168] sm:$0xff]
    %v337 = vld [vmem:[%s1 + $0x170] sm:$0xf]
    %v338 = vld [vmem:[%s1 + $0x174] sm:$0xff]
    %v339 = vld [vmem:[%s1 + $0x17c] sm:$0xf]
    %v340 = vld [vmem:[%s1 + $0x180] sm:$0xff]
    %v341 = vld [vmem:[%s1 + $0x188] sm:$0xf]
    %v342 = vld [vmem:[%s1 + $0x18c] sm:$0xff]
    %v343 = vld [vmem:[%s1 + $0x194] sm:$0xf]
    %v344 = vld [vmem:[%s1 + $0x198] sm:$0xff]
    %v345 = vld [vmem:[%s1 + $0x1a0] sm:$0xf]
    %v346 = vld [vmem:[%s1 + $0x1a4] sm:$0xff]
    %v347 = vld [vmem:[%s1 + $0x1ac] sm:$0xf]
    %v348 = vld [vmem:[%s1 + $0x1b0] sm:$0xff]
    %v349 = vld [vmem:[%s1 + $0x1b8] sm:$0xf]
    %v350 = vld [vmem:[%s1 + $0x1bc] sm:$0xff]
    %v351 = vld [vmem:[%s1 + $0x1c4] sm:$0xf]
    %v352 = vld [vmem:[%s1 + $0x1c8] sm:$0xff]
    %v353 = vld [vmem:[%s1 + $0x1d0] sm:$0xf]
    %v354 = vld [vmem:[%s1 + $0x1d4] sm:$0xff]
    %v355 = vld [vmem:[%s1 + $0x1dc] sm:$0xf]
    %v356 = vld [vmem:[%s1 + $0x1e0] sm:$0xff]
    %v357 = vld [vmem:[%s1 + $0x1e8] sm:$0xf]
    %v358 = vld [vmem:[%s1 + $0x1ec] sm:$0xff]
    %v359 = vld [vmem:[%s1 + $0x1f4] sm:$0xf]
    %v360 = vld [vmem:[%s1 + $0x1f8] sm:$0xff]
    %v361 = vld [vmem:[%s1 + $0x200] sm:$0xf]
    %v362 = vld [vmem:[%s1 + $0x204] sm:$0xff]
    %v363 = vld [vmem:[%s1 + $0x20c] sm:$0xf]
    %v364 = vld [vmem:[%s1 + $0x210] sm:$0xff]
    %v365 = vld [vmem:[%s1 + $0x218] sm:$0xf]
    %v366 = vld [vmem:[%s1 + $0x21c] sm:$0xff]
    %v367 = vld [vmem:[%s1 + $0x224] sm:$0xf]
    %v368 = vld [vmem:[%s1 + $0x228] sm:$0xff]
    %v369 = vld [vmem:[%s1 + $0x230] sm:$0xf]
    %v370 = vld [vmem:[%s1 + $0x234] sm:$0xff]
    %v371 = vld [vmem:[%s1 + $0x23c] sm:$0xf]
    %v372 = vld [vmem:[%s1 + $0x240] sm:$0xff]
    %v373 = vld [vmem:[%s1 + $0x248] sm:$0xf]
    %v374 = vld [vmem:[%s1 + $0x24c] sm:$0xff]
    %v375 = vld [vmem:[%s1 + $0x254] sm:$0xf]
    %v376 = vld [vmem:[%s1 + $0x258] sm:$0xff]
    %v377 = vld [vmem:[%s1 + $0x260] sm:$0xf]
    %v378 = vld [vmem:[%s1 + $0x264] sm:$0xff]
    %v379 = vld [vmem:[%s1 + $0x26c] sm:$0xf]
    %v380 = vld [vmem:[%s1 + $0x270] sm:$0xff]
    %v381 = vld [vmem:[%s1 + $0x278] sm:$0xf]
    %v382 = vld [vmem:[%s1 + $0x27c] sm:$0xff]
    %v383 = vld [vmem:[%s1 + $0x284] sm:$0xf]
    %v384 = vld [vmem:[%s1 + $0x288] sm:$0xff]
    %v385 = vld [vmem:[%s1 + $0x290] sm:$0xf]
    %v386 = vld [vmem:[%s1 + $0x294] sm:$0xff]
    %v387 = vld [vmem:[%s1 + $0x29c] sm:$0xf]
    %v388 = vld [vmem:[%s1 + $0x2a0] sm:$0xff]
    %v389 = vld [vmem:[%s1 + $0x2a8] sm:$0xf]
    %v390 = vld [vmem:[%s1 + $0x2ac] sm:$0xff]
    %v391 = vld [vmem:[%s1 + $0x2b4] sm:$0xf]
    %v392 = vld [vmem:[%s1 + $0x2b8] sm:$0xff]
    %v393 = vld [vmem:[%s1 + $0x2c0] sm:$0xf]
    %v394 = vld [vmem:[%s1 + $0x2c4] sm:$0xff]
    %v395 = vld [vmem:[%s1 + $0x2cc] sm:$0xf]
    %v396 = vld [vmem:[%s1 + $0x2d0] sm:$0xff]
    %v397 = vld [vmem:[%s1 + $0x2d8] sm:$0xf]
    %v398 = vld [vmem:[%s1 + $0x2dc] sm:$0xff]
    %v399 = vld [vmem:[%s1 + $0x2e4] sm:$0xf]
    %v400 = vld [vmem:[%s1 + $0x2e8] sm:$0xff]
    %v401 = vld [vmem:[%s1 + $0x2f0] sm:$0xf]
    %v402 = vld [vmem:[%s1 + $0x2f4] sm:$0xff]
    %v403 = vld [vmem:[%s1 + $0x2fc] sm:$0xf]
    %v404 = vld [vmem:[%s1 + $0x300] sm:$0xff]
    %v405 = vld [vmem:[%s1 + $0x308] sm:$0xf]
    %v406 = vld [vmem:[%s1 + $0x30c] sm:$0xff]
    %v407 = vld [vmem:[%s1 + $0x314] sm:$0xf]
    %v408 = vld [vmem:[%s1 + $0x318] sm:$0xff]
    %v409 = vld [vmem:[%s1 + $0x320] sm:$0xf]
    %v410 = vld [vmem:[%s1 + $0x324] sm:$0xff]
    %v411 = vld [vmem:[%s1 + $0x32c] sm:$0xf]
    %v412 = vld [vmem:[%s1 + $0x330] sm:$0xff]
    %v413 = vld [vmem:[%s1 + $0x338] sm:$0xf]
    %v414 = vld [vmem:[%s1 + $0x33c] sm:$0xff]
    %v415 = vld [vmem:[%s1 + $0x344] sm:$0xf]
    %v416 = vld [vmem:[%s1 + $0x348] sm:$0xff]
    %v417 = vld [vmem:[%s1 + $0x350] sm:$0xf]
    %v418 = vld [vmem:[%s1 + $0x354] sm:$0xff]
    %v419 = vld [vmem:[%s1 + $0x35c] sm:$0xf]
    %v420 = vld [vmem:[%s1 + $0x360] sm:$0xff]
    %v421 = vld [vmem:[%s1 + $0x368] sm:$0xf]
    %v422 = vld [vmem:[%s1 + $0x36c] sm:$0xff]
    %v423 = vld [vmem:[%s1 + $0x374] sm:$0xf]
    %v424 = vld [vmem:[%s1 + $0x378] sm:$0xff]
    %v425 = vld [vmem:[%s1 + $0x380] sm:$0xf]
    %v426 = vld [vmem:[%s1 + $0x384] sm:$0xff]
    %v427 = vld [vmem:[%s1 + $0x38c] sm:$0xf]
    %v428 = vld [vmem:[%s1 + $0x390] sm:$0xff]
    %v429 = vld [vmem:[%s1 + $0x398] sm:$0xf]
    %v430 = vld [vmem:[%s1 + $0x39c] sm:$0xff]
    %v431 = vld [vmem:[%s1 + $0x3a4] sm:$0xf]
    %v432 = vld [vmem:[%s1 + $0x3a8] sm:$0xff]
    %v433 = vld [vmem:[%s1 + $0x3b0] sm:$0xf]
    %v434 = vld [vmem:[%s1 + $0x3b4] sm:$0xff]
    %v435 = vld [vmem:[%s1 + $0x3bc] sm:$0xf]
    %v436 = vld [vmem:[%s1 + $0x3c0] sm:$0xff]
    %v437 = vld [vmem:[%s1 + $0x3c8] sm:$0xf]
    %v438 = vld [vmem:[%s1 + $0x3cc] sm:$0xff]
    %v439 = vld [vmem:[%s1 + $0x3d4] sm:$0xf]
    %v440 = vld [vmem:[%s1 + $0x3d8] sm:$0xff]
    %v441 = vld [vmem:[%s1 + $0x3e0] sm:$0xf]
    %v442 = vld [vmem:[%s1 + $0x3e4] sm:$0xff]
    %v443 = vld [vmem:[%s1 + $0x3ec] sm:$0xf]
    %v444 = vld [vmem:[%s1 + $0x3f0] sm:$0xff]
    %v445 = vld [vmem:[%s1 + $0x3f8] sm:$0xf]
    %v446 = vld [vmem:[%s1 + $0x3fc] sm:$0xff]
    %v447 = vld [vmem:[%s1 + $0x404] sm:$0xf]
    %v448 = vld [vmem:[%s1 + $0x408] sm:$0xff]
    %v449 = vld [vmem:[%s1 + $0x410] sm:$0xf]
    %v450 = vld [vmem:[%s1 + $0x414] sm:$0xff]
    %v451 = vld [vmem:[%s1 + $0x41c] sm:$0xf]
    %v452 = vld [vmem:[%s1 + $0x420] sm:$0xff]
    %v453 = vld [vmem:[%s1 + $0x428] sm:$0xf]
    %v454 = vld [vmem:[%s1 + $0x42c] sm:$0xff]
    %v455 = vld [vmem:[%s1 + $0x434] sm:$0xf]
    %v456 = vld [vmem:[%s1 + $0x438] sm:$0xff]
    %v457 = vld [vmem:[%s1 + $0x440] sm:$0xf]
    %v458 = vld [vmem:[%s1 + $0x444] sm:$0xff]
    %v459 = vld [vmem:[%s1 + $0x44c] sm:$0xf]
    %v460 = vld [vmem:[%s1 + $0x450] sm:$0xff]
    %v461 = vld [vmem:[%s1 + $0x458] sm:$0xf]
    %v462 = vld [vmem:[%s1 + $0x45c] sm:$0xff]
    %v463 = vld [vmem:[%s1 + $0x464] sm:$0xf]
    %v464 = vld [vmem:[%s1 + $0x468] sm:$0xff]
    %v465 = vld [vmem:[%s1 + $0x470] sm:$0xf]
    %v466 = vld [vmem:[%s1 + $0x474] sm:$0xff]
    %v467 = vld [vmem:[%s1 + $0x47c] sm:$0xf]
    %v468 = vld [vmem:[%s1 + $0x480] sm:$0xff]
    %v469 = vld [vmem:[%s1 + $0x488] sm:$0xf]
    %v470 = vld [vmem:[%s1 + $0x48c] sm:$0xff]
    %v471 = vld [vmem:[%s1 + $0x494] sm:$0xf]
    %v472 = vld [vmem:[%s1 + $0x498] sm:$0xff]
    %v473 = vld [vmem:[%s1 + $0x4a0] sm:$0xf]
    %v474 = vld [vmem:[%s1 + $0x4a4] sm:$0xff]
    %v475 = vld [vmem:[%s1 + $0x4ac] sm:$0xf]
    %v476 = vld [vmem:[%s1 + $0x4b0] sm:$0xff]
    %v477 = vld [vmem:[%s1 + $0x4b8] sm:$0xf]
    %v478 = vld [vmem:[%s1 + $0x4bc] sm:$0xff]
    %v479 = vld [vmem:[%s1 + $0x4c4] sm:$0xf]
    %v480 = vld [vmem:[%s1 + $0x4c8] sm:$0xff]
    %v481 = vld [vmem:[%s1 + $0x4d0] sm:$0xf]
    %v482 = vld [vmem:[%s1 + $0x4d4] sm:$0xff]
    %v483 = vld [vmem:[%s1 + $0x4dc] sm:$0xf]
    %v484 = vld [vmem:[%s1 + $0x4e0] sm:$0xff]
    %v485 = vld [vmem:[%s1 + $0x4e8] sm:$0xf]
    %v486 = vld [vmem:[%s1 + $0x4ec] sm:$0xff]
    %v487 = vld [vmem:[%s1 + $0x4f4] sm:$0xf]
    %v488 = vld [vmem:[%s1 + $0x4f8] sm:$0xff]
    %v489 = vld [vmem:[%s1 + $0x500] sm:$0xf]
    %v490 = vld [vmem:[%s1 + $0x504] sm:$0xff]
    %v491 = vld [vmem:[%s1 + $0x50c] sm:$0xf]
    %v492 = vld [vmem:[%s1 + $0x510] sm:$0xff]
    %v493 = vld [vmem:[%s1 + $0x518] sm:$0xf]
    %v494 = vld [vmem:[%s1 + $0x51c] sm:$0xff]
    %v495 = vld [vmem:[%s1 + $0x524] sm:$0xf]
    %v496 = vld [vmem:[%s1 + $0x528] sm:$0xff]
    %v497 = vld [vmem:[%s1 + $0x530] sm:$0xf]
    %v498 = vld [vmem:[%s1 + $0x534] sm:$0xff]
    %v499 = vld [vmem:[%s1 + $0x53c] sm:$0xf]
    %v500 = vld [vmem:[%s1 + $0x540] sm:$0xff]
    %v501 = vld [vmem:[%s1 + $0x548] sm:$0xf]
    %v502 = vld [vmem:[%s1 + $0x54c] sm:$0xff]
    %v503 = vld [vmem:[%s1 + $0x554] sm:$0xf]
    %v504 = vld [vmem:[%s1 + $0x558] sm:$0xff]
    %v505 = vld [vmem:[%s1 + $0x560] sm:$0xf]
    %v506 = vld [vmem:[%s1 + $0x564] sm:$0xff]
    %v507 = vld [vmem:[%s1 + $0x56c] sm:$0xf]
    %v508 = vld [vmem:[%s1 + $0x570] sm:$0xff]
    %v509 = vld [vmem:[%s1 + $0x578] sm:$0xf]
    %v510 = vld [vmem:[%s1 + $0x57c] sm:$0xff]
    %v511 = vld [vmem:[%s1 + $0x584] sm:$0xf]
    %v512 = vld [vmem:[%s1 + $0x588] sm:$0xff]
    %v513 = vld [vmem:[%s1 + $0x590] sm:$0xf]
    %v514 = vld [vmem:[%s1 + $0x594] sm:$0xff]
    %v515 = vld [vmem:[%s1 + $0x59c] sm:$0xf]
    %v516 = vld [vmem:[%s1 + $0x5a0] sm:$0xff]
    %v517 = vld [vmem:[%s1 + $0x5a8] sm:$0xf]
    %v518 = vld [vmem:[%s1 + $0x5ac] sm:$0xff]
    %v519 = vld [vmem:[%s1 + $0x5b4] sm:$0xf]
    %v520 = vld [vmem:[%s1 + $0x5b8] sm:$0xff]
    %v521 = vld [vmem:[%s1 + $0x5c0] sm:$0xf]
    %v522 = vld [vmem:[%s1 + $0x5c4] sm:$0xff]
    %v523 = vld [vmem:[%s1 + $0x5cc] sm:$0xf]
    %v524 = vld [vmem:[%s1 + $0x5d0] sm:$0xff]
    %v525 = vld [vmem:[%s1 + $0x5d8] sm:$0xf]
    %v526 = vld [vmem:[%s1 + $0x5dc] sm:$0xff]
    %v527 = vld [vmem:[%s1 + $0x5e4] sm:$0xf]
    %v528 = vld [vmem:[%s1 + $0x5e8] sm:$0xff]
    %v529 = vld [vmem:[%s1 + $0x5f0] sm:$0xf]
    %v530 = vld [vmem:[%s1 + $0x5f4] sm:$0xff]
    %v531 = vld [vmem:[%s1 + $0x5fc] sm:$0xf]
    %v532 = vld [vmem:[%s1 + $0x600] sm:$0xff]
    %v533 = vld [vmem:[%s1 + $0x608] sm:$0xf]
    %v534 = vld [vmem:[%s1 + $0x60c] sm:$0xff]
    %v535 = vld [vmem:[%s1 + $0x614] sm:$0xf]
    %v536 = vld [vmem:[%s1 + $0x618] sm:$0xff]
    %v537 = vld [vmem:[%s1 + $0x620] sm:$0xf]
    %v538 = vld [vmem:[%s1 + $0x624] sm:$0xff]
    %v539 = vld [vmem:[%s1 + $0x62c] sm:$0xf]
    %v540 = vld [vmem:[%s1 + $0x630] sm:$0xff]
    %v541 = vld [vmem:[%s1 + $0x638] sm:$0xf]
    %v542 = vld [vmem:[%s1 + $0x63c] sm:$0xff]
    %v543 = vld [vmem:[%s1 + $0x644] sm:$0xf]
    %v544 = vld [vmem:[%s1 + $0x648] sm:$0xff]
    %v545 = vld [vmem:[%s1 + $0x650] sm:$0xf]
    %v546 = vld [vmem:[%s1 + $0x654] sm:$0xff]
    %v547 = vld [vmem:[%s1 + $0x65c] sm:$0xf]
    %v548 = vld [vmem:[%s1 + $0x660] sm:$0xff]
    %v549 = vld [vmem:[%s1 + $0x668] sm:$0xf]
    %v550 = vld [vmem:[%s1 + $0x66c] sm:$0xff]
    %v551 = vld [vmem:[%s1 + $0x674] sm:$0xf]
    %v552 = vld [vmem:[%s1 + $0x678] sm:$0xff]
    %v553 = vld [vmem:[%s1 + $0x680] sm:$0xf]
    %v554 = vld [vmem:[%s1 + $0x684] sm:$0xff]
    %v555 = vld [vmem:[%s1 + $0x68c] sm:$0xf]
    %v556 = vld [vmem:[%s1 + $0x690] sm:$0xff]
    %v557 = vld [vmem:[%s1 + $0x698] sm:$0xf]
    %v558 = vld [vmem:[%s1 + $0x69c] sm:$0xff]
    %v559 = vld [vmem:[%s1 + $0x6a4] sm:$0xf]
    %v560 = vld [vmem:[%s1 + $0x6a8] sm:$0xff]
    %v561 = vld [vmem:[%s1 + $0x6b0] sm:$0xf]
    %v562 = vld [vmem:[%s1 + $0x6b4] sm:$0xff]
    %v563 = vld [vmem:[%s1 + $0x6bc] sm:$0xf]
    %v564 = vld [vmem:[%s1 + $0x6c0] sm:$0xff]
    %v565 = vld [vmem:[%s1 + $0x6c8] sm:$0xf]
    %v566 = vld [vmem:[%s1 + $0x6cc] sm:$0xff]
    %v567 = vld [vmem:[%s1 + $0x6d4] sm:$0xf]
    %v568 = vld [vmem:[%s1 + $0x6d8] sm:$0xff]
    %v569 = vld [vmem:[%s1 + $0x6e0] sm:$0xf]
    %v570 = vld [vmem:[%s1 + $0x6e4] sm:$0xff]
    %v571 = vld [vmem:[%s1 + $0x6ec] sm:$0xf]
    %v572 = vld [vmem:[%s1 + $0x6f0] sm:$0xff]
    %v573 = vld [vmem:[%s1 + $0x6f8] sm:$0xf]
    %v574 = vld [vmem:[%s1 + $0x6fc] sm:$0xff]
    %v575 = vld [vmem:[%s1 + $0x704] sm:$0xf]
    %v576 = vld [vmem:[%s1 + $0x708] sm:$0xff]
    %v577 = vld [vmem:[%s1 + $0x710] sm:$0xf]
    %v578 = vld [vmem:[%s1 + $0x714] sm:$0xff]
    %v579 = vld [vmem:[%s1 + $0x71c] sm:$0xf]
    %v580 = vld [vmem:[%s1 + $0x720] sm:$0xff]
    %v581 = vld [vmem:[%s1 + $0x728] sm:$0xf]
    %v582 = vld [vmem:[%s1 + $0x72c] sm:$0xff]
    %v583 = vld [vmem:[%s1 + $0x734] sm:$0xf]
    %v584 = vld [vmem:[%s2] sm:$0x7]
    %v586 = vlaneseq
    %v587 = vshrl.u32 %v586, 7
    %v588 = vsub.s32 0, %v587
    %v589 = vrot.slane %v584, %v588
    %v590 = vlaneseq
    %v591 = vshrl.u32 %v590, 7
    %v592 = vsub.s32 1, %v591
    %v593 = vrot.slane %v584, %v592
    %v594 = vlaneseq
    %v595 = vshrl.u32 %v594, 7
    %v596 = vsub.s32 2, %v595
    %v597 = vrot.slane %v584, %v596
    %v909 = vunpack.c.l.b16 %v276
    %v910 = vunpack.c.h.b16 %v276
    %v911 = vunpack.c.l.b16 %v277
    %v912 = vunpack.c.l.b16 %v278
    %v913 = vunpack.c.h.b16 %v278
    %v914 = vunpack.c.l.b16 %v279
    %v915 = vunpack.c.l.b16 %v280
    %v916 = vunpack.c.h.b16 %v280
    %v917 = vunpack.c.l.b16 %v281
    %v918 = vunpack.c.l.b16 %v282
    %v919 = vunpack.c.h.b16 %v282
    %v920 = vunpack.c.l.b16 %v283
    %v921 = vunpack.c.l.b16 %v284
    %v922 = vunpack.c.h.b16 %v284
    %v923 = vunpack.c.l.b16 %v285
    %v924 = vunpack.c.l.b16 %v286
    %v925 = vunpack.c.h.b16 %v286
    %v926 = vunpack.c.l.b16 %v287
    %v927 = vunpack.c.l.b16 %v288
    %v928 = vunpack.c.h.b16 %v288
    %v929 = vunpack.c.l.b16 %v289
    %v930 = vunpack.c.l.b16 %v290
    %v931 = vunpack.c.h.b16 %v290
    %v932 = vunpack.c.l.b16 %v291
    %v933 = vunpack.c.l.b16 %v292
    %v934 = vunpack.c.h.b16 %v292
    %v935 = vunpack.c.l.b16 %v293
    %v936 = vunpack.c.l.b16 %v294
    %v937 = vunpack.c.h.b16 %v294
    %v938 = vunpack.c.l.b16 %v295
    %v939 = vunpack.c.l.b16 %v296
    %v940 = vunpack.c.h.b16 %v296
    %v941 = vunpack.c.l.b16 %v297
    %v942 = vunpack.c.l.b16 %v298
    %v943 = vunpack.c.h.b16 %v298
    %v944 = vunpack.c.l.b16 %v299
    %v945 = vunpack.c.l.b16 %v300
    %v946 = vunpack.c.h.b16 %v300
    %v947 = vunpack.c.l.b16 %v301
    %v948 = vunpack.c.l.b16 %v302
    %v949 = vunpack.c.h.b16 %v302
    %v950 = vunpack.c.l.b16 %v303
    %v951 = vunpack.c.l.b16 %v304
    %v952 = vunpack.c.h.b16 %v304
    %v953 = vunpack.c.l.b16 %v305
    %v954 = vunpack.c.l.b16 %v306
    %v955 = vunpack.c.h.b16 %v306
    %v956 = vunpack.c.l.b16 %v307
    %v957 = vunpack.c.l.b16 %v308
    %v958 = vunpack.c.h.b16 %v308
    %v959 = vunpack.c.l.b16 %v309
    %v960 = vunpack.c.l.b16 %v310
    %v961 = vunpack.c.h.b16 %v310
    %v962 = vunpack.c.l.b16 %v311
    %v963 = vunpack.c.l.b16 %v312
    %v964 = vunpack.c.h.b16 %v312
    %v965 = vunpack.c.l.b16 %v313
    %v966 = vunpack.c.l.b16 %v314
    %v967 = vunpack.c.h.b16 %v314
    %v968 = vunpack.c.l.b16 %v315
    %v969 = vunpack.c.l.b16 %v316
    %v970 = vunpack.c.h.b16 %v316
    %v971 = vunpack.c.l.b16 %v317
    %v972 = vunpack.c.l.b16 %v318
    %v973 = vunpack.c.h.b16 %v318
    %v974 = vunpack.c.l.b16 %v319
    %v975 = vunpack.c.l.b16 %v320
    %v976 = vunpack.c.h.b16 %v320
    %v977 = vunpack.c.l.b16 %v321
    %v978 = vunpack.c.l.b16 %v322
    %v979 = vunpack.c.h.b16 %v322
    %v980 = vunpack.c.l.b16 %v323
    %v981 = vunpack.c.l.b16 %v324
    %v982 = vunpack.c.h.b16 %v324
    %v983 = vunpack.c.l.b16 %v325
    %v984 = vunpack.c.l.b16 %v326
    %v985 = vunpack.c.h.b16 %v326
    %v986 = vunpack.c.l.b16 %v327
    %v987 = vunpack.c.l.b16 %v328
    %v988 = vunpack.c.h.b16 %v328
    %v989 = vunpack.c.l.b16 %v329
    %v990 = vunpack.c.l.b16 %v330
    %v991 = vunpack.c.h.b16 %v330
    %v992 = vunpack.c.l.b16 %v331
    %v993 = vunpack.c.l.b16 %v332
    %v994 = vunpack.c.h.b16 %v332
    %v995 = vunpack.c.l.b16 %v333
    %v996 = vunpack.c.l.b16 %v334
    %v997 = vunpack.c.h.b16 %v334
    %v998 = vunpack.c.l.b16 %v335
    %v999 = vunpack.c.l.b16 %v336
    %v1000 = vunpack.c.h.b16 %v336
    %v1001 = vunpack.c.l.b16 %v337
    %v1002 = vunpack.c.l.b16 %v338
    %v1003 = vunpack.c.h.b16 %v338
    %v1004 = vunpack.c.l.b16 %v339
    %v1005 = vunpack.c.l.b16 %v340
    %v1006 = vunpack.c.h.b16 %v340
    %v1007 = vunpack.c.l.b16 %v341
    %v1008 = vunpack.c.l.b16 %v342
    %v1009 = vunpack.c.h.b16 %v342
    %v1010 = vunpack.c.l.b16 %v343
    %v1011 = vunpack.c.l.b16 %v344
    %v1012 = vunpack.c.h.b16 %v344
    %v1013 = vunpack.c.l.b16 %v345
    %v1014 = vunpack.c.l.b16 %v346
    %v1015 = vunpack.c.h.b16 %v346
    %v1016 = vunpack.c.l.b16 %v347
    %v1017 = vunpack.c.l.b16 %v348
    %v1018 = vunpack.c.h.b16 %v348
    %v1019 = vunpack.c.l.b16 %v349
    %v1020 = vunpack.c.l.b16 %v350
    %v1021 = vunpack.c.h.b16 %v350
    %v1022 = vunpack.c.l.b16 %v351
    %v1023 = vunpack.c.l.b16 %v352
    %v1024 = vunpack.c.h.b16 %v352
    %v1025 = vunpack.c.l.b16 %v353
    %v1026 = vunpack.c.l.b16 %v354
    %v1027 = vunpack.c.h.b16 %v354
    %v1028 = vunpack.c.l.b16 %v355
    %v1029 = vunpack.c.l.b16 %v356
    %v1030 = vunpack.c.h.b16 %v356
    %v1031 = vunpack.c.l.b16 %v357
    %v1032 = vunpack.c.l.b16 %v358
    %v1033 = vunpack.c.h.b16 %v358
    %v1034 = vunpack.c.l.b16 %v359
    %v1035 = vunpack.c.l.b16 %v360
    %v1036 = vunpack.c.h.b16 %v360
    %v1037 = vunpack.c.l.b16 %v361
    %v1038 = vunpack.c.l.b16 %v362
    %v1039 = vunpack.c.h.b16 %v362
    %v1040 = vunpack.c.l.b16 %v363
    %v1041 = vunpack.c.l.b16 %v364
    %v1042 = vunpack.c.h.b16 %v364
    %v1043 = vunpack.c.l.b16 %v365
    %v1044 = vunpack.c.l.b16 %v366
    %v1045 = vunpack.c.h.b16 %v366
    %v1046 = vunpack.c.l.b16 %v367
    %v1047 = vunpack.c.l.b16 %v368
    %v1048 = vunpack.c.h.b16 %v368
    %v1049 = vunpack.c.l.b16 %v369
    %v1050 = vunpack.c.l.b16 %v370
    %v1051 = vunpack.c.h.b16 %v370
    %v1052 = vunpack.c.l.b16 %v371
    %v1053 = vunpack.c.l.b16 %v372
    %v1054 = vunpack.c.h.b16 %v372
    %v1055 = vunpack.c.l.b16 %v373
    %v1056 = vunpack.c.l.b16 %v374
    %v1057 = vunpack.c.h.b16 %v374
    %v1058 = vunpack.c.l.b16 %v375
    %v1059 = vunpack.c.l.b16 %v376
    %v1060 = vunpack.c.h.b16 %v376
    %v1061 = vunpack.c.l.b16 %v377
    %v1062 = vunpack.c.l.b16 %v378
    %v1063 = vunpack.c.h.b16 %v378
    %v1064 = vunpack.c.l.b16 %v379
    %v1065 = vunpack.c.l.b16 %v380
    %v1066 = vunpack.c.h.b16 %v380
    %v1067 = vunpack.c.l.b16 %v381
    %v1068 = vunpack.c.l.b16 %v382
    %v1069 = vunpack.c.h.b16 %v382
    %v1070 = vunpack.c.l.b16 %v383
    %v1071 = vunpack.c.l.b16 %v384
    %v1072 = vunpack.c.h.b16 %v384
    %v1073 = vunpack.c.l.b16 %v385
    %v1074 = vunpack.c.l.b16 %v386
    %v1075 = vunpack.c.h.b16 %v386
    %v1076 = vunpack.c.l.b16 %v387
    %v1077 = vunpack.c.l.b16 %v388
    %v1078 = vunpack.c.h.b16 %v388
    %v1079 = vunpack.c.l.b16 %v389
    %v1080 = vunpack.c.l.b16 %v390
    %v1081 = vunpack.c.h.b16 %v390
    %v1082 = vunpack.c.l.b16 %v391
    %v1083 = vunpack.c.l.b16 %v392
    %v1084 = vunpack.c.h.b16 %v392
    %v1085 = vunpack.c.l.b16 %v393
    %v1086 = vunpack.c.l.b16 %v394
    %v1087 = vunpack.c.h.b16 %v394
    %v1088 = vunpack.c.l.b16 %v395
    %v1089 = vunpack.c.l.b16 %v396
    %v1090 = vunpack.c.h.b16 %v396
    %v1091 = vunpack.c.l.b16 %v397
    %v1092 = vunpack.c.l.b16 %v398
    %v1093 = vunpack.c.h.b16 %v398
    %v1094 = vunpack.c.l.b16 %v399
    %v1095 = vunpack.c.l.b16 %v400
    %v1096 = vunpack.c.h.b16 %v400
    %v1097 = vunpack.c.l.b16 %v401
    %v1098 = vunpack.c.l.b16 %v402
    %v1099 = vunpack.c.h.b16 %v402
    %v1100 = vunpack.c.l.b16 %v403
    %v1101 = vunpack.c.l.b16 %v404
    %v1102 = vunpack.c.h.b16 %v404
    %v1103 = vunpack.c.l.b16 %v405
    %v1104 = vunpack.c.l.b16 %v406
    %v1105 = vunpack.c.h.b16 %v406
    %v1106 = vunpack.c.l.b16 %v407
    %v1107 = vunpack.c.l.b16 %v408
    %v1108 = vunpack.c.h.b16 %v408
    %v1109 = vunpack.c.l.b16 %v409
    %v1110 = vunpack.c.l.b16 %v410
    %v1111 = vunpack.c.h.b16 %v410
    %v1112 = vunpack.c.l.b16 %v411
    %v1113 = vunpack.c.l.b16 %v412
    %v1114 = vunpack.c.h.b16 %v412
    %v1115 = vunpack.c.l.b16 %v413
    %v1116 = vunpack.c.l.b16 %v414
    %v1117 = vunpack.c.h.b16 %v414
    %v1118 = vunpack.c.l.b16 %v415
    %v1119 = vunpack.c.l.b16 %v416
    %v1120 = vunpack.c.h.b16 %v416
    %v1121 = vunpack.c.l.b16 %v417
    %v1122 = vunpack.c.l.b16 %v418
    %v1123 = vunpack.c.h.b16 %v418
    %v1124 = vunpack.c.l.b16 %v419
    %v1125 = vunpack.c.l.b16 %v420
    %v1126 = vunpack.c.h.b16 %v420
    %v1127 = vunpack.c.l.b16 %v421
    %v1128 = vunpack.c.l.b16 %v422
    %v1129 = vunpack.c.h.b16 %v422
    %v1130 = vunpack.c.l.b16 %v423
    %v1131 = vunpack.c.l.b16 %v424
    %v1132 = vunpack.c.h.b16 %v424
    %v1133 = vunpack.c.l.b16 %v425
    %v1134 = vunpack.c.l.b16 %v426
    %v1135 = vunpack.c.h.b16 %v426
    %v1136 = vunpack.c.l.b16 %v427
    %v1137 = vunpack.c.l.b16 %v428
    %v1138 = vunpack.c.h.b16 %v428
    %v1139 = vunpack.c.l.b16 %v429
    %v1140 = vunpack.c.l.b16 %v430
    %v1141 = vunpack.c.h.b16 %v430
    %v1142 = vunpack.c.l.b16 %v431
    %v1143 = vunpack.c.l.b16 %v432
    %v1144 = vunpack.c.h.b16 %v432
    %v1145 = vunpack.c.l.b16 %v433
    %v1146 = vunpack.c.l.b16 %v434
    %v1147 = vunpack.c.h.b16 %v434
    %v1148 = vunpack.c.l.b16 %v435
    %v1149 = vunpack.c.l.b16 %v436
    %v1150 = vunpack.c.h.b16 %v436
    %v1151 = vunpack.c.l.b16 %v437
    %v1152 = vunpack.c.l.b16 %v438
    %v1153 = vunpack.c.h.b16 %v438
    %v1154 = vunpack.c.l.b16 %v439
    %v1155 = vunpack.c.l.b16 %v440
    %v1156 = vunpack.c.h.b16 %v440
    %v1157 = vunpack.c.l.b16 %v441
    %v1158 = vunpack.c.l.b16 %v442
    %v1159 = vunpack.c.h.b16 %v442
    %v1160 = vunpack.c.l.b16 %v443
    %v1161 = vunpack.c.l.b16 %v444
    %v1162 = vunpack.c.h.b16 %v444
    %v1163 = vunpack.c.l.b16 %v445
    %v1164 = vunpack.c.l.b16 %v446
    %v1165 = vunpack.c.h.b16 %v446
    %v1166 = vunpack.c.l.b16 %v447
    %v1167 = vunpack.c.l.b16 %v448
    %v1168 = vunpack.c.h.b16 %v448
    %v1169 = vunpack.c.l.b16 %v449
    %v1170 = vunpack.c.l.b16 %v450
    %v1171 = vunpack.c.h.b16 %v450
    %v1172 = vunpack.c.l.b16 %v451
    %v1173 = vunpack.c.l.b16 %v452
    %v1174 = vunpack.c.h.b16 %v452
    %v1175 = vunpack.c.l.b16 %v453
    %v1176 = vunpack.c.l.b16 %v454
    %v1177 = vunpack.c.h.b16 %v454
    %v1178 = vunpack.c.l.b16 %v455
    %v1179 = vunpack.c.l.b16 %v456
    %v1180 = vunpack.c.h.b16 %v456
    %v1181 = vunpack.c.l.b16 %v457
    %v1182 = vunpack.c.l.b16 %v458
    %v1183 = vunpack.c.h.b16 %v458
    %v1184 = vunpack.c.l.b16 %v459
    %v1185 = vunpack.c.l.b16 %v460
    %v1186 = vunpack.c.h.b16 %v460
    %v1187 = vunpack.c.l.b16 %v461
    %v1188 = vunpack.c.l.b16 %v462
    %v1189 = vunpack.c.h.b16 %v462
    %v1190 = vunpack.c.l.b16 %v463
    %v1191 = vunpack.c.l.b16 %v464
    %v1192 = vunpack.c.h.b16 %v464
    %v1193 = vunpack.c.l.b16 %v465
    %v1194 = vunpack.c.l.b16 %v466
    %v1195 = vunpack.c.h.b16 %v466
    %v1196 = vunpack.c.l.b16 %v467
    %v1197 = vunpack.c.l.b16 %v468
    %v1198 = vunpack.c.h.b16 %v468
    %v1199 = vunpack.c.l.b16 %v469
    %v1200 = vunpack.c.l.b16 %v470
    %v1201 = vunpack.c.h.b16 %v470
    %v1202 = vunpack.c.l.b16 %v471
    %v1203 = vunpack.c.l.b16 %v472
    %v1204 = vunpack.c.h.b16 %v472
    %v1205 = vunpack.c.l.b16 %v473
    %v1206 = vunpack.c.l.b16 %v474
    %v1207 = vunpack.c.h.b16 %v474
    %v1208 = vunpack.c.l.b16 %v475
    %v1209 = vunpack.c.l.b16 %v476
    %v1210 = vunpack.c.h.b16 %v476
    %v1211 = vunpack.c.l.b16 %v477
    %v1212 = vunpack.c.l.b16 %v478
    %v1213 = vunpack.c.h.b16 %v478
    %v1214 = vunpack.c.l.b16 %v479
    %v1215 = vunpack.c.l.b16 %v480
    %v1216 = vunpack.c.h.b16 %v480
    %v1217 = vunpack.c.l.b16 %v481
    %v1218 = vunpack.c.l.b16 %v482
    %v1219 = vunpack.c.h.b16 %v482
    %v1220 = vunpack.c.l.b16 %v483
    %v1221 = vunpack.c.l.b16 %v484
    %v1222 = vunpack.c.h.b16 %v484
    %v1223 = vunpack.c.l.b16 %v485
    %v1224 = vunpack.c.l.b16 %v486
    %v1225 = vunpack.c.h.b16 %v486
    %v1226 = vunpack.c.l.b16 %v487
    %v1227 = vunpack.c.l.b16 %v488
    %v1228 = vunpack.c.h.b16 %v488
    %v1229 = vunpack.c.l.b16 %v489
    %v1230 = vunpack.c.l.b16 %v490
    %v1231 = vunpack.c.h.b16 %v490
    %v1232 = vunpack.c.l.b16 %v491
    %v1233 = vunpack.c.l.b16 %v492
    %v1234 = vunpack.c.h.b16 %v492
    %v1235 = vunpack.c.l.b16 %v493
    %v1236 = vunpack.c.l.b16 %v494
    %v1237 = vunpack.c.h.b16 %v494
    %v1238 = vunpack.c.l.b16 %v495
    %v1239 = vunpack.c.l.b16 %v496
    %v1240 = vunpack.c.h.b16 %v496
    %v1241 = vunpack.c.l.b16 %v497
    %v1242 = vunpack.c.l.b16 %v498
    %v1243 = vunpack.c.h.b16 %v498
    %v1244 = vunpack.c.l.b16 %v499
    %v1245 = vunpack.c.l.b16 %v500
    %v1246 = vunpack.c.h.b16 %v500
    %v1247 = vunpack.c.l.b16 %v501
    %v1248 = vunpack.c.l.b16 %v502
    %v1249 = vunpack.c.h.b16 %v502
    %v1250 = vunpack.c.l.b16 %v503
    %v1251 = vunpack.c.l.b16 %v504
    %v1252 = vunpack.c.h.b16 %v504
    %v1253 = vunpack.c.l.b16 %v505
    %v1254 = vunpack.c.l.b16 %v506
    %v1255 = vunpack.c.h.b16 %v506
    %v1256 = vunpack.c.l.b16 %v507
    %v1257 = vunpack.c.l.b16 %v508
    %v1258 = vunpack.c.h.b16 %v508
    %v1259 = vunpack.c.l.b16 %v509
    %v1260 = vunpack.c.l.b16 %v510
    %v1261 = vunpack.c.h.b16 %v510
    %v1262 = vunpack.c.l.b16 %v511
    %v1263 = vunpack.c.l.b16 %v512
    %v1264 = vunpack.c.h.b16 %v512
    %v1265 = vunpack.c.l.b16 %v513
    %v1266 = vunpack.c.l.b16 %v514
    %v1267 = vunpack.c.h.b16 %v514
    %v1268 = vunpack.c.l.b16 %v515
    %v1269 = vunpack.c.l.b16 %v516
    %v1270 = vunpack.c.h.b16 %v516
    %v1271 = vunpack.c.l.b16 %v517
    %v1272 = vunpack.c.l.b16 %v518
    %v1273 = vunpack.c.h.b16 %v518
    %v1274 = vunpack.c.l.b16 %v519
    %v1275 = vunpack.c.l.b16 %v520
    %v1276 = vunpack.c.h.b16 %v520
    %v1277 = vunpack.c.l.b16 %v521
    %v1278 = vunpack.c.l.b16 %v522
    %v1279 = vunpack.c.h.b16 %v522
    %v1280 = vunpack.c.l.b16 %v523
    %v1281 = vunpack.c.l.b16 %v524
    %v1282 = vunpack.c.h.b16 %v524
    %v1283 = vunpack.c.l.b16 %v525
    %v1284 = vunpack.c.l.b16 %v526
    %v1285 = vunpack.c.h.b16 %v526
    %v1286 = vunpack.c.l.b16 %v527
    %v1287 = vunpack.c.l.b16 %v528
    %v1288 = vunpack.c.h.b16 %v528
    %v1289 = vunpack.c.l.b16 %v529
    %v1290 = vunpack.c.l.b16 %v530
    %v1291 = vunpack.c.h.b16 %v530
    %v1292 = vunpack.c.l.b16 %v531
    %v1293 = vunpack.c.l.b16 %v532
    %v1294 = vunpack.c.h.b16 %v532
    %v1295 = vunpack.c.l.b16 %v533
    %v1296 = vunpack.c.l.b16 %v534
    %v1297 = vunpack.c.h.b16 %v534
    %v1298 = vunpack.c.l.b16 %v535
    %v1299 = vunpack.c.l.b16 %v536
    %v1300 = vunpack.c.h.b16 %v536
    %v1301 = vunpack.c.l.b16 %v537
    %v1302 = vunpack.c.l.b16 %v538
    %v1303 = vunpack.c.h.b16 %v538
    %v1304 = vunpack.c.l.b16 %v539
    %v1305 = vunpack.c.l.b16 %v540
    %v1306 = vunpack.c.h.b16 %v540
    %v1307 = vunpack.c.l.b16 %v541
    %v1308 = vunpack.c.l.b16 %v542
    %v1309 = vunpack.c.h.b16 %v542
    %v1310 = vunpack.c.l.b16 %v543
    %v1311 = vunpack.c.l.b16 %v544
    %v1312 = vunpack.c.h.b16 %v544
    %v1313 = vunpack.c.l.b16 %v545
    %v1314 = vunpack.c.l.b16 %v546
    %v1315 = vunpack.c.h.b16 %v546
    %v1316 = vunpack.c.l.b16 %v547
    %v1317 = vunpack.c.l.b16 %v548
    %v1318 = vunpack.c.h.b16 %v548
    %v1319 = vunpack.c.l.b16 %v549
    %v1320 = vunpack.c.l.b16 %v550
    %v1321 = vunpack.c.h.b16 %v550
    %v1322 = vunpack.c.l.b16 %v551
    %v1323 = vunpack.c.l.b16 %v552
    %v1324 = vunpack.c.h.b16 %v552
    %v1325 = vunpack.c.l.b16 %v553
    %v1326 = vunpack.c.l.b16 %v554
    %v1327 = vunpack.c.h.b16 %v554
    %v1328 = vunpack.c.l.b16 %v555
    %v1329 = vunpack.c.l.b16 %v556
    %v1330 = vunpack.c.h.b16 %v556
    %v1331 = vunpack.c.l.b16 %v557
    %v1332 = vunpack.c.l.b16 %v558
    %v1333 = vunpack.c.h.b16 %v558
    %v1334 = vunpack.c.l.b16 %v559
    %v1335 = vunpack.c.l.b16 %v560
    %v1336 = vunpack.c.h.b16 %v560
    %v1337 = vunpack.c.l.b16 %v561
    %v1338 = vunpack.c.l.b16 %v562
    %v1339 = vunpack.c.h.b16 %v562
    %v1340 = vunpack.c.l.b16 %v563
    %v1341 = vunpack.c.l.b16 %v564
    %v1342 = vunpack.c.h.b16 %v564
    %v1343 = vunpack.c.l.b16 %v565
    %v1344 = vunpack.c.l.b16 %v566
    %v1345 = vunpack.c.h.b16 %v566
    %v1346 = vunpack.c.l.b16 %v567
    %v1347 = vunpack.c.l.b16 %v568
    %v1348 = vunpack.c.h.b16 %v568
    %v1349 = vunpack.c.l.b16 %v569
    %v1350 = vunpack.c.l.b16 %v570
    %v1351 = vunpack.c.h.b16 %v570
    %v1352 = vunpack.c.l.b16 %v571
    %v1353 = vunpack.c.l.b16 %v572
    %v1354 = vunpack.c.h.b16 %v572
    %v1355 = vunpack.c.l.b16 %v573
    %v1356 = vunpack.c.l.b16 %v574
    %v1357 = vunpack.c.h.b16 %v574
    %v1358 = vunpack.c.l.b16 %v575
    %v1359 = vunpack.c.l.b16 %v576
    %v1360 = vunpack.c.h.b16 %v576
    %v1361 = vunpack.c.l.b16 %v577
    %v1362 = vunpack.c.l.b16 %v578
    %v1363 = vunpack.c.h.b16 %v578
    %v1364 = vunpack.c.l.b16 %v579
    %v1365 = vunpack.c.l.b16 %v580
    %v1366 = vunpack.c.h.b16 %v580
    %v1367 = vunpack.c.l.b16 %v581
    %v1368 = vunpack.c.l.b16 %v582
    %v1369 = vunpack.c.h.b16 %v582
    %v1370 = vunpack.c.l.b16 %v583
    %v1371 = vpack.c.b16 %v912, %v909
    %v1372 = vpack.c.b16 %v913, %v910
    %v1373 = vpack.c.b16 %v914, %v911
    %v1374 = vpack.c.b16 %v918, %v915
    %v1375 = vpack.c.b16 %v919, %v916
    %v1376 = vpack.c.b16 %v920, %v917
    %v1377 = vpack.c.b16 %v924, %v921
    %v1378 = vpack.c.b16 %v925, %v922
    %v1379 = vpack.c.b16 %v926, %v923
    %v1380 = vpack.c.b16 %v930, %v927
    %v1381 = vpack.c.b16 %v931, %v928
    %v1382 = vpack.c.b16 %v932, %v929
    %v1383 = vpack.c.b16 %v936, %v933
    %v1384 = vpack.c.b16 %v937, %v934
    %v1385 = vpack.c.b16 %v938, %v935
    %v1386 = vpack.c.b16 %v942, %v939
    %v1387 = vpack.c.b16 %v943, %v940
    %v1388 = vpack.c.b16 %v944, %v941
    %v1389 = vpack.c.b16 %v948, %v945
    %v1390 = vpack.c.b16 %v949, %v946
    %v1391 = vpack.c.b16 %v950, %v947
    %v1392 = vpack.c.b16 %v954, %v951
    %v1393 = vpack.c.b16 %v955, %v952
    %v1394 = vpack.c.b16 %v956, %v953
    %v1395 = vpack.c.b16 %v960, %v957
    %v1396 = vpack.c.b16 %v961, %v958
    %v1397 = vpack.c.b16 %v962, %v959
    %v1398 = vpack.c.b16 %v966, %v963
    %v1399 = vpack.c.b16 %v967, %v964
    %v1400 = vpack.c.b16 %v968, %v965
    %v1401 = vpack.c.b16 %v972, %v969
    %v1402 = vpack.c.b16 %v973, %v970
    %v1403 = vpack.c.b16 %v974, %v971
    %v1404 = vpack.c.b16 %v978, %v975
    %v1405 = vpack.c.b16 %v979, %v976
    %v1406 = vpack.c.b16 %v980, %v977
    %v1407 = vpack.c.b16 %v984, %v981
    %v1408 = vpack.c.b16 %v985, %v982
    %v1409 = vpack.c.b16 %v986, %v983
    %v1410 = vpack.c.b16 %v990, %v987
    %v1411 = vpack.c.b16 %v991, %v988
    %v1412 = vpack.c.b16 %v992, %v989
    %v1413 = vpack.c.b16 %v996, %v993
    %v1414 = vpack.c.b16 %v997, %v994
    %v1415 = vpack.c.b16 %v998, %v995
    %v1416 = vpack.c.b16 %v1002, %v999
    %v1417 = vpack.c.b16 %v1003, %v1000
    %v1418 = vpack.c.b16 %v1004, %v1001
    %v1419 = vpack.c.b16 %v1008, %v1005
    %v1420 = vpack.c.b16 %v1009, %v1006
    %v1421 = vpack.c.b16 %v1010, %v1007
    %v1422 = vpack.c.b16 %v1014, %v1011
    %v1423 = vpack.c.b16 %v1015, %v1012
    %v1424 = vpack.c.b16 %v1016, %v1013
    %v1425 = vpack.c.b16 %v1020, %v1017
    %v1426 = vpack.c.b16 %v1021, %v1018
    %v1427 = vpack.c.b16 %v1022, %v1019
    %v1428 = vpack.c.b16 %v1026, %v1023
    %v1429 = vpack.c.b16 %v1027, %v1024
    %v1430 = vpack.c.b16 %v1028, %v1025
    %v1431 = vpack.c.b16 %v1032, %v1029
    %v1432 = vpack.c.b16 %v1033, %v1030
    %v1433 = vpack.c.b16 %v1034, %v1031
    %v1434 = vpack.c.b16 %v1038, %v1035
    %v1435 = vpack.c.b16 %v1039, %v1036
    %v1436 = vpack.c.b16 %v1040, %v1037
    %v1437 = vpack.c.b16 %v1044, %v1041
    %v1438 = vpack.c.b16 %v1045, %v1042
    %v1439 = vpack.c.b16 %v1046, %v1043
    %v1440 = vpack.c.b16 %v1050, %v1047
    %v1441 = vpack.c.b16 %v1051, %v1048
    %v1442 = vpack.c.b16 %v1052, %v1049
    %v1443 = vpack.c.b16 %v1056, %v1053
    %v1444 = vpack.c.b16 %v1057, %v1054
    %v1445 = vpack.c.b16 %v1058, %v1055
    %v1446 = vpack.c.b16 %v1062, %v1059
    %v1447 = vpack.c.b16 %v1063, %v1060
    %v1448 = vpack.c.b16 %v1064, %v1061
    %v1449 = vpack.c.b16 %v1068, %v1065
    %v1450 = vpack.c.b16 %v1069, %v1066
    %v1451 = vpack.c.b16 %v1070, %v1067
    %v1452 = vpack.c.b16 %v1074, %v1071
    %v1453 = vpack.c.b16 %v1075, %v1072
    %v1454 = vpack.c.b16 %v1076, %v1073
    %v1455 = vpack.c.b16 %v1080, %v1077
    %v1456 = vpack.c.b16 %v1081, %v1078
    %v1457 = vpack.c.b16 %v1082, %v1079
    %v1458 = vpack.c.b16 %v1086, %v1083
    %v1459 = vpack.c.b16 %v1087, %v1084
    %v1460 = vpack.c.b16 %v1088, %v1085
    %v1461 = vpack.c.b16 %v1092, %v1089
    %v1462 = vpack.c.b16 %v1093, %v1090
    %v1463 = vpack.c.b16 %v1094, %v1091
    %v1464 = vpack.c.b16 %v1098, %v1095
    %v1465 = vpack.c.b16 %v1099, %v1096
    %v1466 = vpack.c.b16 %v1100, %v1097
    %v1467 = vpack.c.b16 %v1104, %v1101
    %v1468 = vpack.c.b16 %v1105, %v1102
    %v1469 = vpack.c.b16 %v1106, %v1103
    %v1470 = vpack.c.b16 %v1110, %v1107
    %v1471 = vpack.c.b16 %v1111, %v1108
    %v1472 = vpack.c.b16 %v1112, %v1109
    %v1473 = vpack.c.b16 %v1116, %v1113
    %v1474 = vpack.c.b16 %v1117, %v1114
    %v1475 = vpack.c.b16 %v1118, %v1115
    %v1476 = vpack.c.b16 %v1122, %v1119
    %v1477 = vpack.c.b16 %v1123, %v1120
    %v1478 = vpack.c.b16 %v1124, %v1121
    %v1479 = vpack.c.b16 %v1128, %v1125
    %v1480 = vpack.c.b16 %v1129, %v1126
    %v1481 = vpack.c.b16 %v1130, %v1127
    %v1482 = vpack.c.b16 %v1134, %v1131
    %v1483 = vpack.c.b16 %v1135, %v1132
    %v1484 = vpack.c.b16 %v1136, %v1133
    %v1485 = vpack.c.b16 %v1140, %v1137
    %v1486 = vpack.c.b16 %v1141, %v1138
    %v1487 = vpack.c.b16 %v1142, %v1139
    %v1488 = vpack.c.b16 %v1146, %v1143
    %v1489 = vpack.c.b16 %v1147, %v1144
    %v1490 = vpack.c.b16 %v1148, %v1145
    %v1491 = vpack.c.b16 %v1152, %v1149
    %v1492 = vpack.c.b16 %v1153, %v1150
    %v1493 = vpack.c.b16 %v1154, %v1151
    %v1494 = vpack.c.b16 %v1158, %v1155
    %v1495 = vpack.c.b16 %v1159, %v1156
    %v1496 = vpack.c.b16 %v1160, %v1157
    %v1497 = vpack.c.b16 %v1164, %v1161
    %v1498 = vpack.c.b16 %v1165, %v1162
    %v1499 = vpack.c.b16 %v1166, %v1163
    %v1500 = vpack.c.b16 %v1170, %v1167
    %v1501 = vpack.c.b16 %v1171, %v1168
    %v1502 = vpack.c.b16 %v1172, %v1169
    %v1503 = vpack.c.b16 %v1176, %v1173
    %v1504 = vpack.c.b16 %v1177, %v1174
    %v1505 = vpack.c.b16 %v1178, %v1175
    %v1506 = vpack.c.b16 %v1182, %v1179
    %v1507 = vpack.c.b16 %v1183, %v1180
    %v1508 = vpack.c.b16 %v1184, %v1181
    %v1509 = vpack.c.b16 %v1188, %v1185
    %v1510 = vpack.c.b16 %v1189, %v1186
    %v1511 = vpack.c.b16 %v1190, %v1187
    %v1512 = vpack.c.b16 %v1194, %v1191
    %v1513 = vpack.c.b16 %v1195, %v1192
    %v1514 = vpack.c.b16 %v1196, %v1193
    %v1515 = vpack.c.b16 %v1200, %v1197
    %v1516 = vpack.c.b16 %v1201, %v1198
    %v1517 = vpack.c.b16 %v1202, %v1199
    %v1518 = vpack.c.b16 %v1206, %v1203
    %v1519 = vpack.c.b16 %v1207, %v1204
    %v1520 = vpack.c.b16 %v1208, %v1205
    %v1521 = vpack.c.b16 %v1212, %v1209
    %v1522 = vpack.c.b16 %v1213, %v1210
    %v1523 = vpack.c.b16 %v1214, %v1211
    %v1524 = vpack.c.b16 %v1218, %v1215
    %v1525 = vpack.c.b16 %v1219, %v1216
    %v1526 = vpack.c.b16 %v1220, %v1217
    %v1527 = vpack.c.b16 %v1224, %v1221
    %v1528 = vpack.c.b16 %v1225, %v1222
    %v1529 = vpack.c.b16 %v1226, %v1223
    %v1530 = vpack.c.b16 %v1230, %v1227
    %v1531 = vpack.c.b16 %v1231, %v1228
    %v1532 = vpack.c.b16 %v1232, %v1229
    %v1533 = vpack.c.b16 %v1236, %v1233
    %v1534 = vpack.c.b16 %v1237, %v1234
    %v1535 = vpack.c.b16 %v1238, %v1235
    %v1536 = vpack.c.b16 %v1242, %v1239
    %v1537 = vpack.c.b16 %v1243, %v1240
    %v1538 = vpack.c.b16 %v1244, %v1241
    %v1539 = vpack.c.b16 %v1248, %v1245
    %v1540 = vpack.c.b16 %v1249, %v1246
    %v1541 = vpack.c.b16 %v1250, %v1247
    %v1542 = vpack.c.b16 %v1254, %v1251
    %v1543 = vpack.c.b16 %v1255, %v1252
    %v1544 = vpack.c.b16 %v1256, %v1253
    %v1545 = vpack.c.b16 %v1260, %v1257
    %v1546 = vpack.c.b16 %v1261, %v1258
    %v1547 = vpack.c.b16 %v1262, %v1259
    %v1548 = vpack.c.b16 %v1266, %v1263
    %v1549 = vpack.c.b16 %v1267, %v1264
    %v1550 = vpack.c.b16 %v1268, %v1265
    %v1551 = vpack.c.b16 %v1272, %v1269
    %v1552 = vpack.c.b16 %v1273, %v1270
    %v1553 = vpack.c.b16 %v1274, %v1271
    %v1554 = vpack.c.b16 %v1278, %v1275
    %v1555 = vpack.c.b16 %v1279, %v1276
    %v1556 = vpack.c.b16 %v1280, %v1277
    %v1557 = vpack.c.b16 %v1284, %v1281
    %v1558 = vpack.c.b16 %v1285, %v1282
    %v1559 = vpack.c.b16 %v1286, %v1283
    %v1560 = vpack.c.b16 %v1290, %v1287
    %v1561 = vpack.c.b16 %v1291, %v1288
    %v1562 = vpack.c.b16 %v1292, %v1289
    %v1563 = vpack.c.b16 %v1296, %v1293
    %v1564 = vpack.c.b16 %v1297, %v1294
    %v1565 = vpack.c.b16 %v1298, %v1295
    %v1566 = vpack.c.b16 %v1302, %v1299
    %v1567 = vpack.c.b16 %v1303, %v1300
    %v1568 = vpack.c.b16 %v1304, %v1301
    %v1569 = vpack.c.b16 %v1308, %v1305
    %v1570 = vpack.c.b16 %v1309, %v1306
    %v1571 = vpack.c.b16 %v1310, %v1307
    %v1572 = vpack.c.b16 %v1314, %v1311
    %v1573 = vpack.c.b16 %v1315, %v1312
    %v1574 = vpack.c.b16 %v1316, %v1313
    %v1575 = vpack.c.b16 %v1320, %v1317
    %v1576 = vpack.c.b16 %v1321, %v1318
    %v1577 = vpack.c.b16 %v1322, %v1319
    %v1578 = vpack.c.b16 %v1326, %v1323
    %v1579 = vpack.c.b16 %v1327, %v1324
    %v1580 = vpack.c.b16 %v1328, %v1325
    %v1581 = vpack.c.b16 %v1332, %v1329
    %v1582 = vpack.c.b16 %v1333, %v1330
    %v1583 = vpack.c.b16 %v1334, %v1331
    %v1584 = vpack.c.b16 %v1338, %v1335
    %v1585 = vpack.c.b16 %v1339, %v1336
    %v1586 = vpack.c.b16 %v1340, %v1337
    %v1587 = vpack.c.b16 %v1344, %v1341
    %v1588 = vpack.c.b16 %v1345, %v1342
    %v1589 = vpack.c.b16 %v1346, %v1343
    %v1590 = vpack.c.b16 %v1350, %v1347
    %v1591 = vpack.c.b16 %v1351, %v1348
    %v1592 = vpack.c.b16 %v1352, %v1349
    %v1593 = vpack.c.b16 %v1356, %v1353
    %v1594 = vpack.c.b16 %v1357, %v1354
    %v1595 = vpack.c.b16 %v1358, %v1355
    %v1596 = vpack.c.b16 %v1362, %v1359
    %v1597 = vpack.c.b16 %v1363, %v1360
    %v1598 = vpack.c.b16 %v1364, %v1361
    %v1599 = vpack.c.b16 %v1368, %v1365
    %v1600 = vpack.c.b16 %v1369, %v1366
    %v1601 = vpack.c.b16 %v1370, %v1367
    %vm1833 = vcmask 654336
    %v1835 = vsel %vm1833, %v275, 0
    %1837 = vmatprep.subr.bf16.mxu0 %v1372
    %1838 = vmatpush1.bf16.msra.mxu0 %v1371
    %1839 = vmatprep.subr.bf16.mxu0 %v1375
    %1840 = vmatpush1.bf16.msra.mxu0 %v1374
    %1841 = vmatprep.subr.bf16.mxu0 %v1378
    %1842 = vmatpush1.bf16.msra.mxu0 %v1377
    %1843 = vmatprep.subr.bf16.mxu0 %v1381
    %1844 = vmatpush1.bf16.msra.mxu0 %v1380
    %1845 = vmatprep.subr.bf16.mxu0 %v1384
    %1846 = vmatpush1.bf16.msra.mxu0 %v1383
    %1847 = vmatprep.subr.bf16.mxu0 %v1387
    %1848 = vmatpush1.bf16.msra.mxu0 %v1386
    %1849 = vmatprep.subr.bf16.mxu0 %v1390
    %1850 = vmatpush1.bf16.msra.mxu0 %v1389
    %1851 = vmatprep.subr.bf16.mxu0 %v1393
    %1852 = vmatpush1.bf16.msra.mxu0 %v1392
    %1853 = vmatprep.subr.bf16.mxu0 %v1396
    %1854 = vmatpush1.bf16.msra.mxu0 %v1395
    %1855 = vmatprep.subr.bf16.mxu0 %v1399
    %1856 = vmatpush1.bf16.msra.mxu0 %v1398
    %1857 = vmatprep.subr.bf16.mxu0 %v1402
    %1858 = vmatpush1.bf16.msra.mxu0 %v1401
    %1859 = vmatprep.subr.bf16.mxu0 %v1405
    %1860 = vmatpush1.bf16.msra.mxu0 %v1404
    %1861 = vmatprep.subr.bf16.mxu0 %v1408
    %1862 = vmatpush1.bf16.msra.mxu0 %v1407
    %1863 = vmatprep.subr.bf16.mxu0 %v1411
    %1864 = vmatpush1.bf16.msra.mxu0 %v1410
    %1865 = vmatprep.subr.bf16.mxu0 %v1414
    %1866 = vmatpush1.bf16.msra.mxu0 %v1413
    %1867 = vmatprep.subr.bf16.mxu0 %v1417
    %1868 = vmatpush1.bf16.msra.mxu0 %v1416
    %1869 = vmatprep.mubr.bf16.mxu0 %v267
    %1870 = vmatmul.mubr.bf16.gmra.mrb[0].mxu0 %v266
    %v1871 = vpop.f32.mrb[0].mxu0
    %v1872 = vadd.f32 %v589, %v1871
    %v1873 = vpop.f32.mrb[0].mxu0
    %v1874 = vadd.f32 %v593, %v1873
    %v1875 = vpop.f32.mrb[0].mxu0
    %v1876 = vpop.f32.mrb[0].mxu0
    %1877 = vdwg.mxu0
    %1878 = vmatprep.subr.bf16.mxu0 %v1420
    %1879 = vmatpush1.bf16.msra.mxu0 %v1419
    %1880 = vmatprep.subr.bf16.mxu0 %v1423
    %1881 = vmatpush1.bf16.msra.mxu0 %v1422
    %1882 = vmatprep.subr.bf16.mxu0 %v1426
    %1883 = vmatpush1.bf16.msra.mxu0 %v1425
    %1884 = vmatprep.subr.bf16.mxu0 %v1429
    %1885 = vmatpush1.bf16.msra.mxu0 %v1428
    %1886 = vmatprep.subr.bf16.mxu0 %v1432
    %1887 = vmatpush1.bf16.msra.mxu0 %v1431
    %1888 = vmatprep.subr.bf16.mxu0 %v1435
    %1889 = vmatpush1.bf16.msra.mxu0 %v1434
    %1890 = vmatprep.subr.bf16.mxu0 %v1438
    %1891 = vmatpush1.bf16.msra.mxu0 %v1437
    %1892 = vmatprep.subr.bf16.mxu0 %v1441
    %1893 = vmatpush1.bf16.msra.mxu0 %v1440
    %1894 = vmatprep.subr.bf16.mxu0 %v1444
    %1895 = vmatpush1.bf16.msra.mxu0 %v1443
    %1896 = vmatprep.subr.bf16.mxu0 %v1447
    %1897 = vmatpush1.bf16.msra.mxu0 %v1446
    %1898 = vmatprep.subr.bf16.mxu0 %v1450
    %1899 = vmatpush1.bf16.msra.mxu0 %v1449
    %1900 = vmatprep.subr.bf16.mxu0 %v1453
    %1901 = vmatpush1.bf16.msra.mxu0 %v1452
    %1902 = vmatprep.subr.bf16.mxu0 %v1456
    %1903 = vmatpush1.bf16.msra.mxu0 %v1455
    %1904 = vmatprep.subr.bf16.mxu0 %v1459
    %1905 = vmatpush1.bf16.msra.mxu0 %v1458
    %1906 = vmatprep.subr.bf16.mxu0 %v1462
    %1907 = vmatpush1.bf16.msra.mxu0 %v1461
    %1908 = vmatprep.subr.bf16.mxu0 %v1465
    %1909 = vmatpush1.bf16.msra.mxu0 %v1464
    %1910 = vmatprep.mubr.bf16.mxu0 %v269
    %1911 = vmatmul.mubr.bf16.gmra.mrb[0].mxu0 %v268
    %v1912 = vpop.f32.mrb[0].mxu0
    %v1913 = vadd.f32 %v1872, %v1912
    %v1914 = vpop.f32.mrb[0].mxu0
    %v1915 = vadd.f32 %v1874, %v1914
    %v1916 = vpop.f32.mrb[0].mxu0
    %v1917 = vpop.f32.mrb[0].mxu0
    %1918 = vdwg.mxu0
    %1919 = vmatprep.subr.bf16.mxu0 %v1468
    %1920 = vmatpush1.bf16.msra.mxu0 %v1467
    %1921 = vmatprep.subr.bf16.mxu0 %v1471
    %1922 = vmatpush1.bf16.msra.mxu0 %v1470
    %1923 = vmatprep.subr.bf16.mxu0 %v1474
    %1924 = vmatpush1.bf16.msra.mxu0 %v1473
    %1925 = vmatprep.subr.bf16.mxu0 %v1477
    %1926 = vmatpush1.bf16.msra.mxu0 %v1476
    %1927 = vmatprep.subr.bf16.mxu0 %v1480
    %1928 = vmatpush1.bf16.msra.mxu0 %v1479
    %1929 = vmatprep.subr.bf16.mxu0 %v1483
    %1930 = vmatpush1.bf16.msra.mxu0 %v1482
    %1931 = vmatprep.subr.bf16.mxu0 %v1486
    %1932 = vmatpush1.bf16.msra.mxu0 %v1485
    %1933 = vmatprep.subr.bf16.mxu0 %v1489
    %1934 = vmatpush1.bf16.msra.mxu0 %v1488
    %1935 = vmatprep.subr.bf16.mxu0 %v1492
    %1936 = vmatpush1.bf16.msra.mxu0 %v1491
    %1937 = vmatprep.subr.bf16.mxu0 %v1495
    %1938 = vmatpush1.bf16.msra.mxu0 %v1494
    %1939 = vmatprep.subr.bf16.mxu0 %v1498
    %1940 = vmatpush1.bf16.msra.mxu0 %v1497
    %1941 = vmatprep.subr.bf16.mxu0 %v1501
    %1942 = vmatpush1.bf16.msra.mxu0 %v1500
    %1943 = vmatprep.subr.bf16.mxu0 %v1504
    %1944 = vmatpush1.bf16.msra.mxu0 %v1503
    %1945 = vmatprep.subr.bf16.mxu0 %v1507
    %1946 = vmatpush1.bf16.msra.mxu0 %v1506
    %1947 = vmatprep.subr.bf16.mxu0 %v1510
    %1948 = vmatpush1.bf16.msra.mxu0 %v1509
    %1949 = vmatprep.subr.bf16.mxu0 %v1513
    %1950 = vmatpush1.bf16.msra.mxu0 %v1512
    %1951 = vmatprep.mubr.bf16.mxu0 %v271
    %1952 = vmatmul.mubr.bf16.gmra.mrb[0].mxu0 %v270
    %v1953 = vpop.f32.mrb[0].mxu0
    %v1954 = vadd.f32 %v1913, %v1953
    %v1955 = vpop.f32.mrb[0].mxu0
    %v1956 = vadd.f32 %v1915, %v1955
    %v1957 = vpop.f32.mrb[0].mxu0
    %v1958 = vpop.f32.mrb[0].mxu0
    %1959 = vdwg.mxu0
    %1960 = vmatprep.subr.bf16.mxu0 %v1516
    %1961 = vmatpush1.bf16.msra.mxu0 %v1515
    %1962 = vmatprep.subr.bf16.mxu0 %v1519
    %1963 = vmatpush1.bf16.msra.mxu0 %v1518
    %1964 = vmatprep.subr.bf16.mxu0 %v1522
    %1965 = vmatpush1.bf16.msra.mxu0 %v1521
    %1966 = vmatprep.subr.bf16.mxu0 %v1525
    %1967 = vmatpush1.bf16.msra.mxu0 %v1524
    %1968 = vmatprep.subr.bf16.mxu0 %v1528
    %1969 = vmatpush1.bf16.msra.mxu0 %v1527
    %1970 = vmatprep.subr.bf16.mxu0 %v1531
    %1971 = vmatpush1.bf16.msra.mxu0 %v1530
    %1972 = vmatprep.subr.bf16.mxu0 %v1534
    %1973 = vmatpush1.bf16.msra.mxu0 %v1533
    %1974 = vmatprep.subr.bf16.mxu0 %v1537
    %1975 = vmatpush1.bf16.msra.mxu0 %v1536
    %1976 = vmatprep.subr.bf16.mxu0 %v1540
    %1977 = vmatpush1.bf16.msra.mxu0 %v1539
    %1978 = vmatprep.subr.bf16.mxu0 %v1543
    %1979 = vmatpush1.bf16.msra.mxu0 %v1542
    %1980 = vmatprep.subr.bf16.mxu0 %v1546
    %1981 = vmatpush1.bf16.msra.mxu0 %v1545
    %1982 = vmatprep.subr.bf16.mxu0 %v1549
    %1983 = vmatpush1.bf16.msra.mxu0 %v1548
    %1984 = vmatprep.subr.bf16.mxu0 %v1552
    %1985 = vmatpush1.bf16.msra.mxu0 %v1551
    %1986 = vmatprep.subr.bf16.mxu0 %v1555
    %1987 = vmatpush1.bf16.msra.mxu0 %v1554
    %1988 = vmatprep.subr.bf16.mxu0 %v1558
    %1989 = vmatpush1.bf16.msra.mxu0 %v1557
    %1990 = vmatprep.subr.bf16.mxu0 %v1561
    %1991 = vmatpush1.bf16.msra.mxu0 %v1560
    %1992 = vmatprep.mubr.bf16.mxu0 %v273
    %1993 = vmatmul.mubr.bf16.gmra.mrb[0].mxu0 %v272
    %v1994 = vpop.f32.mrb[0].mxu0
    %v1995 = vadd.f32 %v1954, %v1994
    %v1996 = vpop.f32.mrb[0].mxu0
    %v1997 = vadd.f32 %v1956, %v1996
    %v1998 = vpop.f32.mrb[0].mxu0
    %v1999 = vpop.f32.mrb[0].mxu0
    %2000 = vdwg.mxu0
    %2001 = vmatprep.subr.bf16.mxu0 %v1564
    %2002 = vmatpush1.bf16.msra.mxu0 %v1563
    %2003 = vmatprep.subr.bf16.mxu0 %v1567
    %2004 = vmatpush1.bf16.msra.mxu0 %v1566
    %2005 = vmatprep.subr.bf16.mxu0 %v1570
    %2006 = vmatpush1.bf16.msra.mxu0 %v1569
    %2007 = vmatprep.subr.bf16.mxu0 %v1573
    %2008 = vmatpush1.bf16.msra.mxu0 %v1572
    %2009 = vmatprep.subr.bf16.mxu0 %v1576
    %2010 = vmatpush1.bf16.msra.mxu0 %v1575
    %2011 = vmatprep.subr.bf16.mxu0 %v1579
    %2012 = vmatpush1.bf16.msra.mxu0 %v1578
    %2013 = vmatprep.subr.bf16.mxu0 %v1582
    %2014 = vmatpush1.bf16.msra.mxu0 %v1581
    %2015 = vmatprep.subr.bf16.mxu0 %v1585
    %2016 = vmatpush1.bf16.msra.mxu0 %v1584
    %2017 = vmatprep.subr.bf16.mxu0 %v1588
    %2018 = vmatpush1.bf16.msra.mxu0 %v1587
    %2019 = vmatprep.subr.bf16.mxu0 %v1591
    %2020 = vmatpush1.bf16.msra.mxu0 %v1590
    %2021 = vmatprep.subr.bf16.mxu0 %v1594
    %2022 = vmatpush1.bf16.msra.mxu0 %v1593
    %2023 = vmatprep.subr.bf16.mxu0 %v1597
    %2024 = vmatpush1.bf16.msra.mxu0 %v1596
    %2025 = vmatprep.subr.bf16.mxu0 %v1600
    %2026 = vmatpush1.bf16.msra.mxu0 %v1599
    %2027 = vmatprep.subr.bf16.mxu0 0
    %2028 = vmatpush1.bf16.msra.mxu0 0
    %2029 = vmatprep.subr.bf16.mxu0 0
    %2030 = vmatpush1.bf16.msra.mxu0 0
    %2031 = vmatprep.subr.bf16.mxu0 0
    %2032 = vmatpush1.bf16.msra.mxu0 0
    %2033 = vmatprep.mubr.bf16.mxu0 %v1835
    %2034 = vmatmul.mubr.bf16.gmra.mrb[0].mxu0 %v274
    %v2035 = vpop.f32.mrb[0].mxu0
    %v2036 = vadd.f32 %v1995, %v2035
    %v2037 = vpop.f32.mrb[0].mxu0
    %v2038 = vadd.f32 %v1997, %v2037
    %v2039 = vpop.f32.mrb[0].mxu0
    %v2040 = vpop.f32.mrb[0].mxu0
    %2041 = vdwg.mxu0
    %2042 = vmatprep.subr.bf16.mxu0 0
    %2043 = vmatpush1.bf16.msra.mxu0 %v1373
    %2044 = vmatprep.subr.bf16.mxu0 0
    %2045 = vmatpush1.bf16.msra.mxu0 %v1376
    %2046 = vmatprep.subr.bf16.mxu0 0
    %2047 = vmatpush1.bf16.msra.mxu0 %v1379
    %2048 = vmatprep.subr.bf16.mxu0 0
    %2049 = vmatpush1.bf16.msra.mxu0 %v1382
    %2050 = vmatprep.subr.bf16.mxu0 0
    %2051 = vmatpush1.bf16.msra.mxu0 %v1385
    %2052 = vmatprep.subr.bf16.mxu0 0
    %2053 = vmatpush1.bf16.msra.mxu0 %v1388
    %2054 = vmatprep.subr.bf16.mxu0 0
    %2055 = vmatpush1.bf16.msra.mxu0 %v1391
    %2056 = vmatprep.subr.bf16.mxu0 0
    %2057 = vmatpush1.bf16.msra.mxu0 %v1394
    %2058 = vmatprep.subr.bf16.mxu0 0
    %2059 = vmatpush1.bf16.msra.mxu0 %v1397
    %2060 = vmatprep.subr.bf16.mxu0 0
    %2061 = vmatpush1.bf16.msra.mxu0 %v1400
    %2062 = vmatprep.subr.bf16.mxu0 0
    %2063 = vmatpush1.bf16.msra.mxu0 %v1403
    %2064 = vmatprep.subr.bf16.mxu0 0
    %2065 = vmatpush1.bf16.msra.mxu0 %v1406
    %2066 = vmatprep.subr.bf16.mxu0 0
    %2067 = vmatpush1.bf16.msra.mxu0 %v1409
    %2068 = vmatprep.subr.bf16.mxu0 0
    %2069 = vmatpush1.bf16.msra.mxu0 %v1412
    %2070 = vmatprep.subr.bf16.mxu0 0
    %2071 = vmatpush1.bf16.msra.mxu0 %v1415
    %2072 = vmatprep.subr.bf16.mxu0 0
    %2073 = vmatpush1.bf16.msra.mxu0 %v1418
    %2074 = vmatprep.mubr.bf16.mxu0 %v267
    %2075 = vmatmul.mubr.bf16.gmra.mrb[0].mxu0 %v266
    %v2076 = vpop.f32.mrb[0].mxu0
    %v2077 = vadd.f32 %v597, %v2076
    %v2078 = vpop.f32.mrb[0].mxu0
    %v2079 = vpop.f32.mrb[0].mxu0
    %v2080 = vpop.f32.mrb[0].mxu0
    %2081 = vdwg.mxu0
    %2082 = vmatprep.subr.bf16.mxu0 0
    %2083 = vmatpush1.bf16.msra.mxu0 %v1421
    %2084 = vmatprep.subr.bf16.mxu0 0
    %2085 = vmatpush1.bf16.msra.mxu0 %v1424
    %2086 = vmatprep.subr.bf16.mxu0 0
    %2087 = vmatpush1.bf16.msra.mxu0 %v1427
    %2088 = vmatprep.subr.bf16.mxu0 0
    %2089 = vmatpush1.bf16.msra.mxu0 %v1430
    %2090 = vmatprep.subr.bf16.mxu0 0
    %2091 = vmatpush1.bf16.msra.mxu0 %v1433
    %2092 = vmatprep.subr.bf16.mxu0 0
    %2093 = vmatpush1.bf16.msra.mxu0 %v1436
    %2094 = vmatprep.subr.bf16.mxu0 0
    %2095 = vmatpush1.bf16.msra.mxu0 %v1439
    %2096 = vmatprep.subr.bf16.mxu0 0
    %2097 = vmatpush1.bf16.msra.mxu0 %v1442
    %2098 = vmatprep.subr.bf16.mxu0 0
    %2099 = vmatpush1.bf16.msra.mxu0 %v1445
    %2100 = vmatprep.subr.bf16.mxu0 0
    %2101 = vmatpush1.bf16.msra.mxu0 %v1448
    %2102 = vmatprep.subr.bf16.mxu0 0
    %2103 = vmatpush1.bf16.msra.mxu0 %v1451
    %2104 = vmatprep.subr.bf16.mxu0 0
    %2105 = vmatpush1.bf16.msra.mxu0 %v1454
    %2106 = vmatprep.subr.bf16.mxu0 0
    %2107 = vmatpush1.bf16.msra.mxu0 %v1457
    %2108 = vmatprep.subr.bf16.mxu0 0
    %2109 = vmatpush1.bf16.msra.mxu0 %v1460
    %2110 = vmatprep.subr.bf16.mxu0 0
    %2111 = vmatpush1.bf16.msra.mxu0 %v1463
    %2112 = vmatprep.subr.bf16.mxu0 0
    %2113 = vmatpush1.bf16.msra.mxu0 %v1466
    %2114 = vmatprep.mubr.bf16.mxu0 %v269
    %2115 = vmatmul.mubr.bf16.gmra.mrb[0].mxu0 %v268
    %v2116 = vpop.f32.mrb[0].mxu0
    %v2117 = vadd.f32 %v2077, %v2116
    %v2118 = vpop.f32.mrb[0].mxu0
    %v2119 = vpop.f32.mrb[0].mxu0
    %v2120 = vpop.f32.mrb[0].mxu0
    %2121 = vdwg.mxu0
    %2122 = vmatprep.subr.bf16.mxu0 0
    %2123 = vmatpush1.bf16.msra.mxu0 %v1469
    %2124 = vmatprep.subr.bf16.mxu0 0
    %2125 = vmatpush1.bf16.msra.mxu0 %v1472
    %2126 = vmatprep.subr.bf16.mxu0 0
    %2127 = vmatpush1.bf16.msra.mxu0 %v1475
    %2128 = vmatprep.subr.bf16.mxu0 0
    %2129 = vmatpush1.bf16.msra.mxu0 %v1478
    %2130 = vmatprep.subr.bf16.mxu0 0
    %2131 = vmatpush1.bf16.msra.mxu0 %v1481
    %2132 = vmatprep.subr.bf16.mxu0 0
    %2133 = vmatpush1.bf16.msra.mxu0 %v1484
    %2134 = vmatprep.subr.bf16.mxu0 0
    %2135 = vmatpush1.bf16.msra.mxu0 %v1487
    %2136 = vmatprep.subr.bf16.mxu0 0
    %2137 = vmatpush1.bf16.msra.mxu0 %v1490
    %2138 = vmatprep.subr.bf16.mxu0 0
    %2139 = vmatpush1.bf16.msra.mxu0 %v1493
    %2140 = vmatprep.subr.bf16.mxu0 0
    %2141 = vmatpush1.bf16.msra.mxu0 %v1496
    %2142 = vmatprep.subr.bf16.mxu0 0
    %2143 = vmatpush1.bf16.msra.mxu0 %v1499
    %2144 = vmatprep.subr.bf16.mxu0 0
    %2145 = vmatpush1.bf16.msra.mxu0 %v1502
    %2146 = vmatprep.subr.bf16.mxu0 0
    %2147 = vmatpush1.bf16.msra.mxu0 %v1505
    %2148 = vmatprep.subr.bf16.mxu0 0
    %2149 = vmatpush1.bf16.msra.mxu0 %v1508
    %2150 = vmatprep.subr.bf16.mxu0 0
    %2151 = vmatpush1.bf16.msra.mxu0 %v1511
    %2152 = vmatprep.subr.bf16.mxu0 0
    %2153 = vmatpush1.bf16.msra.mxu0 %v1514
    %2154 = vmatprep.mubr.bf16.mxu0 %v271
    %2155 = vmatmul.mubr.bf16.gmra.mrb[0].mxu0 %v270
    %v2156 = vpop.f32.mrb[0].mxu0
    %v2157 = vadd.f32 %v2117, %v2156
    %v2158 = vpop.f32.mrb[0].mxu0
    %v2159 = vpop.f32.mrb[0].mxu0
    %v2160 = vpop.f32.mrb[0].mxu0
    %2161 = vdwg.mxu0
    %2162 = vmatprep.subr.bf16.mxu0 0
    %2163 = vmatpush1.bf16.msra.mxu0 %v1517
    %2164 = vmatprep.subr.bf16.mxu0 0
    %2165 = vmatpush1.bf16.msra.mxu0 %v1520
    %2166 = vmatprep.subr.bf16.mxu0 0
    %2167 = vmatpush1.bf16.msra.mxu0 %v1523
    %2168 = vmatprep.subr.bf16.mxu0 0
    %2169 = vmatpush1.bf16.msra.mxu0 %v1526
    %2170 = vmatprep.subr.bf16.mxu0 0
    %2171 = vmatpush1.bf16.msra.mxu0 %v1529
    %2172 = vmatprep.subr.bf16.mxu0 0
    %2173 = vmatpush1.bf16.msra.mxu0 %v1532
    %2174 = vmatprep.subr.bf16.mxu0 0
    %2175 = vmatpush1.bf16.msra.mxu0 %v1535
    %2176 = vmatprep.subr.bf16.mxu0 0
    %2177 = vmatpush1.bf16.msra.mxu0 %v1538
    %2178 = vmatprep.subr.bf16.mxu0 0
    %2179 = vmatpush1.bf16.msra.mxu0 %v1541
    %2180 = vmatprep.subr.bf16.mxu0 0
    %2181 = vmatpush1.bf16.msra.mxu0 %v1544
    %2182 = vmatprep.subr.bf16.mxu0 0
    %2183 = vmatpush1.bf16.msra.mxu0 %v1547
    %2184 = vmatprep.subr.bf16.mxu0 0
    %2185 = vmatpush1.bf16.msra.mxu0 %v1550
    %2186 = vmatprep.subr.bf16.mxu0 0
    %2187 = vmatpush1.bf16.msra.mxu0 %v1553
    %2188 = vmatprep.subr.bf16.mxu0 0
    %2189 = vmatpush1.bf16.msra.mxu0 %v1556
    %2190 = vmatprep.subr.bf16.mxu0 0
    %2191 = vmatpush1.bf16.msra.mxu0 %v1559
    %2192 = vmatprep.subr.bf16.mxu0 0
    %2193 = vmatpush1.bf16.msra.mxu0 %v1562
    %2194 = vmatprep.mubr.bf16.mxu0 %v273
    %2195 = vmatmul.mubr.bf16.gmra.mrb[0].mxu0 %v272
    %v2196 = vpop.f32.mrb[0].mxu0
    %v2197 = vadd.f32 %v2157, %v2196
    %v2198 = vpop.f32.mrb[0].mxu0
    %v2199 = vpop.f32.mrb[0].mxu0
    %v2200 = vpop.f32.mrb[0].mxu0
    %2201 = vdwg.mxu0
    %2202 = vmatprep.subr.bf16.mxu0 0
    %2203 = vmatpush1.bf16.msra.mxu0 %v1565
    %2204 = vmatprep.subr.bf16.mxu0 0
    %2205 = vmatpush1.bf16.msra.mxu0 %v1568
    %2206 = vmatprep.subr.bf16.mxu0 0
    %2207 = vmatpush1.bf16.msra.mxu0 %v1571
    %2208 = vmatprep.subr.bf16.mxu0 0
    %2209 = vmatpush1.bf16.msra.mxu0 %v1574
    %2210 = vmatprep.subr.bf16.mxu0 0
    %2211 = vmatpush1.bf16.msra.mxu0 %v1577
    %2212 = vmatprep.subr.bf16.mxu0 0
    %2213 = vmatpush1.bf16.msra.mxu0 %v1580
    %2214 = vmatprep.subr.bf16.mxu0 0
    %2215 = vmatpush1.bf16.msra.mxu0 %v1583
    %2216 = vmatprep.subr.bf16.mxu0 0
    %2217 = vmatpush1.bf16.msra.mxu0 %v1586
    %2218 = vmatprep.subr.bf16.mxu0 0
    %2219 = vmatpush1.bf16.msra.mxu0 %v1589
    %2220 = vmatprep.subr.bf16.mxu0 0
    %2221 = vmatpush1.bf16.msra.mxu0 %v1592
    %2222 = vmatprep.subr.bf16.mxu0 0
    %2223 = vmatpush1.bf16.msra.mxu0 %v1595
    %2224 = vmatprep.subr.bf16.mxu0 0
    %2225 = vmatpush1.bf16.msra.mxu0 %v1598
    %2226 = vmatprep.subr.bf16.mxu0 0
    %2227 = vmatpush1.bf16.msra.mxu0 %v1601
    %2228 = vmatprep.subr.bf16.mxu0 0
    %2229 = vmatpush1.bf16.msra.mxu0 0
    %2230 = vmatprep.subr.bf16.mxu0 0
    %2231 = vmatpush1.bf16.msra.mxu0 0
    %2232 = vmatprep.subr.bf16.mxu0 0
    %2233 = vmatpush1.bf16.msra.mxu0 0
    %2234 = vmatprep.mubr.bf16.mxu0 %v1835
    %2235 = vmatmul.mubr.bf16.gmra.mrb[0].mxu0 %v274
    %v2236 = vpop.f32.mrb[0].mxu0
    %v2237 = vadd.f32 %v2197, %v2236
    %v2238 = vpop.f32.mrb[0].mxu0
    %v2239 = vpop.f32.mrb[0].mxu0
    %v2240 = vpop.f32.mrb[0].mxu0
    %2241 = vdwg.mxu0
    %v2242 = vmax.f32 %v2036, 0.0
    %v2243 = vmax.f32 %v2038, 0.0
    %v2244 = vmax.f32 %v2237, 0.0
    %v2245 = vpack.c.bf16 %v2242, %v2242
    %v2246 = vpack.c.bf16 %v2243, %v2243
    %v2247 = vpack.c.bf16 %v2244, %v2244
    %v2248 = vld [vmem:[%s3] sm:$0xff]
    %v2249 = vld [vmem:[%s3 + $0x8] sm:$0xff]
    %v2250 = vld [vmem:[%s3 + $0x10] sm:$0xff]
    %v2251 = vld [vmem:[%s3 + $0x18] sm:$0xff]
    %v2252 = vld [vmem:[%s3 + $0x20] sm:$0xff]
    %v2253 = vld [vmem:[%s3 + $0x28] sm:$0xff]
    %v2254 = vld [vmem:[%s3 + $0x30] sm:$0xff]
    %v2255 = vld [vmem:[%s3 + $0x38] sm:$0xff]
    %v2256 = vld [vmem:[%s3 + $0x40] sm:$0xff]
    %v2257 = vld [vmem:[%s3 + $0x48] sm:$0xff]
    %v2258 = vld [vmem:[%s3 + $0x50] sm:$0xff]
    %v2259 = vld [vmem:[%s3 + $0x58] sm:$0xff]
    %v2260 = vld [vmem:[%s3 + $0x60] sm:$0xff]
    %v2261 = vld [vmem:[%s3 + $0x68] sm:$0xff]
    %v2262 = vld [vmem:[%s3 + $0x70] sm:$0xff]
    %v2263 = vld [vmem:[%s3 + $0x78] sm:$0xff]
    %v2264 = vld [vmem:[%s3 + $0x80] sm:$0xff]
    %v2265 = vld [vmem:[%s3 + $0x88] sm:$0xff]
    %v2266 = vld [vmem:[%s3 + $0x90] sm:$0xff]
    %v2267 = vld [vmem:[%s3 + $0x98] sm:$0xff]
    %v2268 = vld [vmem:[%s3 + $0xa0] sm:$0xff]
    %v2269 = vld [vmem:[%s3 + $0xa8] sm:$0xff]
    %v2270 = vld [vmem:[%s3 + $0xb0] sm:$0xff]
    %v2271 = vld [vmem:[%s3 + $0xb8] sm:$0xff]
    %v2272 = vld [vmem:[%s3 + $0xc0] sm:$0xff]
    %v2273 = vld [vmem:[%s3 + $0xc8] sm:$0xff]
    %v2274 = vld [vmem:[%s3 + $0xd0] sm:$0xff]
    %v2275 = vld [vmem:[%s3 + $0xd8] sm:$0xff]
    %v2276 = vld [vmem:[%s3 + $0xe0] sm:$0xff]
    %v2277 = vld [vmem:[%s3 + $0xe8] sm:$0xff]
    %v2278 = vld [vmem:[%s3 + $0xf0] sm:$0xff]
    %v2279 = vld [vmem:[%s3 + $0xf8] sm:$0xff]
    %v2280 = vld [vmem:[%s3 + $0x100] sm:$0xff]
    %v2281 = vld [vmem:[%s3 + $0x108] sm:$0xff]
    %v2282 = vld [vmem:[%s3 + $0x110] sm:$0xff]
    %v2283 = vld [vmem:[%s3 + $0x118] sm:$0xff]
    %v2284 = vld [vmem:[%s3 + $0x120] sm:$0xff]
    %v2285 = vld [vmem:[%s3 + $0x128] sm:$0xff]
    %v2286 = vld [vmem:[%s3 + $0x130] sm:$0xff]
    %v2287 = vld [vmem:[%s3 + $0x138] sm:$0xff]
    %v2288 = vld [vmem:[%s3 + $0x140] sm:$0xff]
    %v2289 = vld [vmem:[%s3 + $0x148] sm:$0xff]
    %v2290 = vld [vmem:[%s3 + $0x150] sm:$0xff]
    %v2291 = vld [vmem:[%s3 + $0x158] sm:$0xff]
    %v2292 = vld [vmem:[%s3 + $0x160] sm:$0xff]
    %v2293 = vld [vmem:[%s3 + $0x168] sm:$0xff]
    %v2294 = vld [vmem:[%s3 + $0x170] sm:$0xff]
    %v2295 = vld [vmem:[%s3 + $0x178] sm:$0xff]
    %v2296 = vld [vmem:[%s3 + $0x180] sm:$0xff]
    %v2297 = vld [vmem:[%s3 + $0x188] sm:$0xff]
    %v2298 = vld [vmem:[%s3 + $0x190] sm:$0xff]
    %v2299 = vld [vmem:[%s3 + $0x198] sm:$0xff]
    %v2300 = vld [vmem:[%s3 + $0x1a0] sm:$0xff]
    %v2301 = vld [vmem:[%s3 + $0x1a8] sm:$0xff]
    %v2302 = vld [vmem:[%s3 + $0x1b0] sm:$0xff]
    %v2303 = vld [vmem:[%s3 + $0x1b8] sm:$0xff]
    %v2304 = vld [vmem:[%s3 + $0x1c0] sm:$0xff]
    %v2305 = vld [vmem:[%s3 + $0x1c8] sm:$0xff]
    %v2306 = vld [vmem:[%s3 + $0x1d0] sm:$0xff]
    %v2307 = vld [vmem:[%s3 + $0x1d8] sm:$0xff]
    %v2308 = vld [vmem:[%s3 + $0x1e0] sm:$0xff]
    %v2309 = vld [vmem:[%s3 + $0x1e8] sm:$0xff]
    %v2310 = vld [vmem:[%s3 + $0x1f0] sm:$0xff]
    %v2311 = vld [vmem:[%s3 + $0x1f8] sm:$0xff]
    %v2312 = vld [vmem:[%s3 + $0x200] sm:$0xff]
    %v2313 = vld [vmem:[%s3 + $0x208] sm:$0xff]
    %v2314 = vld [vmem:[%s3 + $0x210] sm:$0xff]
    %v2315 = vld [vmem:[%s3 + $0x218] sm:$0xff]
    %v2316 = vld [vmem:[%s3 + $0x220] sm:$0xff]
    %v2317 = vld [vmem:[%s3 + $0x228] sm:$0xff]
    %v2318 = vld [vmem:[%s3 + $0x230] sm:$0xff]
    %v2319 = vld [vmem:[%s3 + $0x238] sm:$0xff]
    %v2320 = vld [vmem:[%s3 + $0x240] sm:$0xff]
    %v2321 = vld [vmem:[%s3 + $0x248] sm:$0xff]
    %v2322 = vld [vmem:[%s3 + $0x250] sm:$0xff]
    %v2323 = vld [vmem:[%s3 + $0x258] sm:$0xff]
    %v2324 = vld [vmem:[%s3 + $0x260] sm:$0xff]
    %v2325 = vld [vmem:[%s3 + $0x268] sm:$0xff]
    %v2326 = vld [vmem:[%s3 + $0x270] sm:$0xff]
    %v2327 = vld [vmem:[%s3 + $0x278] sm:$0xff]
    %v2328 = vld [vmem:[%s3 + $0x280] sm:$0xff]
    %v2329 = vld [vmem:[%s3 + $0x288] sm:$0xff]
    %v2330 = vld [vmem:[%s3 + $0x290] sm:$0xff]
    %v2331 = vld [vmem:[%s3 + $0x298] sm:$0xff]
    %v2332 = vld [vmem:[%s3 + $0x2a0] sm:$0xff]
    %v2333 = vld [vmem:[%s3 + $0x2a8] sm:$0xff]
    %v2334 = vld [vmem:[%s3 + $0x2b0] sm:$0xff]
    %v2335 = vld [vmem:[%s3 + $0x2b8] sm:$0xff]
    %v2336 = vld [vmem:[%s3 + $0x2c0] sm:$0xff]
    %v2337 = vld [vmem:[%s3 + $0x2c8] sm:$0xff]
    %v2338 = vld [vmem:[%s3 + $0x2d0] sm:$0xff]
    %v2339 = vld [vmem:[%s3 + $0x2d8] sm:$0xff]
    %v2340 = vld [vmem:[%s3 + $0x2e0] sm:$0xff]
    %v2341 = vld [vmem:[%s3 + $0x2e8] sm:$0xff]
    %v2342 = vld [vmem:[%s3 + $0x2f0] sm:$0xff]
    %v2343 = vld [vmem:[%s3 + $0x2f8] sm:$0xff]
    %v2344 = vld [vmem:[%s3 + $0x300] sm:$0xff]
    %v2345 = vld [vmem:[%s3 + $0x308] sm:$0xff]
    %v2346 = vld [vmem:[%s3 + $0x310] sm:$0xff]
    %v2347 = vld [vmem:[%s3 + $0x318] sm:$0xff]
    %v2348 = vld [vmem:[%s3 + $0x320] sm:$0xff]
    %v2349 = vld [vmem:[%s3 + $0x328] sm:$0xff]
    %v2350 = vld [vmem:[%s3 + $0x330] sm:$0xff]
    %v2351 = vld [vmem:[%s3 + $0x338] sm:$0xff]
    %v2352 = vld [vmem:[%s3 + $0x340] sm:$0xff]
    %v2353 = vld [vmem:[%s3 + $0x348] sm:$0xff]
    %v2354 = vld [vmem:[%s3 + $0x350] sm:$0xff]
    %v2355 = vld [vmem:[%s3 + $0x358] sm:$0xff]
    %v2356 = vld [vmem:[%s3 + $0x360] sm:$0xff]
    %v2357 = vld [vmem:[%s3 + $0x368] sm:$0xff]
    %v2358 = vld [vmem:[%s3 + $0x370] sm:$0xff]
    %v2359 = vld [vmem:[%s3 + $0x378] sm:$0xff]
    %v2360 = vld [vmem:[%s3 + $0x380] sm:$0xff]
    %v2361 = vld [vmem:[%s3 + $0x388] sm:$0xff]
    %v2362 = vld [vmem:[%s3 + $0x390] sm:$0xff]
    %v2363 = vld [vmem:[%s3 + $0x398] sm:$0xff]
    %v2364 = vld [vmem:[%s3 + $0x3a0] sm:$0xff]
    %v2365 = vld [vmem:[%s3 + $0x3a8] sm:$0xff]
    %v2366 = vld [vmem:[%s3 + $0x3b0] sm:$0xff]
    %v2367 = vld [vmem:[%s3 + $0x3b8] sm:$0xff]
    %v2368 = vld [vmem:[%s3 + $0x3c0] sm:$0xff]
    %v2369 = vld [vmem:[%s3 + $0x3c8] sm:$0xff]
    %v2370 = vld [vmem:[%s3 + $0x3d0] sm:$0xff]
    %v2371 = vld [vmem:[%s3 + $0x3d8] sm:$0xff]
    %v2372 = vld [vmem:[%s3 + $0x3e0] sm:$0xff]
    %v2373 = vld [vmem:[%s3 + $0x3e8] sm:$0xff]
    %v2374 = vld [vmem:[%s3 + $0x3f0] sm:$0xff]
    %v2375 = vld [vmem:[%s3 + $0x3f8] sm:$0xff]
    %v2376 = vld [vmem:[%s3 + $0x400] sm:$0xff]
    %v2377 = vld [vmem:[%s3 + $0x408] sm:$0xff]
    %v2378 = vld [vmem:[%s3 + $0x410] sm:$0xff]
    %v2379 = vld [vmem:[%s3 + $0x418] sm:$0xff]
    %v2380 = vld [vmem:[%s3 + $0x420] sm:$0xff]
    %v2381 = vld [vmem:[%s3 + $0x428] sm:$0xff]
    %v2382 = vld [vmem:[%s3 + $0x430] sm:$0xff]
    %v2383 = vld [vmem:[%s3 + $0x438] sm:$0xff]
    %v2384 = vld [vmem:[%s3 + $0x440] sm:$0xff]
    %v2385 = vld [vmem:[%s3 + $0x448] sm:$0xff]
    %v2386 = vld [vmem:[%s3 + $0x450] sm:$0xff]
    %v2387 = vld [vmem:[%s3 + $0x458] sm:$0xff]
    %v2388 = vld [vmem:[%s3 + $0x460] sm:$0xff]
    %v2389 = vld [vmem:[%s3 + $0x468] sm:$0xff]
    %v2390 = vld [vmem:[%s3 + $0x470] sm:$0xff]
    %v2391 = vld [vmem:[%s3 + $0x478] sm:$0xff]
    %v2392 = vld [vmem:[%s3 + $0x480] sm:$0xff]
    %v2393 = vld [vmem:[%s3 + $0x488] sm:$0xff]
    %v2394 = vld [vmem:[%s3 + $0x490] sm:$0xff]
    %v2395 = vld [vmem:[%s3 + $0x498] sm:$0xff]
    %v2396 = vld [vmem:[%s3 + $0x4a0] sm:$0xff]
    %v2397 = vld [vmem:[%s3 + $0x4a8] sm:$0xff]
    %v2398 = vld [vmem:[%s3 + $0x4b0] sm:$0xff]
    %v2399 = vld [vmem:[%s3 + $0x4b8] sm:$0xff]
    %v2400 = vld [vmem:[%s3 + $0x4c0] sm:$0xff]
    %v2401 = vld [vmem:[%s3 + $0x4c8] sm:$0xff]
    %v2402 = vld [vmem:[%s3 + $0x4d0] sm:$0xff]
    %v2403 = vld [vmem:[%s3 + $0x4d8] sm:$0xff]
    %v2404 = vld [vmem:[%s3 + $0x4e0] sm:$0xff]
    %v2405 = vld [vmem:[%s3 + $0x4e8] sm:$0xff]
    %v2406 = vld [vmem:[%s3 + $0x4f0] sm:$0xff]
    %v2407 = vld [vmem:[%s3 + $0x4f8] sm:$0xff]
    %v2408 = vld [vmem:[%s3 + $0x500] sm:$0xff]
    %v2409 = vld [vmem:[%s3 + $0x508] sm:$0xff]
    %v2410 = vld [vmem:[%s3 + $0x510] sm:$0xff]
    %v2411 = vld [vmem:[%s3 + $0x518] sm:$0xff]
    %v2412 = vld [vmem:[%s3 + $0x520] sm:$0xff]
    %v2413 = vld [vmem:[%s3 + $0x528] sm:$0xff]
    %v2414 = vld [vmem:[%s3 + $0x530] sm:$0xff]
    %v2415 = vld [vmem:[%s3 + $0x538] sm:$0xff]
    %v2416 = vld [vmem:[%s3 + $0x540] sm:$0xff]
    %v2417 = vld [vmem:[%s3 + $0x548] sm:$0xff]
    %v2418 = vld [vmem:[%s3 + $0x550] sm:$0xff]
    %v2419 = vld [vmem:[%s3 + $0x558] sm:$0xff]
    %v2420 = vld [vmem:[%s3 + $0x560] sm:$0xff]
    %v2421 = vld [vmem:[%s3 + $0x568] sm:$0xff]
    %v2422 = vld [vmem:[%s3 + $0x570] sm:$0xff]
    %v2423 = vld [vmem:[%s3 + $0x578] sm:$0xff]
    %v2424 = vld [vmem:[%s3 + $0x580] sm:$0xff]
    %v2425 = vld [vmem:[%s3 + $0x588] sm:$0xff]
    %v2426 = vld [vmem:[%s3 + $0x590] sm:$0xff]
    %v2427 = vld [vmem:[%s3 + $0x598] sm:$0xff]
    %v2428 = vld [vmem:[%s3 + $0x5a0] sm:$0xff]
    %v2429 = vld [vmem:[%s3 + $0x5a8] sm:$0xff]
    %v2430 = vld [vmem:[%s3 + $0x5b0] sm:$0xff]
    %v2431 = vld [vmem:[%s3 + $0x5b8] sm:$0xff]
    %v2432 = vld [vmem:[%s3 + $0x5c0] sm:$0xff]
    %v2433 = vld [vmem:[%s3 + $0x5c8] sm:$0xff]
    %v2434 = vld [vmem:[%s3 + $0x5d0] sm:$0xff]
    %v2435 = vld [vmem:[%s3 + $0x5d8] sm:$0xff]
    %v2436 = vld [vmem:[%s3 + $0x5e0] sm:$0xff]
    %v2437 = vld [vmem:[%s3 + $0x5e8] sm:$0xff]
    %v2438 = vld [vmem:[%s3 + $0x5f0] sm:$0x33]
    %v2439 = vld [vmem:[%s3 + $0x5f8] sm:$0x33]
    %v2440 = vld [vmem:[%s3 + $0x600] sm:$0x33]
    %v2441 = vld [vmem:[%s3 + $0x608] sm:$0x33]
    %v2442 = vld [vmem:[%s3 + $0x610] sm:$0x33]
    %v2443 = vld [vmem:[%s4] sm:$0xff]
    %v2444 = vld [vmem:[%s4 + $0x8] sm:$0x3]
    %v2447 = vlaneseq
    %v2448 = vshrl.u32 %v2447, 7
    %v2449 = vsub.s32 0, %v2448
    %v2450 = vrot.slane %v2443, %v2449
    %v2451 = vlaneseq
    %v2452 = vshrl.u32 %v2451, 7
    %v2453 = vsub.s32 1, %v2452
    %v2454 = vrot.slane %v2443, %v2453
    %v2455 = vlaneseq
    %v2456 = vshrl.u32 %v2455, 7
    %v2457 = vsub.s32 2, %v2456
    %v2458 = vrot.slane %v2443, %v2457
    %v2459 = vlaneseq
    %v2460 = vshrl.u32 %v2459, 7
    %v2461 = vsub.s32 3, %v2460
    %v2462 = vrot.slane %v2443, %v2461
    %v2463 = vlaneseq
    %v2464 = vshrl.u32 %v2463, 7
    %v2465 = vsub.s32 4, %v2464
    %v2466 = vrot.slane %v2443, %v2465
    %v2467 = vlaneseq
    %v2468 = vshrl.u32 %v2467, 7
    %v2469 = vsub.s32 5, %v2468
    %v2470 = vrot.slane %v2443, %v2469
    %v2471 = vlaneseq
    %v2472 = vshrl.u32 %v2471, 7
    %v2473 = vsub.s32 6, %v2472
    %v2474 = vrot.slane %v2443, %v2473
    %v2475 = vlaneseq
    %v2476 = vshrl.u32 %v2475, 7
    %v2477 = vsub.s32 7, %v2476
    %v2478 = vrot.slane %v2443, %v2477
    %v2479 = vlaneseq
    %v2480 = vshrl.u32 %v2479, 7
    %v2481 = vsub.s32 0, %v2480
    %v2482 = vrot.slane %v2444, %v2481
    %v2483 = vlaneseq
    %v2484 = vshrl.u32 %v2483, 7
    %v2485 = vsub.s32 1, %v2484
    %v2486 = vrot.slane %v2444, %v2485
    %v2692 = vunpack.c.l.b16 %v2248
    %v2693 = vunpack.c.h.b16 %v2248
    %v2694 = vunpack.c.l.b16 %v2249
    %v2695 = vunpack.c.h.b16 %v2249
    %v2696 = vunpack.c.l.b16 %v2250
    %v2697 = vunpack.c.h.b16 %v2250
    %v2698 = vunpack.c.l.b16 %v2251
    %v2699 = vunpack.c.h.b16 %v2251
    %v2700 = vunpack.c.l.b16 %v2252
    %v2701 = vunpack.c.h.b16 %v2252
    %v2702 = vunpack.c.l.b16 %v2253
    %v2703 = vunpack.c.h.b16 %v2253
    %v2704 = vunpack.c.l.b16 %v2254
    %v2705 = vunpack.c.h.b16 %v2254
    %v2706 = vunpack.c.l.b16 %v2255
    %v2707 = vunpack.c.h.b16 %v2255
    %v2708 = vunpack.c.l.b16 %v2256
    %v2709 = vunpack.c.h.b16 %v2256
    %v2710 = vunpack.c.l.b16 %v2257
    %v2711 = vunpack.c.h.b16 %v2257
    %v2712 = vunpack.c.l.b16 %v2258
    %v2713 = vunpack.c.h.b16 %v2258
    %v2714 = vunpack.c.l.b16 %v2259
    %v2715 = vunpack.c.h.b16 %v2259
    %v2716 = vunpack.c.l.b16 %v2260
    %v2717 = vunpack.c.h.b16 %v2260
    %v2718 = vunpack.c.l.b16 %v2261
    %v2719 = vunpack.c.h.b16 %v2261
    %v2720 = vunpack.c.l.b16 %v2262
    %v2721 = vunpack.c.h.b16 %v2262
    %v2722 = vunpack.c.l.b16 %v2263
    %v2723 = vunpack.c.h.b16 %v2263
    %v2724 = vunpack.c.l.b16 %v2264
    %v2725 = vunpack.c.h.b16 %v2264
    %v2726 = vunpack.c.l.b16 %v2265
    %v2727 = vunpack.c.h.b16 %v2265
    %v2728 = vunpack.c.l.b16 %v2266
    %v2729 = vunpack.c.h.b16 %v2266
    %v2730 = vunpack.c.l.b16 %v2267
    %v2731 = vunpack.c.h.b16 %v2267
    %v2732 = vunpack.c.l.b16 %v2268
    %v2733 = vunpack.c.h.b16 %v2268
    %v2734 = vunpack.c.l.b16 %v2269
    %v2735 = vunpack.c.h.b16 %v2269
    %v2736 = vunpack.c.l.b16 %v2270
    %v2737 = vunpack.c.h.b16 %v2270
    %v2738 = vunpack.c.l.b16 %v2271
    %v2739 = vunpack.c.h.b16 %v2271
    %v2740 = vunpack.c.l.b16 %v2272
    %v2741 = vunpack.c.h.b16 %v2272
    %v2742 = vunpack.c.l.b16 %v2273
    %v2743 = vunpack.c.h.b16 %v2273
    %v2744 = vunpack.c.l.b16 %v2274
    %v2745 = vunpack.c.h.b16 %v2274
    %v2746 = vunpack.c.l.b16 %v2275
    %v2747 = vunpack.c.h.b16 %v2275
    %v2748 = vunpack.c.l.b16 %v2276
    %v2749 = vunpack.c.h.b16 %v2276
    %v2750 = vunpack.c.l.b16 %v2277
    %v2751 = vunpack.c.h.b16 %v2277
    %v2752 = vunpack.c.l.b16 %v2278
    %v2753 = vunpack.c.h.b16 %v2278
    %v2754 = vunpack.c.l.b16 %v2279
    %v2755 = vunpack.c.h.b16 %v2279
    %v2756 = vunpack.c.l.b16 %v2280
    %v2757 = vunpack.c.h.b16 %v2280
    %v2758 = vunpack.c.l.b16 %v2281
    %v2759 = vunpack.c.h.b16 %v2281
    %v2760 = vunpack.c.l.b16 %v2282
    %v2761 = vunpack.c.h.b16 %v2282
    %v2762 = vunpack.c.l.b16 %v2283
    %v2763 = vunpack.c.h.b16 %v2283
    %v2764 = vunpack.c.l.b16 %v2284
    %v2765 = vunpack.c.h.b16 %v2284
    %v2766 = vunpack.c.l.b16 %v2285
    %v2767 = vunpack.c.h.b16 %v2285
    %v2768 = vunpack.c.l.b16 %v2286
    %v2769 = vunpack.c.h.b16 %v2286
    %v2770 = vunpack.c.l.b16 %v2287
    %v2771 = vunpack.c.h.b16 %v2287
    %v2772 = vunpack.c.l.b16 %v2288
    %v2773 = vunpack.c.h.b16 %v2288
    %v2774 = vunpack.c.l.b16 %v2289
    %v2775 = vunpack.c.h.b16 %v2289
    %v2776 = vunpack.c.l.b16 %v2290
    %v2777 = vunpack.c.h.b16 %v2290
    %v2778 = vunpack.c.l.b16 %v2291
    %v2779 = vunpack.c.h.b16 %v2291
    %v2780 = vunpack.c.l.b16 %v2292
    %v2781 = vunpack.c.h.b16 %v2292
    %v2782 = vunpack.c.l.b16 %v2293
    %v2783 = vunpack.c.h.b16 %v2293
    %v2784 = vunpack.c.l.b16 %v2294
    %v2785 = vunpack.c.h.b16 %v2294
    %v2786 = vunpack.c.l.b16 %v2295
    %v2787 = vunpack.c.h.b16 %v2295
    %v2788 = vunpack.c.l.b16 %v2296
    %v2789 = vunpack.c.h.b16 %v2296
    %v2790 = vunpack.c.l.b16 %v2297
    %v2791 = vunpack.c.h.b16 %v2297
    %v2792 = vunpack.c.l.b16 %v2298
    %v2793 = vunpack.c.h.b16 %v2298
    %v2794 = vunpack.c.l.b16 %v2299
    %v2795 = vunpack.c.h.b16 %v2299
    %v2796 = vunpack.c.l.b16 %v2300
    %v2797 = vunpack.c.h.b16 %v2300
    %v2798 = vunpack.c.l.b16 %v2301
    %v2799 = vunpack.c.h.b16 %v2301
    %v2800 = vunpack.c.l.b16 %v2302
    %v2801 = vunpack.c.h.b16 %v2302
    %v2802 = vunpack.c.l.b16 %v2303
    %v2803 = vunpack.c.h.b16 %v2303
    %v2804 = vunpack.c.l.b16 %v2304
    %v2805 = vunpack.c.h.b16 %v2304
    %v2806 = vunpack.c.l.b16 %v2305
    %v2807 = vunpack.c.h.b16 %v2305
    %v2808 = vunpack.c.l.b16 %v2306
    %v2809 = vunpack.c.h.b16 %v2306
    %v2810 = vunpack.c.l.b16 %v2307
    %v2811 = vunpack.c.h.b16 %v2307
    %v2812 = vunpack.c.l.b16 %v2308
    %v2813 = vunpack.c.h.b16 %v2308
    %v2814 = vunpack.c.l.b16 %v2309
    %v2815 = vunpack.c.h.b16 %v2309
    %v2816 = vunpack.c.l.b16 %v2310
    %v2817 = vunpack.c.h.b16 %v2310
    %v2818 = vunpack.c.l.b16 %v2311
    %v2819 = vunpack.c.h.b16 %v2311
    %v2820 = vunpack.c.l.b16 %v2312
    %v2821 = vunpack.c.h.b16 %v2312
    %v2822 = vunpack.c.l.b16 %v2313
    %v2823 = vunpack.c.h.b16 %v2313
    %v2824 = vunpack.c.l.b16 %v2314
    %v2825 = vunpack.c.h.b16 %v2314
    %v2826 = vunpack.c.l.b16 %v2315
    %v2827 = vunpack.c.h.b16 %v2315
    %v2828 = vunpack.c.l.b16 %v2316
    %v2829 = vunpack.c.h.b16 %v2316
    %v2830 = vunpack.c.l.b16 %v2317
    %v2831 = vunpack.c.h.b16 %v2317
    %v2832 = vunpack.c.l.b16 %v2318
    %v2833 = vunpack.c.h.b16 %v2318
    %v2834 = vunpack.c.l.b16 %v2319
    %v2835 = vunpack.c.h.b16 %v2319
    %v2836 = vunpack.c.l.b16 %v2320
    %v2837 = vunpack.c.h.b16 %v2320
    %v2838 = vunpack.c.l.b16 %v2321
    %v2839 = vunpack.c.h.b16 %v2321
    %v2840 = vunpack.c.l.b16 %v2322
    %v2841 = vunpack.c.h.b16 %v2322
    %v2842 = vunpack.c.l.b16 %v2323
    %v2843 = vunpack.c.h.b16 %v2323
    %v2844 = vunpack.c.l.b16 %v2324
    %v2845 = vunpack.c.h.b16 %v2324
    %v2846 = vunpack.c.l.b16 %v2325
    %v2847 = vunpack.c.h.b16 %v2325
    %v2848 = vunpack.c.l.b16 %v2326
    %v2849 = vunpack.c.h.b16 %v2326
    %v2850 = vunpack.c.l.b16 %v2327
    %v2851 = vunpack.c.h.b16 %v2327
    %v2852 = vunpack.c.l.b16 %v2328
    %v2853 = vunpack.c.h.b16 %v2328
    %v2854 = vunpack.c.l.b16 %v2329
    %v2855 = vunpack.c.h.b16 %v2329
    %v2856 = vunpack.c.l.b16 %v2330
    %v2857 = vunpack.c.h.b16 %v2330
    %v2858 = vunpack.c.l.b16 %v2331
    %v2859 = vunpack.c.h.b16 %v2331
    %v2860 = vunpack.c.l.b16 %v2332
    %v2861 = vunpack.c.h.b16 %v2332
    %v2862 = vunpack.c.l.b16 %v2333
    %v2863 = vunpack.c.h.b16 %v2333
    %v2864 = vunpack.c.l.b16 %v2334
    %v2865 = vunpack.c.h.b16 %v2334
    %v2866 = vunpack.c.l.b16 %v2335
    %v2867 = vunpack.c.h.b16 %v2335
    %v2868 = vunpack.c.l.b16 %v2336
    %v2869 = vunpack.c.h.b16 %v2336
    %v2870 = vunpack.c.l.b16 %v2337
    %v2871 = vunpack.c.h.b16 %v2337
    %v2872 = vunpack.c.l.b16 %v2338
    %v2873 = vunpack.c.h.b16 %v2338
    %v2874 = vunpack.c.l.b16 %v2339
    %v2875 = vunpack.c.h.b16 %v2339
    %v2876 = vunpack.c.l.b16 %v2340
    %v2877 = vunpack.c.h.b16 %v2340
    %v2878 = vunpack.c.l.b16 %v2341
    %v2879 = vunpack.c.h.b16 %v2341
    %v2880 = vunpack.c.l.b16 %v2342
    %v2881 = vunpack.c.h.b16 %v2342
    %v2882 = vunpack.c.l.b16 %v2343
    %v2883 = vunpack.c.h.b16 %v2343
    %v2884 = vunpack.c.l.b16 %v2344
    %v2885 = vunpack.c.h.b16 %v2344
    %v2886 = vunpack.c.l.b16 %v2345
    %v2887 = vunpack.c.h.b16 %v2345
    %v2888 = vunpack.c.l.b16 %v2346
    %v2889 = vunpack.c.h.b16 %v2346
    %v2890 = vunpack.c.l.b16 %v2347
    %v2891 = vunpack.c.h.b16 %v2347
    %v2892 = vunpack.c.l.b16 %v2348
    %v2893 = vunpack.c.h.b16 %v2348
    %v2894 = vunpack.c.l.b16 %v2349
    %v2895 = vunpack.c.h.b16 %v2349
    %v2896 = vunpack.c.l.b16 %v2350
    %v2897 = vunpack.c.h.b16 %v2350
    %v2898 = vunpack.c.l.b16 %v2351
    %v2899 = vunpack.c.h.b16 %v2351
    %v2900 = vunpack.c.l.b16 %v2352
    %v2901 = vunpack.c.h.b16 %v2352
    %v2902 = vunpack.c.l.b16 %v2353
    %v2903 = vunpack.c.h.b16 %v2353
    %v2904 = vunpack.c.l.b16 %v2354
    %v2905 = vunpack.c.h.b16 %v2354
    %v2906 = vunpack.c.l.b16 %v2355
    %v2907 = vunpack.c.h.b16 %v2355
    %v2908 = vunpack.c.l.b16 %v2356
    %v2909 = vunpack.c.h.b16 %v2356
    %v2910 = vunpack.c.l.b16 %v2357
    %v2911 = vunpack.c.h.b16 %v2357
    %v2912 = vunpack.c.l.b16 %v2358
    %v2913 = vunpack.c.h.b16 %v2358
    %v2914 = vunpack.c.l.b16 %v2359
    %v2915 = vunpack.c.h.b16 %v2359
    %v2916 = vunpack.c.l.b16 %v2360
    %v2917 = vunpack.c.h.b16 %v2360
    %v2918 = vunpack.c.l.b16 %v2361
    %v2919 = vunpack.c.h.b16 %v2361
    %v2920 = vunpack.c.l.b16 %v2362
    %v2921 = vunpack.c.h.b16 %v2362
    %v2922 = vunpack.c.l.b16 %v2363
    %v2923 = vunpack.c.h.b16 %v2363
    %v2924 = vunpack.c.l.b16 %v2364
    %v2925 = vunpack.c.h.b16 %v2364
    %v2926 = vunpack.c.l.b16 %v2365
    %v2927 = vunpack.c.h.b16 %v2365
    %v2928 = vunpack.c.l.b16 %v2366
    %v2929 = vunpack.c.h.b16 %v2366
    %v2930 = vunpack.c.l.b16 %v2367
    %v2931 = vunpack.c.h.b16 %v2367
    %v2932 = vunpack.c.l.b16 %v2368
    %v2933 = vunpack.c.h.b16 %v2368
    %v2934 = vunpack.c.l.b16 %v2369
    %v2935 = vunpack.c.h.b16 %v2369
    %v2936 = vunpack.c.l.b16 %v2370
    %v2937 = vunpack.c.h.b16 %v2370
    %v2938 = vunpack.c.l.b16 %v2371
    %v2939 = vunpack.c.h.b16 %v2371
    %v2940 = vunpack.c.l.b16 %v2372
    %v2941 = vunpack.c.h.b16 %v2372
    %v2942 = vunpack.c.l.b16 %v2373
    %v2943 = vunpack.c.h.b16 %v2373
    %v2944 = vunpack.c.l.b16 %v2374
    %v2945 = vunpack.c.h.b16 %v2374
    %v2946 = vunpack.c.l.b16 %v2375
    %v2947 = vunpack.c.h.b16 %v2375
    %v2948 = vunpack.c.l.b16 %v2376
    %v2949 = vunpack.c.h.b16 %v2376
    %v2950 = vunpack.c.l.b16 %v2377
    %v2951 = vunpack.c.h.b16 %v2377
    %v2952 = vunpack.c.l.b16 %v2378
    %v2953 = vunpack.c.h.b16 %v2378
    %v2954 = vunpack.c.l.b16 %v2379
    %v2955 = vunpack.c.h.b16 %v2379
    %v2956 = vunpack.c.l.b16 %v2380
    %v2957 = vunpack.c.h.b16 %v2380
    %v2958 = vunpack.c.l.b16 %v2381
    %v2959 = vunpack.c.h.b16 %v2381
    %v2960 = vunpack.c.l.b16 %v2382
    %v2961 = vunpack.c.h.b16 %v2382
    %v2962 = vunpack.c.l.b16 %v2383
    %v2963 = vunpack.c.h.b16 %v2383
    %v2964 = vunpack.c.l.b16 %v2384
    %v2965 = vunpack.c.h.b16 %v2384
    %v2966 = vunpack.c.l.b16 %v2385
    %v2967 = vunpack.c.h.b16 %v2385
    %v2968 = vunpack.c.l.b16 %v2386
    %v2969 = vunpack.c.h.b16 %v2386
    %v2970 = vunpack.c.l.b16 %v2387
    %v2971 = vunpack.c.h.b16 %v2387
    %v2972 = vunpack.c.l.b16 %v2388
    %v2973 = vunpack.c.h.b16 %v2388
    %v2974 = vunpack.c.l.b16 %v2389
    %v2975 = vunpack.c.h.b16 %v2389
    %v2976 = vunpack.c.l.b16 %v2390
    %v2977 = vunpack.c.h.b16 %v2390
    %v2978 = vunpack.c.l.b16 %v2391
    %v2979 = vunpack.c.h.b16 %v2391
    %v2980 = vunpack.c.l.b16 %v2392
    %v2981 = vunpack.c.h.b16 %v2392
    %v2982 = vunpack.c.l.b16 %v2393
    %v2983 = vunpack.c.h.b16 %v2393
    %v2984 = vunpack.c.l.b16 %v2394
    %v2985 = vunpack.c.h.b16 %v2394
    %v2986 = vunpack.c.l.b16 %v2395
    %v2987 = vunpack.c.h.b16 %v2395
    %v2988 = vunpack.c.l.b16 %v2396
    %v2989 = vunpack.c.h.b16 %v2396
    %v2990 = vunpack.c.l.b16 %v2397
    %v2991 = vunpack.c.h.b16 %v2397
    %v2992 = vunpack.c.l.b16 %v2398
    %v2993 = vunpack.c.h.b16 %v2398
    %v2994 = vunpack.c.l.b16 %v2399
    %v2995 = vunpack.c.h.b16 %v2399
    %v2996 = vunpack.c.l.b16 %v2400
    %v2997 = vunpack.c.h.b16 %v2400
    %v2998 = vunpack.c.l.b16 %v2401
    %v2999 = vunpack.c.h.b16 %v2401
    %v3000 = vunpack.c.l.b16 %v2402
    %v3001 = vunpack.c.h.b16 %v2402
    %v3002 = vunpack.c.l.b16 %v2403
    %v3003 = vunpack.c.h.b16 %v2403
    %v3004 = vunpack.c.l.b16 %v2404
    %v3005 = vunpack.c.h.b16 %v2404
    %v3006 = vunpack.c.l.b16 %v2405
    %v3007 = vunpack.c.h.b16 %v2405
    %v3008 = vunpack.c.l.b16 %v2406
    %v3009 = vunpack.c.h.b16 %v2406
    %v3010 = vunpack.c.l.b16 %v2407
    %v3011 = vunpack.c.h.b16 %v2407
    %v3012 = vunpack.c.l.b16 %v2408
    %v3013 = vunpack.c.h.b16 %v2408
    %v3014 = vunpack.c.l.b16 %v2409
    %v3015 = vunpack.c.h.b16 %v2409
    %v3016 = vunpack.c.l.b16 %v2410
    %v3017 = vunpack.c.h.b16 %v2410
    %v3018 = vunpack.c.l.b16 %v2411
    %v3019 = vunpack.c.h.b16 %v2411
    %v3020 = vunpack.c.l.b16 %v2412
    %v3021 = vunpack.c.h.b16 %v2412
    %v3022 = vunpack.c.l.b16 %v2413
    %v3023 = vunpack.c.h.b16 %v2413
    %v3024 = vunpack.c.l.b16 %v2414
    %v3025 = vunpack.c.h.b16 %v2414
    %v3026 = vunpack.c.l.b16 %v2415
    %v3027 = vunpack.c.h.b16 %v2415
    %v3028 = vunpack.c.l.b16 %v2416
    %v3029 = vunpack.c.h.b16 %v2416
    %v3030 = vunpack.c.l.b16 %v2417
    %v3031 = vunpack.c.h.b16 %v2417
    %v3032 = vunpack.c.l.b16 %v2418
    %v3033 = vunpack.c.h.b16 %v2418
    %v3034 = vunpack.c.l.b16 %v2419
    %v3035 = vunpack.c.h.b16 %v2419
    %v3036 = vunpack.c.l.b16 %v2420
    %v3037 = vunpack.c.h.b16 %v2420
    %v3038 = vunpack.c.l.b16 %v2421
    %v3039 = vunpack.c.h.b16 %v2421
    %v3040 = vunpack.c.l.b16 %v2422
    %v3041 = vunpack.c.h.b16 %v2422
    %v3042 = vunpack.c.l.b16 %v2423
    %v3043 = vunpack.c.h.b16 %v2423
    %v3044 = vunpack.c.l.b16 %v2424
    %v3045 = vunpack.c.h.b16 %v2424
    %v3046 = vunpack.c.l.b16 %v2425
    %v3047 = vunpack.c.h.b16 %v2425
    %v3048 = vunpack.c.l.b16 %v2426
    %v3049 = vunpack.c.h.b16 %v2426
    %v3050 = vunpack.c.l.b16 %v2427
    %v3051 = vunpack.c.h.b16 %v2427
    %v3052 = vunpack.c.l.b16 %v2428
    %v3053 = vunpack.c.h.b16 %v2428
    %v3054 = vunpack.c.l.b16 %v2429
    %v3055 = vunpack.c.h.b16 %v2429
    %v3056 = vunpack.c.l.b16 %v2430
    %v3057 = vunpack.c.h.b16 %v2430
    %v3058 = vunpack.c.l.b16 %v2431
    %v3059 = vunpack.c.h.b16 %v2431
    %v3060 = vunpack.c.l.b16 %v2432
    %v3061 = vunpack.c.h.b16 %v2432
    %v3062 = vunpack.c.l.b16 %v2433
    %v3063 = vunpack.c.h.b16 %v2433
    %v3064 = vunpack.c.l.b16 %v2434
    %v3065 = vunpack.c.h.b16 %v2434
    %v3066 = vunpack.c.l.b16 %v2435
    %v3067 = vunpack.c.h.b16 %v2435
    %v3068 = vunpack.c.l.b16 %v2436
    %v3069 = vunpack.c.h.b16 %v2436
    %v3070 = vunpack.c.l.b16 %v2437
    %v3071 = vunpack.c.h.b16 %v2437
    %v3072 = vunpack.c.l.b16 %v2438
    %v3073 = vunpack.c.h.b16 %v2438
    %v3074 = vunpack.c.l.b16 %v2439
    %v3075 = vunpack.c.h.b16 %v2439
    %v3076 = vunpack.c.l.b16 %v2440
    %v3077 = vunpack.c.h.b16 %v2440
    %v3078 = vunpack.c.l.b16 %v2441
    %v3079 = vunpack.c.h.b16 %v2441
    %v3080 = vunpack.c.l.b16 %v2442
    %v3081 = vunpack.c.h.b16 %v2442
    %v3082 = vpack.c.b16 %v2702, %v2692
    %v3083 = vpack.c.b16 %v2703, %v2693
    %v3084 = vpack.c.b16 %v2704, %v2694
    %v3085 = vpack.c.b16 %v2705, %v2695
    %v3086 = vpack.c.b16 %v2706, %v2696
    %v3087 = vpack.c.b16 %v2707, %v2697
    %v3088 = vpack.c.b16 %v2708, %v2698
    %v3089 = vpack.c.b16 %v2709, %v2699
    %v3090 = vpack.c.b16 %v2710, %v2700
    %v3091 = vpack.c.b16 %v2711, %v2701
    %v3092 = vpack.c.b16 %v2722, %v2712
    %v3093 = vpack.c.b16 %v2723, %v2713
    %v3094 = vpack.c.b16 %v2724, %v2714
    %v3095 = vpack.c.b16 %v2725, %v2715
    %v3096 = vpack.c.b16 %v2726, %v2716
    %v3097 = vpack.c.b16 %v2727, %v2717
    %v3098 = vpack.c.b16 %v2728, %v2718
    %v3099 = vpack.c.b16 %v2729, %v2719
    %v3100 = vpack.c.b16 %v2730, %v2720
    %v3101 = vpack.c.b16 %v2731, %v2721
    %v3102 = vpack.c.b16 %v2742, %v2732
    %v3103 = vpack.c.b16 %v2743, %v2733
    %v3104 = vpack.c.b16 %v2744, %v2734
    %v3105 = vpack.c.b16 %v2745, %v2735
    %v3106 = vpack.c.b16 %v2746, %v2736
    %v3107 = vpack.c.b16 %v2747, %v2737
    %v3108 = vpack.c.b16 %v2748, %v2738
    %v3109 = vpack.c.b16 %v2749, %v2739
    %v3110 = vpack.c.b16 %v2750, %v2740
    %v3111 = vpack.c.b16 %v2751, %v2741
    %v3112 = vpack.c.b16 %v2762, %v2752
    %v3113 = vpack.c.b16 %v2763, %v2753
    %v3114 = vpack.c.b16 %v2764, %v2754
    %v3115 = vpack.c.b16 %v2765, %v2755
    %v3116 = vpack.c.b16 %v2766, %v2756
    %v3117 = vpack.c.b16 %v2767, %v2757
    %v3118 = vpack.c.b16 %v2768, %v2758
    %v3119 = vpack.c.b16 %v2769, %v2759
    %v3120 = vpack.c.b16 %v2770, %v2760
    %v3121 = vpack.c.b16 %v2771, %v2761
    %v3122 = vpack.c.b16 %v2782, %v2772
    %v3123 = vpack.c.b16 %v2783, %v2773
    %v3124 = vpack.c.b16 %v2784, %v2774
    %v3125 = vpack.c.b16 %v2785, %v2775
    %v3126 = vpack.c.b16 %v2786, %v2776
    %v3127 = vpack.c.b16 %v2787, %v2777
    %v3128 = vpack.c.b16 %v2788, %v2778
    %v3129 = vpack.c.b16 %v2789, %v2779
    %v3130 = vpack.c.b16 %v2790, %v2780
    %v3131 = vpack.c.b16 %v2791, %v2781
    %v3132 = vpack.c.b16 %v2802, %v2792
    %v3133 = vpack.c.b16 %v2803, %v2793
    %v3134 = vpack.c.b16 %v2804, %v2794
    %v3135 = vpack.c.b16 %v2805, %v2795
    %v3136 = vpack.c.b16 %v2806, %v2796
    %v3137 = vpack.c.b16 %v2807, %v2797
    %v3138 = vpack.c.b16 %v2808, %v2798
    %v3139 = vpack.c.b16 %v2809, %v2799
    %v3140 = vpack.c.b16 %v2810, %v2800
    %v3141 = vpack.c.b16 %v2811, %v2801
    %v3142 = vpack.c.b16 %v2822, %v2812
    %v3143 = vpack.c.b16 %v2823, %v2813
    %v3144 = vpack.c.b16 %v2824, %v2814
    %v3145 = vpack.c.b16 %v2825, %v2815
    %v3146 = vpack.c.b16 %v2826, %v2816
    %v3147 = vpack.c.b16 %v2827, %v2817
    %v3148 = vpack.c.b16 %v2828, %v2818
    %v3149 = vpack.c.b16 %v2829, %v2819
    %v3150 = vpack.c.b16 %v2830, %v2820
    %v3151 = vpack.c.b16 %v2831, %v2821
    %v3152 = vpack.c.b16 %v2842, %v2832
    %v3153 = vpack.c.b16 %v2843, %v2833
    %v3154 = vpack.c.b16 %v2844, %v2834
    %v3155 = vpack.c.b16 %v2845, %v2835
    %v3156 = vpack.c.b16 %v2846, %v2836
    %v3157 = vpack.c.b16 %v2847, %v2837
    %v3158 = vpack.c.b16 %v2848, %v2838
    %v3159 = vpack.c.b16 %v2849, %v2839
    %v3160 = vpack.c.b16 %v2850, %v2840
    %v3161 = vpack.c.b16 %v2851, %v2841
    %v3162 = vpack.c.b16 %v2862, %v2852
    %v3163 = vpack.c.b16 %v2863, %v2853
    %v3164 = vpack.c.b16 %v2864, %v2854
    %v3165 = vpack.c.b16 %v2865, %v2855
    %v3166 = vpack.c.b16 %v2866, %v2856
    %v3167 = vpack.c.b16 %v2867, %v2857
    %v3168 = vpack.c.b16 %v2868, %v2858
    %v3169 = vpack.c.b16 %v2869, %v2859
    %v3170 = vpack.c.b16 %v2870, %v2860
    %v3171 = vpack.c.b16 %v2871, %v2861
    %v3172 = vpack.c.b16 %v2882, %v2872
    %v3173 = vpack.c.b16 %v2883, %v2873
    %v3174 = vpack.c.b16 %v2884, %v2874
    %v3175 = vpack.c.b16 %v2885, %v2875
    %v3176 = vpack.c.b16 %v2886, %v2876
    %v3177 = vpack.c.b16 %v2887, %v2877
    %v3178 = vpack.c.b16 %v2888, %v2878
    %v3179 = vpack.c.b16 %v2889, %v2879
    %v3180 = vpack.c.b16 %v2890, %v2880
    %v3181 = vpack.c.b16 %v2891, %v2881
    %v3182 = vpack.c.b16 %v2902, %v2892
    %v3183 = vpack.c.b16 %v2903, %v2893
    %v3184 = vpack.c.b16 %v2904, %v2894
    %v3185 = vpack.c.b16 %v2905, %v2895
    %v3186 = vpack.c.b16 %v2906, %v2896
    %v3187 = vpack.c.b16 %v2907, %v2897
    %v3188 = vpack.c.b16 %v2908, %v2898
    %v3189 = vpack.c.b16 %v2909, %v2899
    %v3190 = vpack.c.b16 %v2910, %v2900
    %v3191 = vpack.c.b16 %v2911, %v2901
    %v3192 = vpack.c.b16 %v2922, %v2912
    %v3193 = vpack.c.b16 %v2923, %v2913
    %v3194 = vpack.c.b16 %v2924, %v2914
    %v3195 = vpack.c.b16 %v2925, %v2915
    %v3196 = vpack.c.b16 %v2926, %v2916
    %v3197 = vpack.c.b16 %v2927, %v2917
    %v3198 = vpack.c.b16 %v2928, %v2918
    %v3199 = vpack.c.b16 %v2929, %v2919
    %v3200 = vpack.c.b16 %v2930, %v2920
    %v3201 = vpack.c.b16 %v2931, %v2921
    %v3202 = vpack.c.b16 %v2942, %v2932
    %v3203 = vpack.c.b16 %v2943, %v2933
    %v3204 = vpack.c.b16 %v2944, %v2934
    %v3205 = vpack.c.b16 %v2945, %v2935
    %v3206 = vpack.c.b16 %v2946, %v2936
    %v3207 = vpack.c.b16 %v2947, %v2937
    %v3208 = vpack.c.b16 %v2948, %v2938
    %v3209 = vpack.c.b16 %v2949, %v2939
    %v3210 = vpack.c.b16 %v2950, %v2940
    %v3211 = vpack.c.b16 %v2951, %v2941
    %v3212 = vpack.c.b16 %v2962, %v2952
    %v3213 = vpack.c.b16 %v2963, %v2953
    %v3214 = vpack.c.b16 %v2964, %v2954
    %v3215 = vpack.c.b16 %v2965, %v2955
    %v3216 = vpack.c.b16 %v2966, %v2956
    %v3217 = vpack.c.b16 %v2967, %v2957
    %v3218 = vpack.c.b16 %v2968, %v2958
    %v3219 = vpack.c.b16 %v2969, %v2959
    %v3220 = vpack.c.b16 %v2970, %v2960
    %v3221 = vpack.c.b16 %v2971, %v2961
    %v3222 = vpack.c.b16 %v2982, %v2972
    %v3223 = vpack.c.b16 %v2983, %v2973
    %v3224 = vpack.c.b16 %v2984, %v2974
    %v3225 = vpack.c.b16 %v2985, %v2975
    %v3226 = vpack.c.b16 %v2986, %v2976
    %v3227 = vpack.c.b16 %v2987, %v2977
    %v3228 = vpack.c.b16 %v2988, %v2978
    %v3229 = vpack.c.b16 %v2989, %v2979
    %v3230 = vpack.c.b16 %v2990, %v2980
    %v3231 = vpack.c.b16 %v2991, %v2981
    %v3232 = vpack.c.b16 %v3002, %v2992
    %v3233 = vpack.c.b16 %v3003, %v2993
    %v3234 = vpack.c.b16 %v3004, %v2994
    %v3235 = vpack.c.b16 %v3005, %v2995
    %v3236 = vpack.c.b16 %v3006, %v2996
    %v3237 = vpack.c.b16 %v3007, %v2997
    %v3238 = vpack.c.b16 %v3008, %v2998
    %v3239 = vpack.c.b16 %v3009, %v2999
    %v3240 = vpack.c.b16 %v3010, %v3000
    %v3241 = vpack.c.b16 %v3011, %v3001
    %v3242 = vpack.c.b16 %v3022, %v3012
    %v3243 = vpack.c.b16 %v3023, %v3013
    %v3244 = vpack.c.b16 %v3024, %v3014
    %v3245 = vpack.c.b16 %v3025, %v3015
    %v3246 = vpack.c.b16 %v3026, %v3016
    %v3247 = vpack.c.b16 %v3027, %v3017
    %v3248 = vpack.c.b16 %v3028, %v3018
    %v3249 = vpack.c.b16 %v3029, %v3019
    %v3250 = vpack.c.b16 %v3030, %v3020
    %v3251 = vpack.c.b16 %v3031, %v3021
    %v3252 = vpack.c.b16 %v3042, %v3032
    %v3253 = vpack.c.b16 %v3043, %v3033
    %v3254 = vpack.c.b16 %v3044, %v3034
    %v3255 = vpack.c.b16 %v3045, %v3035
    %v3256 = vpack.c.b16 %v3046, %v3036
    %v3257 = vpack.c.b16 %v3047, %v3037
    %v3258 = vpack.c.b16 %v3048, %v3038
    %v3259 = vpack.c.b16 %v3049, %v3039
    %v3260 = vpack.c.b16 %v3050, %v3040
    %v3261 = vpack.c.b16 %v3051, %v3041
    %v3262 = vpack.c.b16 %v3062, %v3052
    %v3263 = vpack.c.b16 %v3063, %v3053
    %v3264 = vpack.c.b16 %v3064, %v3054
    %v3265 = vpack.c.b16 %v3065, %v3055
    %v3266 = vpack.c.b16 %v3066, %v3056
    %v3267 = vpack.c.b16 %v3067, %v3057
    %v3268 = vpack.c.b16 %v3068, %v3058
    %v3269 = vpack.c.b16 %v3069, %v3059
    %v3270 = vpack.c.b16 %v3070, %v3060
    %v3271 = vpack.c.b16 %v3071, %v3061
    %v3272 = vpack.c.b16 %v3072, %v3072
    %v3273 = vpack.c.b16 %v3073, %v3073
    %v3274 = vpack.c.b16 %v3074, %v3074
    %v3275 = vpack.c.b16 %v3075, %v3075
    %v3276 = vpack.c.b16 %v3076, %v3076
    %v3277 = vpack.c.b16 %v3077, %v3077
    %v3278 = vpack.c.b16 %v3078, %v3078
    %v3279 = vpack.c.b16 %v3079, %v3079
    %v3280 = vpack.c.b16 %v3080, %v3080
    %v3281 = vpack.c.b16 %v3081, %v3081
    %vm3472 = vcmask 424960
    %v3474 = vsel %vm3472, %v2247, 0
    %vm3476 = vcmask 1041408
    %v3478 = vsel %vm3476, %v3272, 0
    %v3481 = vsel %vm3476, %v3273, 0
    %v3484 = vsel %vm3476, %v3274, 0
    %v3487 = vsel %vm3476, %v3275, 0
    %v3490 = vsel %vm3476, %v3276, 0
    %v3493 = vsel %vm3476, %v3277, 0
    %v3496 = vsel %vm3476, %v3278, 0
    %v3499 = vsel %vm3476, %v3279, 0
    %v3502 = vsel %vm3476, %v3280, 0
    %v3505 = vsel %vm3476, %v3281, 0
    %3507 = vmatprep.subr.bf16.mxu0 %v3083
    %3508 = vmatpush1.bf16.msra.mxu0 %v3082
    %3509 = vmatprep.subr.bf16.mxu0 %v3093
    %3510 = vmatpush1.bf16.msra.mxu0 %v3092
    %3511 = vmatprep.subr.bf16.mxu0 %v3103
    %3512 = vmatpush1.bf16.msra.mxu0 %v3102
    %3513 = vmatprep.subr.bf16.mxu0 %v3113
    %3514 = vmatpush1.bf16.msra.mxu0 %v3112
    %3515 = vmatprep.subr.bf16.mxu0 %v3123
    %3516 = vmatpush1.bf16.msra.mxu0 %v3122
    %3517 = vmatprep.subr.bf16.mxu0 %v3133
    %3518 = vmatpush1.bf16.msra.mxu0 %v3132
    %3519 = vmatprep.subr.bf16.mxu0 %v3143
    %3520 = vmatpush1.bf16.msra.mxu0 %v3142
    %3521 = vmatprep.subr.bf16.mxu0 %v3153
    %3522 = vmatpush1.bf16.msra.mxu0 %v3152
    %3523 = vmatprep.subr.bf16.mxu0 %v3163
    %3524 = vmatpush1.bf16.msra.mxu0 %v3162
    %3525 = vmatprep.subr.bf16.mxu0 %v3173
    %3526 = vmatpush1.bf16.msra.mxu0 %v3172
    %3527 = vmatprep.subr.bf16.mxu0 %v3183
    %3528 = vmatpush1.bf16.msra.mxu0 %v3182
    %3529 = vmatprep.subr.bf16.mxu0 %v3193
    %3530 = vmatpush1.bf16.msra.mxu0 %v3192
    %3531 = vmatprep.subr.bf16.mxu0 %v3203
    %3532 = vmatpush1.bf16.msra.mxu0 %v3202
    %3533 = vmatprep.subr.bf16.mxu0 %v3213
    %3534 = vmatpush1.bf16.msra.mxu0 %v3212
    %3535 = vmatprep.subr.bf16.mxu0 %v3223
    %3536 = vmatpush1.bf16.msra.mxu0 %v3222
    %3537 = vmatprep.subr.bf16.mxu0 %v3233
    %3538 = vmatpush1.bf16.msra.mxu0 %v3232
    %3539 = vmatprep.mubr.bf16.mxu0 %v2246
    %3540 = vmatmul.mubr.bf16.gmra.mrb[0].mxu0 %v2245
    %v3541 = vpop.f32.mrb[0].mxu0
    %v3542 = vadd.f32 %v2450, %v3541
    %v3543 = vpop.f32.mrb[0].mxu0
    %v3544 = vadd.f32 %v2454, %v3543
    %v3545 = vpop.f32.mrb[0].mxu0
    %v3546 = vpop.f32.mrb[0].mxu0
    %3547 = vdwg.mxu0
    %3548 = vmatprep.subr.bf16.mxu0 %v3243
    %3549 = vmatpush1.bf16.msra.mxu0 %v3242
    %3550 = vmatprep.subr.bf16.mxu0 %v3253
    %3551 = vmatpush1.bf16.msra.mxu0 %v3252
    %3552 = vmatprep.subr.bf16.mxu0 %v3263
    %3553 = vmatpush1.bf16.msra.mxu0 %v3262
    %3554 = vmatprep.subr.bf16.mxu0 %v3481
    %3555 = vmatpush1.bf16.msra.mxu0 %v3478
    %3556 = vmatprep.subr.bf16.mxu0 0
    %3557 = vmatpush1.bf16.msra.mxu0 0
    %3558 = vmatprep.subr.bf16.mxu0 0
    %3559 = vmatpush1.bf16.msra.mxu0 0
    %3560 = vmatprep.subr.bf16.mxu0 0
    %3561 = vmatpush1.bf16.msra.mxu0 0
    %3562 = vmatprep.subr.bf16.mxu0 0
    %3563 = vmatpush1.bf16.msra.mxu0 0
    %3564 = vmatprep.subr.bf16.mxu0 0
    %3565 = vmatpush1.bf16.msra.mxu0 0
    %3566 = vmatprep.subr.bf16.mxu0 0
    %3567 = vmatpush1.bf16.msra.mxu0 0
    %3568 = vmatprep.subr.bf16.mxu0 0
    %3569 = vmatpush1.bf16.msra.mxu0 0
    %3570 = vmatprep.subr.bf16.mxu0 0
    %3571 = vmatpush1.bf16.msra.mxu0 0
    %3572 = vmatprep.subr.bf16.mxu0 0
    %3573 = vmatpush1.bf16.msra.mxu0 0
    %3574 = vmatprep.subr.bf16.mxu0 0
    %3575 = vmatpush1.bf16.msra.mxu0 0
    %3576 = vmatprep.subr.bf16.mxu0 0
    %3577 = vmatpush1.bf16.msra.mxu0 0
    %3578 = vmatprep.subr.bf16.mxu0 0
    %3579 = vmatpush1.bf16.msra.mxu0 0
    %3580 = vmatprep.mubr.bf16.mxu0 0
    %3581 = vmatmul.mubr.bf16.gmra.mrb[0].mxu0 %v3474
    %v3582 = vpop.f32.mrb[0].mxu0
    %v3583 = vadd.f32 %v3542, %v3582
    %v3584 = vpop.f32.mrb[0].mxu0
    %v3585 = vadd.f32 %v3544, %v3584
    %v3586 = vpop.f32.mrb[0].mxu0
    %v3587 = vpop.f32.mrb[0].mxu0
    %3588 = vdwg.mxu0
    %3589 = vmatprep.subr.bf16.mxu0 %v3085
    %3590 = vmatpush1.bf16.msra.mxu0 %v3084
    %3591 = vmatprep.subr.bf16.mxu0 %v3095
    %3592 = vmatpush1.bf16.msra.mxu0 %v3094
    %3593 = vmatprep.subr.bf16.mxu0 %v3105
    %3594 = vmatpush1.bf16.msra.mxu0 %v3104
    %3595 = vmatprep.subr.bf16.mxu0 %v3115
    %3596 = vmatpush1.bf16.msra.mxu0 %v3114
    %3597 = vmatprep.subr.bf16.mxu0 %v3125
    %3598 = vmatpush1.bf16.msra.mxu0 %v3124
    %3599 = vmatprep.subr.bf16.mxu0 %v3135
    %3600 = vmatpush1.bf16.msra.mxu0 %v3134
    %3601 = vmatprep.subr.bf16.mxu0 %v3145
    %3602 = vmatpush1.bf16.msra.mxu0 %v3144
    %3603 = vmatprep.subr.bf16.mxu0 %v3155
    %3604 = vmatpush1.bf16.msra.mxu0 %v3154
    %3605 = vmatprep.subr.bf16.mxu0 %v3165
    %3606 = vmatpush1.bf16.msra.mxu0 %v3164
    %3607 = vmatprep.subr.bf16.mxu0 %v3175
    %3608 = vmatpush1.bf16.msra.mxu0 %v3174
    %3609 = vmatprep.subr.bf16.mxu0 %v3185
    %3610 = vmatpush1.bf16.msra.mxu0 %v3184
    %3611 = vmatprep.subr.bf16.mxu0 %v3195
    %3612 = vmatpush1.bf16.msra.mxu0 %v3194
    %3613 = vmatprep.subr.bf16.mxu0 %v3205
    %3614 = vmatpush1.bf16.msra.mxu0 %v3204
    %3615 = vmatprep.subr.bf16.mxu0 %v3215
    %3616 = vmatpush1.bf16.msra.mxu0 %v3214
    %3617 = vmatprep.subr.bf16.mxu0 %v3225
    %3618 = vmatpush1.bf16.msra.mxu0 %v3224
    %3619 = vmatprep.subr.bf16.mxu0 %v3235
    %3620 = vmatpush1.bf16.msra.mxu0 %v3234
    %3621 = vmatprep.mubr.bf16.mxu0 %v2246
    %3622 = vmatmul.mubr.bf16.gmra.mrb[0].mxu0 %v2245
    %v3623 = vpop.f32.mrb[0].mxu0
    %v3624 = vadd.f32 %v2458, %v3623
    %v3625 = vpop.f32.mrb[0].mxu0
    %v3626 = vadd.f32 %v2462, %v3625
    %v3627 = vpop.f32.mrb[0].mxu0
    %v3628 = vpop.f32.mrb[0].mxu0
    %3629 = vdwg.mxu0
    %3630 = vmatprep.subr.bf16.mxu0 %v3245
    %3631 = vmatpush1.bf16.msra.mxu0 %v3244
    %3632 = vmatprep.subr.bf16.mxu0 %v3255
    %3633 = vmatpush1.bf16.msra.mxu0 %v3254
    %3634 = vmatprep.subr.bf16.mxu0 %v3265
    %3635 = vmatpush1.bf16.msra.mxu0 %v3264
    %3636 = vmatprep.subr.bf16.mxu0 %v3487
    %3637 = vmatpush1.bf16.msra.mxu0 %v3484
    %3638 = vmatprep.subr.bf16.mxu0 0
    %3639 = vmatpush1.bf16.msra.mxu0 0
    %3640 = vmatprep.subr.bf16.mxu0 0
    %3641 = vmatpush1.bf16.msra.mxu0 0
    %3642 = vmatprep.subr.bf16.mxu0 0
    %3643 = vmatpush1.bf16.msra.mxu0 0
    %3644 = vmatprep.subr.bf16.mxu0 0
    %3645 = vmatpush1.bf16.msra.mxu0 0
    %3646 = vmatprep.subr.bf16.mxu0 0
    %3647 = vmatpush1.bf16.msra.mxu0 0
    %3648 = vmatprep.subr.bf16.mxu0 0
    %3649 = vmatpush1.bf16.msra.mxu0 0
    %3650 = vmatprep.subr.bf16.mxu0 0
    %3651 = vmatpush1.bf16.msra.mxu0 0
    %3652 = vmatprep.subr.bf16.mxu0 0
    %3653 = vmatpush1.bf16.msra.mxu0 0
    %3654 = vmatprep.subr.bf16.mxu0 0
    %3655 = vmatpush1.bf16.msra.mxu0 0
    %3656 = vmatprep.subr.bf16.mxu0 0
    %3657 = vmatpush1.bf16.msra.mxu0 0
    %3658 = vmatprep.subr.bf16.mxu0 0
    %3659 = vmatpush1.bf16.msra.mxu0 0
    %3660 = vmatprep.subr.bf16.mxu0 0
    %3661 = vmatpush1.bf16.msra.mxu0 0
    %3662 = vmatprep.mubr.bf16.mxu0 0
    %3663 = vmatmul.mubr.bf16.gmra.mrb[0].mxu0 %v3474
    %v3664 = vpop.f32.mrb[0].mxu0
    %v3665 = vadd.f32 %v3624, %v3664
    %v3666 = vpop.f32.mrb[0].mxu0
    %v3667 = vadd.f32 %v3626, %v3666
    %v3668 = vpop.f32.mrb[0].mxu0
    %v3669 = vpop.f32.mrb[0].mxu0
    %3670 = vdwg.mxu0
    %3671 = vmatprep.subr.bf16.mxu0 %v3087
    %3672 = vmatpush1.bf16.msra.mxu0 %v3086
    %3673 = vmatprep.subr.bf16.mxu0 %v3097
    %3674 = vmatpush1.bf16.msra.mxu0 %v3096
    %3675 = vmatprep.subr.bf16.mxu0 %v3107
    %3676 = vmatpush1.bf16.msra.mxu0 %v3106
    %3677 = vmatprep.subr.bf16.mxu0 %v3117
    %3678 = vmatpush1.bf16.msra.mxu0 %v3116
    %3679 = vmatprep.subr.bf16.mxu0 %v3127
    %3680 = vmatpush1.bf16.msra.mxu0 %v3126
    %3681 = vmatprep.subr.bf16.mxu0 %v3137
    %3682 = vmatpush1.bf16.msra.mxu0 %v3136
    %3683 = vmatprep.subr.bf16.mxu0 %v3147
    %3684 = vmatpush1.bf16.msra.mxu0 %v3146
    %3685 = vmatprep.subr.bf16.mxu0 %v3157
    %3686 = vmatpush1.bf16.msra.mxu0 %v3156
    %3687 = vmatprep.subr.bf16.mxu0 %v3167
    %3688 = vmatpush1.bf16.msra.mxu0 %v3166
    %3689 = vmatprep.subr.bf16.mxu0 %v3177
    %3690 = vmatpush1.bf16.msra.mxu0 %v3176
    %3691 = vmatprep.subr.bf16.mxu0 %v3187
    %3692 = vmatpush1.bf16.msra.mxu0 %v3186
    %3693 = vmatprep.subr.bf16.mxu0 %v3197
    %3694 = vmatpush1.bf16.msra.mxu0 %v3196
    %3695 = vmatprep.subr.bf16.mxu0 %v3207
    %3696 = vmatpush1.bf16.msra.mxu0 %v3206
    %3697 = vmatprep.subr.bf16.mxu0 %v3217
    %3698 = vmatpush1.bf16.msra.mxu0 %v3216
    %3699 = vmatprep.subr.bf16.mxu0 %v3227
    %3700 = vmatpush1.bf16.msra.mxu0 %v3226
    %3701 = vmatprep.subr.bf16.mxu0 %v3237
    %3702 = vmatpush1.bf16.msra.mxu0 %v3236
    %3703 = vmatprep.mubr.bf16.mxu0 %v2246
    %3704 = vmatmul.mubr.bf16.gmra.mrb[0].mxu0 %v2245
    %v3705 = vpop.f32.mrb[0].mxu0
    %v3706 = vadd.f32 %v2466, %v3705
    %v3707 = vpop.f32.mrb[0].mxu0
    %v3708 = vadd.f32 %v2470, %v3707
    %v3709 = vpop.f32.mrb[0].mxu0
    %v3710 = vpop.f32.mrb[0].mxu0
    %3711 = vdwg.mxu0
    %3712 = vmatprep.subr.bf16.mxu0 %v3247
    %3713 = vmatpush1.bf16.msra.mxu0 %v3246
    %3714 = vmatprep.subr.bf16.mxu0 %v3257
    %3715 = vmatpush1.bf16.msra.mxu0 %v3256
    %3716 = vmatprep.subr.bf16.mxu0 %v3267
    %3717 = vmatpush1.bf16.msra.mxu0 %v3266
    %3718 = vmatprep.subr.bf16.mxu0 %v3493
    %3719 = vmatpush1.bf16.msra.mxu0 %v3490
    %3720 = vmatprep.subr.bf16.mxu0 0
    %3721 = vmatpush1.bf16.msra.mxu0 0
    %3722 = vmatprep.subr.bf16.mxu0 0
    %3723 = vmatpush1.bf16.msra.mxu0 0
    %3724 = vmatprep.subr.bf16.mxu0 0
    %3725 = vmatpush1.bf16.msra.mxu0 0
    %3726 = vmatprep.subr.bf16.mxu0 0
    %3727 = vmatpush1.bf16.msra.mxu0 0
    %3728 = vmatprep.subr.bf16.mxu0 0
    %3729 = vmatpush1.bf16.msra.mxu0 0
    %3730 = vmatprep.subr.bf16.mxu0 0
    %3731 = vmatpush1.bf16.msra.mxu0 0
    %3732 = vmatprep.subr.bf16.mxu0 0
    %3733 = vmatpush1.bf16.msra.mxu0 0
    %3734 = vmatprep.subr.bf16.mxu0 0
    %3735 = vmatpush1.bf16.msra.mxu0 0
    %3736 = vmatprep.subr.bf16.mxu0 0
    %3737 = vmatpush1.bf16.msra.mxu0 0
    %3738 = vmatprep.subr.bf16.mxu0 0
    %3739 = vmatpush1.bf16.msra.mxu0 0
    %3740 = vmatprep.subr.bf16.mxu0 0
    %3741 = vmatpush1.bf16.msra.mxu0 0
    %3742 = vmatprep.subr.bf16.mxu0 0
    %3743 = vmatpush1.bf16.msra.mxu0 0
    %3744 = vmatprep.mubr.bf16.mxu0 0
    %3745 = vmatmul.mubr.bf16.gmra.mrb[0].mxu0 %v3474
    %v3746 = vpop.f32.mrb[0].mxu0
    %v3747 = vadd.f32 %v3706, %v3746
    %v3748 = vpop.f32.mrb[0].mxu0
    %v3749 = vadd.f32 %v3708, %v3748
    %v3750 = vpop.f32.mrb[0].mxu0
    %v3751 = vpop.f32.mrb[0].mxu0
    %3752 = vdwg.mxu0
    %3753 = vmatprep.subr.bf16.mxu0 %v3089
    %3754 = vmatpush1.bf16.msra.mxu0 %v3088
    %3755 = vmatprep.subr.bf16.mxu0 %v3099
    %3756 = vmatpush1.bf16.msra.mxu0 %v3098
    %3757 = vmatprep.subr.bf16.mxu0 %v3109
    %3758 = vmatpush1.bf16.msra.mxu0 %v3108
    %3759 = vmatprep.subr.bf16.mxu0 %v3119
    %3760 = vmatpush1.bf16.msra.mxu0 %v3118
    %3761 = vmatprep.subr.bf16.mxu0 %v3129
    %3762 = vmatpush1.bf16.msra.mxu0 %v3128
    %3763 = vmatprep.subr.bf16.mxu0 %v3139
    %3764 = vmatpush1.bf16.msra.mxu0 %v3138
    %3765 = vmatprep.subr.bf16.mxu0 %v3149
    %3766 = vmatpush1.bf16.msra.mxu0 %v3148
    %3767 = vmatprep.subr.bf16.mxu0 %v3159
    %3768 = vmatpush1.bf16.msra.mxu0 %v3158
    %3769 = vmatprep.subr.bf16.mxu0 %v3169
    %3770 = vmatpush1.bf16.msra.mxu0 %v3168
    %3771 = vmatprep.subr.bf16.mxu0 %v3179
    %3772 = vmatpush1.bf16.msra.mxu0 %v3178
    %3773 = vmatprep.subr.bf16.mxu0 %v3189
    %3774 = vmatpush1.bf16.msra.mxu0 %v3188
    %3775 = vmatprep.subr.bf16.mxu0 %v3199
    %3776 = vmatpush1.bf16.msra.mxu0 %v3198
    %3777 = vmatprep.subr.bf16.mxu0 %v3209
    %3778 = vmatpush1.bf16.msra.mxu0 %v3208
    %3779 = vmatprep.subr.bf16.mxu0 %v3219
    %3780 = vmatpush1.bf16.msra.mxu0 %v3218
    %3781 = vmatprep.subr.bf16.mxu0 %v3229
    %3782 = vmatpush1.bf16.msra.mxu0 %v3228
    %3783 = vmatprep.subr.bf16.mxu0 %v3239
    %3784 = vmatpush1.bf16.msra.mxu0 %v3238
    %3785 = vmatprep.mubr.bf16.mxu0 %v2246
    %3786 = vmatmul.mubr.bf16.gmra.mrb[0].mxu0 %v2245
    %v3787 = vpop.f32.mrb[0].mxu0
    %v3788 = vadd.f32 %v2474, %v3787
    %v3789 = vpop.f32.mrb[0].mxu0
    %v3790 = vadd.f32 %v2478, %v3789
    %v3791 = vpop.f32.mrb[0].mxu0
    %v3792 = vpop.f32.mrb[0].mxu0
    %3793 = vdwg.mxu0
    %3794 = vmatprep.subr.bf16.mxu0 %v3249
    %3795 = vmatpush1.bf16.msra.mxu0 %v3248
    %3796 = vmatprep.subr.bf16.mxu0 %v3259
    %3797 = vmatpush1.bf16.msra.mxu0 %v3258
    %3798 = vmatprep.subr.bf16.mxu0 %v3269
    %3799 = vmatpush1.bf16.msra.mxu0 %v3268
    %3800 = vmatprep.subr.bf16.mxu0 %v3499
    %3801 = vmatpush1.bf16.msra.mxu0 %v3496
    %3802 = vmatprep.subr.bf16.mxu0 0
    %3803 = vmatpush1.bf16.msra.mxu0 0
    %3804 = vmatprep.subr.bf16.mxu0 0
    %3805 = vmatpush1.bf16.msra.mxu0 0
    %3806 = vmatprep.subr.bf16.mxu0 0
    %3807 = vmatpush1.bf16.msra.mxu0 0
    %3808 = vmatprep.subr.bf16.mxu0 0
    %3809 = vmatpush1.bf16.msra.mxu0 0
    %3810 = vmatprep.subr.bf16.mxu0 0
    %3811 = vmatpush1.bf16.msra.mxu0 0
    %3812 = vmatprep.subr.bf16.mxu0 0
    %3813 = vmatpush1.bf16.msra.mxu0 0
    %3814 = vmatprep.subr.bf16.mxu0 0
    %3815 = vmatpush1.bf16.msra.mxu0 0
    %3816 = vmatprep.subr.bf16.mxu0 0
    %3817 = vmatpush1.bf16.msra.mxu0 0
    %3818 = vmatprep.subr.bf16.mxu0 0
    %3819 = vmatpush1.bf16.msra.mxu0 0
    %3820 = vmatprep.subr.bf16.mxu0 0
    %3821 = vmatpush1.bf16.msra.mxu0 0
    %3822 = vmatprep.subr.bf16.mxu0 0
    %3823 = vmatpush1.bf16.msra.mxu0 0
    %3824 = vmatprep.subr.bf16.mxu0 0
    %3825 = vmatpush1.bf16.msra.mxu0 0
    %3826 = vmatprep.mubr.bf16.mxu0 0
    %3827 = vmatmul.mubr.bf16.gmra.mrb[0].mxu0 %v3474
    %v3828 = vpop.f32.mrb[0].mxu0
    %v3829 = vadd.f32 %v3788, %v3828
    %v3830 = vpop.f32.mrb[0].mxu0
    %v3831 = vadd.f32 %v3790, %v3830
    %v3832 = vpop.f32.mrb[0].mxu0
    %v3833 = vpop.f32.mrb[0].mxu0
    %3834 = vdwg.mxu0
    %3835 = vmatprep.subr.bf16.mxu0 %v3091
    %3836 = vmatpush1.bf16.msra.mxu0 %v3090
    %3837 = vmatprep.subr.bf16.mxu0 %v3101
    %3838 = vmatpush1.bf16.msra.mxu0 %v3100
    %3839 = vmatprep.subr.bf16.mxu0 %v3111
    %3840 = vmatpush1.bf16.msra.mxu0 %v3110
    %3841 = vmatprep.subr.bf16.mxu0 %v3121
    %3842 = vmatpush1.bf16.msra.mxu0 %v3120
    %3843 = vmatprep.subr.bf16.mxu0 %v3131
    %3844 = vmatpush1.bf16.msra.mxu0 %v3130
    %3845 = vmatprep.subr.bf16.mxu0 %v3141
    %3846 = vmatpush1.bf16.msra.mxu0 %v3140
    %3847 = vmatprep.subr.bf16.mxu0 %v3151
    %3848 = vmatpush1.bf16.msra.mxu0 %v3150
    %3849 = vmatprep.subr.bf16.mxu0 %v3161
    %3850 = vmatpush1.bf16.msra.mxu0 %v3160
    %3851 = vmatprep.subr.bf16.mxu0 %v3171
    %3852 = vmatpush1.bf16.msra.mxu0 %v3170
    %3853 = vmatprep.subr.bf16.mxu0 %v3181
    %3854 = vmatpush1.bf16.msra.mxu0 %v3180
    %3855 = vmatprep.subr.bf16.mxu0 %v3191
    %3856 = vmatpush1.bf16.msra.mxu0 %v3190
    %3857 = vmatprep.subr.bf16.mxu0 %v3201
    %3858 = vmatpush1.bf16.msra.mxu0 %v3200
    %3859 = vmatprep.subr.bf16.mxu0 %v3211
    %3860 = vmatpush1.bf16.msra.mxu0 %v3210
    %3861 = vmatprep.subr.bf16.mxu0 %v3221
    %3862 = vmatpush1.bf16.msra.mxu0 %v3220
    %3863 = vmatprep.subr.bf16.mxu0 %v3231
    %3864 = vmatpush1.bf16.msra.mxu0 %v3230
    %3865 = vmatprep.subr.bf16.mxu0 %v3241
    %3866 = vmatpush1.bf16.msra.mxu0 %v3240
    %3867 = vmatprep.mubr.bf16.mxu0 %v2246
    %3868 = vmatmul.mubr.bf16.gmra.mrb[0].mxu0 %v2245
    %v3869 = vpop.f32.mrb[0].mxu0
    %v3870 = vadd.f32 %v2482, %v3869
    %v3871 = vpop.f32.mrb[0].mxu0
    %v3872 = vadd.f32 %v2486, %v3871
    %v3873 = vpop.f32.mrb[0].mxu0
    %v3874 = vpop.f32.mrb[0].mxu0
    %3875 = vdwg.mxu0
    %3876 = vmatprep.subr.bf16.mxu0 %v3251
    %3877 = vmatpush1.bf16.msra.mxu0 %v3250
    %3878 = vmatprep.subr.bf16.mxu0 %v3261
    %3879 = vmatpush1.bf16.msra.mxu0 %v3260
    %3880 = vmatprep.subr.bf16.mxu0 %v3271
    %3881 = vmatpush1.bf16.msra.mxu0 %v3270
    %3882 = vmatprep.subr.bf16.mxu0 %v3505
    %3883 = vmatpush1.bf16.msra.mxu0 %v3502
    %3884 = vmatprep.subr.bf16.mxu0 0
    %3885 = vmatpush1.bf16.msra.mxu0 0
    %3886 = vmatprep.subr.bf16.mxu0 0
    %3887 = vmatpush1.bf16.msra.mxu0 0
    %3888 = vmatprep.subr.bf16.mxu0 0
    %3889 = vmatpush1.bf16.msra.mxu0 0
    %3890 = vmatprep.subr.bf16.mxu0 0
    %3891 = vmatpush1.bf16.msra.mxu0 0
    %3892 = vmatprep.subr.bf16.mxu0 0
    %3893 = vmatpush1.bf16.msra.mxu0 0
    %3894 = vmatprep.subr.bf16.mxu0 0
    %3895 = vmatpush1.bf16.msra.mxu0 0
    %3896 = vmatprep.subr.bf16.mxu0 0
    %3897 = vmatpush1.bf16.msra.mxu0 0
    %3898 = vmatprep.subr.bf16.mxu0 0
    %3899 = vmatpush1.bf16.msra.mxu0 0
    %3900 = vmatprep.subr.bf16.mxu0 0
    %3901 = vmatpush1.bf16.msra.mxu0 0
    %3902 = vmatprep.subr.bf16.mxu0 0
    %3903 = vmatpush1.bf16.msra.mxu0 0
    %3904 = vmatprep.subr.bf16.mxu0 0
    %3905 = vmatpush1.bf16.msra.mxu0 0
    %3906 = vmatprep.subr.bf16.mxu0 0
    %3907 = vmatpush1.bf16.msra.mxu0 0
    %3908 = vmatprep.mubr.bf16.mxu0 0
    %3909 = vmatmul.mubr.bf16.gmra.mrb[0].mxu0 %v3474
    %v3910 = vpop.f32.mrb[0].mxu0
    %v3911 = vadd.f32 %v3870, %v3910
    %v3912 = vpop.f32.mrb[0].mxu0
    %v3913 = vadd.f32 %v3872, %v3912
    %v3914 = vpop.f32.mrb[0].mxu0
    %v3915 = vpop.f32.mrb[0].mxu0
    %3916 = vdwg.mxu0
    %v3917 = vxor.u32 %v3583, 2147483648
    %v3918 = vxor.u32 %v3585, 2147483648
    %v3919 = vxor.u32 %v3665, 2147483648
    %v3920 = vxor.u32 %v3667, 2147483648
    %v3921 = vxor.u32 %v3747, 2147483648
    %v3922 = vxor.u32 %v3749, 2147483648
    %v3923 = vxor.u32 %v3829, 2147483648
    %v3924 = vxor.u32 %v3831, 2147483648
    %v3925 = vxor.u32 %v3911, 2147483648
    %v3926 = vxor.u32 %v3913, 2147483648
    %v3927 = vmul.f32 %v3917, 1.442695
    %v3928 = vpow.pop %v3927
    %v3929 = vmul.f32 %v3918, 1.442695
    %v3930 = vpow.pop %v3929
    %v3931 = vmul.f32 %v3919, 1.442695
    %v3932 = vpow.pop %v3931
    %v3933 = vmul.f32 %v3920, 1.442695
    %v3934 = vpow.pop %v3933
    %v3935 = vmul.f32 %v3921, 1.442695
    %v3936 = vpow.pop %v3935
    %v3937 = vmul.f32 %v3922, 1.442695
    %v3938 = vpow.pop %v3937
    %v3939 = vmul.f32 %v3923, 1.442695
    %v3940 = vpow.pop %v3939
    %v3941 = vmul.f32 %v3924, 1.442695
    %v3942 = vpow.pop %v3941
    %v3943 = vmul.f32 %v3925, 1.442695
    %v3944 = vpow.pop %v3943
    %v3945 = vmul.f32 %v3926, 1.442695
    %v3946 = vpow.pop %v3945
    %v3947 = vadd.f32 %v3928, 1.0
    %v3948 = vadd.f32 %v3930, 1.0
    %v3949 = vadd.f32 %v3932, 1.0
    %v3950 = vadd.f32 %v3934, 1.0
    %v3951 = vadd.f32 %v3936, 1.0
    %v3952 = vadd.f32 %v3938, 1.0
    %v3953 = vadd.f32 %v3940, 1.0
    %v3954 = vadd.f32 %v3942, 1.0
    %v3955 = vadd.f32 %v3944, 1.0
    %v3956 = vadd.f32 %v3946, 1.0
    %v3957 = vrcp.pop %v3947
    %v3958 = vmul.f32 1.0, %v3957
    %v3959 = vrcp.pop %v3948
    %v3960 = vmul.f32 1.0, %v3959
    %v3961 = vrcp.pop %v3949
    %v3962 = vmul.f32 1.0, %v3961
    %v3963 = vrcp.pop %v3950
    %v3964 = vmul.f32 1.0, %v3963
    %v3965 = vrcp.pop %v3951
    %v3966 = vmul.f32 1.0, %v3965
    %v3967 = vrcp.pop %v3952
    %v3968 = vmul.f32 1.0, %v3967
    %v3969 = vrcp.pop %v3953
    %v3970 = vmul.f32 1.0, %v3969
    %v3971 = vrcp.pop %v3954
    %v3972 = vmul.f32 1.0, %v3971
    %v3973 = vrcp.pop %v3955
    %v3974 = vmul.f32 1.0, %v3973
    %v3975 = vrcp.pop %v3956
    %v3976 = vmul.f32 1.0, %v3975
    %v3987 = vcombine.low %v3958, %v3960
    %v3988 = vcombine.high %v3958, %v3960
    %v3989 = vcombine.low %v3962, %v3964
    %v3990 = vcombine.high %v3962, %v3964
    %v3991 = vcombine.low %v3966, %v3968
    %v3992 = vcombine.high %v3966, %v3968
    %v3993 = vcombine.low %v3970, %v3972
    %v3994 = vcombine.high %v3970, %v3972
    %v3996 = vunpack.c.l.s4 1966171168
    %v3997 = vunpack.c.0.s8 %v3996
    %v3998 = vlaneseq
    %v3999 = vshrl.u32 %v3998, 7
    %v4000 = vsub.s32 %v3997, %v3999
    %v4001 = vrot.slane %v3987, %v4000
    %v4003 = vunpack.c.l.s4 1966171168
    %v4004 = vunpack.c.0.s8 %v4003
    %v4005 = vlaneseq
    %v4006 = vshrl.u32 %v4005, 7
    %v4007 = vsub.s32 %v4004, %v4006
    %v4008 = vrot.slane %v3988, %v4007
    %v4010 = vunpack.c.l.s4 1966171168
    %v4011 = vunpack.c.0.s8 %v4010
    %v4012 = vlaneseq
    %v4013 = vshrl.u32 %v4012, 7
    %v4014 = vsub.s32 %v4011, %v4013
    %v4015 = vrot.slane %v3989, %v4014
    %v4017 = vunpack.c.l.s4 1966171168
    %v4018 = vunpack.c.0.s8 %v4017
    %v4019 = vlaneseq
    %v4020 = vshrl.u32 %v4019, 7
    %v4021 = vsub.s32 %v4018, %v4020
    %v4022 = vrot.slane %v3990, %v4021
    %v4024 = vunpack.c.l.s4 1966171168
    %v4025 = vunpack.c.0.s8 %v4024
    %v4026 = vlaneseq
    %v4027 = vshrl.u32 %v4026, 7
    %v4028 = vsub.s32 %v4025, %v4027
    %v4029 = vrot.slane %v3991, %v4028
    %v4031 = vunpack.c.l.s4 1966171168
    %v4032 = vunpack.c.0.s8 %v4031
    %v4033 = vlaneseq
    %v4034 = vshrl.u32 %v4033, 7
    %v4035 = vsub.s32 %v4032, %v4034
    %v4036 = vrot.slane %v3992, %v4035
    %v4038 = vunpack.c.l.s4 1966171168
    %v4039 = vunpack.c.0.s8 %v4038
    %v4040 = vlaneseq
    %v4041 = vshrl.u32 %v4040, 7
    %v4042 = vsub.s32 %v4039, %v4041
    %v4043 = vrot.slane %v3993, %v4042
    %v4045 = vunpack.c.l.s4 1966171168
    %v4046 = vunpack.c.0.s8 %v4045
    %v4047 = vlaneseq
    %v4048 = vshrl.u32 %v4047, 7
    %v4049 = vsub.s32 %v4046, %v4048
    %v4050 = vrot.slane %v3994, %v4049
    %v4051 = vcombine.low %v4001, %v4015
    %v4052 = vcombine.high %v4001, %v4015
    %v4053 = vcombine.low %v4008, %v4022
    %v4054 = vcombine.high %v4008, %v4022
    %v4055 = vcombine.low %v4029, %v4043
    %v4056 = vcombine.high %v4029, %v4043
    %v4057 = vcombine.low %v4036, %v4050
    %v4058 = vcombine.high %v4036, %v4050
    %v4060 = vunpack.c.l.s4 1966171168
    %v4061 = vunpack.c.0.s8 %v4060
    %v4062 = vlaneseq
    %v4063 = vshrl.u32 %v4062, 7
    %v4064 = vsub.s32 %v4061, %v4063
    %v4065 = vrot.slane %v4051, %v4064
    %v4067 = vunpack.c.l.s4 1966171168
    %v4068 = vunpack.c.0.s8 %v4067
    %v4069 = vlaneseq
    %v4070 = vshrl.u32 %v4069, 7
    %v4071 = vsub.s32 %v4068, %v4070
    %v4072 = vrot.slane %v4053, %v4071
    %v4074 = vunpack.c.l.s4 1966171168
    %v4075 = vunpack.c.0.s8 %v4074
    %v4076 = vlaneseq
    %v4077 = vshrl.u32 %v4076, 7
    %v4078 = vsub.s32 %v4075, %v4077
    %v4079 = vrot.slane %v4052, %v4078
    %v4081 = vunpack.c.l.s4 1966171168
    %v4082 = vunpack.c.0.s8 %v4081
    %v4083 = vlaneseq
    %v4084 = vshrl.u32 %v4083, 7
    %v4085 = vsub.s32 %v4082, %v4084
    %v4086 = vrot.slane %v4054, %v4085
    %v4088 = vunpack.c.l.s4 1966171168
    %v4089 = vunpack.c.0.s8 %v4088
    %v4090 = vlaneseq
    %v4091 = vshrl.u32 %v4090, 7
    %v4092 = vsub.s32 %v4089, %v4091
    %v4093 = vrot.slane %v4055, %v4092
    %v4095 = vunpack.c.l.s4 1966171168
    %v4096 = vunpack.c.0.s8 %v4095
    %v4097 = vlaneseq
    %v4098 = vshrl.u32 %v4097, 7
    %v4099 = vsub.s32 %v4096, %v4098
    %v4100 = vrot.slane %v4057, %v4099
    %v4102 = vunpack.c.l.s4 1966171168
    %v4103 = vunpack.c.0.s8 %v4102
    %v4104 = vlaneseq
    %v4105 = vshrl.u32 %v4104, 7
    %v4106 = vsub.s32 %v4103, %v4105
    %v4107 = vrot.slane %v4056, %v4106
    %v4109 = vunpack.c.l.s4 1966171168
    %v4110 = vunpack.c.0.s8 %v4109
    %v4111 = vlaneseq
    %v4112 = vshrl.u32 %v4111, 7
    %v4113 = vsub.s32 %v4110, %v4112
    %v4114 = vrot.slane %v4058, %v4113
    %v4115 = vcombine.low %v4065, %v4093
    %v4116 = vcombine.high %v4065, %v4093
    %v4117 = vcombine.low %v4072, %v4100
    %v4118 = vcombine.high %v4072, %v4100
    %v4119 = vcombine.low %v4079, %v4107
    %v4120 = vcombine.high %v4079, %v4107
    %v4121 = vcombine.low %v4086, %v4114
    %v4122 = vcombine.high %v4086, %v4114
    %v4123 = vcombine.low %v3974, %v3976
    %v4124 = vcombine.high %v3974, %v3976
    %v4126 = vunpack.c.l.s4 1966171168
    %v4127 = vunpack.c.0.s8 %v4126
    %v4128 = vlaneseq
    %v4129 = vshrl.u32 %v4128, 7
    %v4130 = vsub.s32 %v4127, %v4129
    %v4131 = vrot.slane %v4123, %v4130
    %v4133 = vunpack.c.l.s4 1966171168
    %v4134 = vunpack.c.0.s8 %v4133
    %v4135 = vlaneseq
    %v4136 = vshrl.u32 %v4135, 7
    %v4137 = vsub.s32 %v4134, %v4136
    %v4138 = vrot.slane %v4124, %v4137
    %v4139 = vcombine.high %v4131, %v4131
    %v4140 = vcombine.high %v4138, %v4138
    %v4142 = vunpack.c.l.s4 1966171168
    %v4143 = vunpack.c.0.s8 %v4142
    %v4144 = vlaneseq
    %v4145 = vshrl.u32 %v4144, 7
    %v4146 = vsub.s32 %v4143, %v4145
    %v4147 = vrot.slane %v4131, %v4146
    %v4149 = vunpack.c.l.s4 1966171168
    %v4150 = vunpack.c.0.s8 %v4149
    %v4151 = vlaneseq
    %v4152 = vshrl.u32 %v4151, 7
    %v4153 = vsub.s32 %v4150, %v4152
    %v4154 = vrot.slane %v4138, %v4153
    %v4156 = vunpack.c.l.s4 1966171168
    %v4157 = vunpack.c.0.s8 %v4156
    %v4158 = vlaneseq
    %v4159 = vshrl.u32 %v4158, 7
    %v4160 = vsub.s32 %v4157, %v4159
    %v4161 = vrot.slane %v4139, %v4160
    %v4163 = vunpack.c.l.s4 1966171168
    %v4164 = vunpack.c.0.s8 %v4163
    %v4165 = vlaneseq
    %v4166 = vshrl.u32 %v4165, 7
    %v4167 = vsub.s32 %v4164, %v4166
    %v4168 = vrot.slane %v4140, %v4167
    %v4169 = vcombine.high %v4147, %v4147
    %v4170 = vcombine.high %v4154, %v4154
    %v4171 = vcombine.high %v4161, %v4161
    %v4172 = vcombine.high %v4168, %v4168
    %4189 = vst [vmem:[#allocation2] sm:$0xff] %v4115
    %v4190 = vlaneseq
    %vm4191 = vcmp.ge.s32.totalorder %v4190, 0
    %vm4192 = vcmp.lt.s32.totalorder %v4190, 208
    %vm4193 = vmand %vm4191, %vm4192
    %4194 = vst.msk [vmem:[#allocation2 + $0x8] sm:$0x3] %vm4193, %v4147
    %4195 = vst [vmem:[#allocation2 + $0xa] sm:$0xff] %v4119
    %4196 = vst.msk [vmem:[#allocation2 + $0x12] sm:$0x3] %vm4193, %v4161
    %4197 = vst [vmem:[#allocation2 + $0x14] sm:$0xff] %v4116
    %4198 = vst.msk [vmem:[#allocation2 + $0x1c] sm:$0x3] %vm4193, %v4169
    %4199 = vst [vmem:[#allocation2 + $0x1e] sm:$0xff] %v4120
    %4200 = vst.msk [vmem:[#allocation2 + $0x26] sm:$0x3] %vm4193, %v4171
    %4201 = vst [vmem:[#allocation2 + $0x28] sm:$0xff] %v4117
    %4202 = vst.msk [vmem:[#allocation2 + $0x30] sm:$0x3] %vm4193, %v4154
    %4203 = vst [vmem:[#allocation2 + $0x32] sm:$0xff] %v4121
    %4204 = vst.msk [vmem:[#allocation2 + $0x3a] sm:$0x3] %vm4193, %v4168
    %4205 = vst [vmem:[#allocation2 + $0x3c] sm:$0xff] %v4118
    %4206 = vst.msk [vmem:[#allocation2 + $0x44] sm:$0x3] %vm4193, %v4170
    %4207 = vst [vmem:[#allocation2 + $0x46] sm:$0xff] %v4122
    %4208 = vst.msk [vmem:[#allocation2 + $0x4e] sm:$0x3] %vm4193, %v4172
    // Predicated region
    $region22: #{se_block.1} parent=1 // pred_check
      _
    $region23: #{se_block.1} parent=1 // pred_check_branch
      %4210 = sbr.rel (0) target = $region25
    $region24: #{se_block.1} parent=1 // pred_region
      %s4212 = ssub.s32 1280, 160
      %4213 = vsyncadd [#allocation3], %s4212
      %s4214 = sshll.u32 [#allocation2], 4
      %s4215 = int_to_ptr.vmem [resolvable:$true] %s4214
      %4220 = dma.vmem_to_hbm [thread:$0]  %s4215, 160, %s5, [#allocation3], 160, 160, 10
    $region25: #{se_block.1} parent=1 // pred_fallthru
      _
    // Predicated region
    $region26: #{se_block.1} parent=1 // pred_check
      _
    $region27: #{se_block.1} parent=1 // pred_check_branch
      %4222 = sbr.rel (0) target = $region29
    $region28: #{se_block.1} parent=1 // pred_region
      %4223 = dma.done [#allocation3], 1280
    $region29: #{se_block.1} parent=1 // pred_fallthru
      _
    %4224 = vsyncpa [#allocation3], 1

</llo_original>
